<compile_context>
chip_gen: v6e
topology: v6e:2x2x1
jax: 0.10.0
libtpu: 0.0.40
codegen_flags: <defaults>
</compile_context>

<pallas_src>
import math
import functools

import jax
import jax.numpy as jnp
from jax import lax
from jax.experimental import pallas as pl
from jax.experimental.pallas import tpu as pltpu

MIN_NORM = 1e-15
MIN_NORM_SQ = MIN_NORM * MIN_NORM
EPS_F32 = 4e-3


def _artanh(v):
    v = jnp.clip(v, -1.0 + 1e-15, 1.0 - 1e-15)
    return 0.5 * (jnp.log1p(v) - jnp.log1p(-v))


def _tanh(v):
    return jnp.tanh(jnp.clip(v, -15.0, 15.0))


def _proj_ref(y, sqrt_c):
    """Exact (divide-based) Poincare-ball projection, used outside the kernel."""
    norm = jnp.maximum(jnp.sqrt(jnp.sum(y * y, axis=-1, keepdims=True)), MIN_NORM)
    maxnorm = (1.0 - EPS_F32) / sqrt_c
    return jnp.where(norm > maxnorm, y / norm * maxnorm, y)


def _proj_scale(ss_raw, maxnorm):
    """Per-row projection scale from the raw sum-of-squares (rsqrt on EUP, no divide)."""
    ss = jnp.maximum(ss_raw, MIN_NORM_SQ)
    inv_norm = lax.rsqrt(ss)
    norm = ss * inv_norm                       # == max(sqrt(ss_raw), MIN_NORM)
    return jnp.where(norm > maxnorm, maxnorm * inv_norm, 1.0)


def _round_up(v, m):
    return (v + m - 1) // m * m


def _tensorcores_per_device():
    """Heuristic: 2 TensorCores per device on v4 / v5p / v7x, else 1."""
    try:
        kind = jax.devices()[0].device_kind.lower()
    except Exception:
        return 1
    if any(tag in kind for tag in ("v4", "v5p", "v7", "tpu7")):
        return 2
    return 1


# --------------------------------- kernel ---------------------------------
def hyp_linear_kernel(x_ref, wt_ref, hb_ref, o_ref, *, c, y2):
    sqrt_c = c ** 0.5
    inv_sqrt_c = 1.0 / sqrt_c
    maxnorm = (1.0 - EPS_F32) / sqrt_c

    # MXU matmul in native input dtype (bf16 stays bf16), f32 accumulation.
    mx = jnp.dot(x_ref[...], wt_ref[...],
                 preferred_element_type=jnp.float32)          # (tn, out_f_pad)

    x = x_ref[...].astype(jnp.float32)                        # f32 elementwise math
    hb = hb_ref[...]                                          # (1, out_f_pad), already f32

    # ---- the only three cross-lane reductions ----
    x_ss = jnp.sum(x * x, axis=-1, keepdims=True)             # (tn, 1)
    mx_ss = jnp.sum(mx * mx, axis=-1, keepdims=True)          # (tn, 1)
    mxhb = jnp.sum(mx * hb, axis=-1, keepdims=True)           # (tn, 1)

    # ---- mobius_matvec(W, x, c): per-row scale only ----
    inv_x_norm = lax.rsqrt(jnp.maximum(x_ss, MIN_NORM_SQ))
    x_norm = jnp.maximum(x_ss, MIN_NORM_SQ) * inv_x_norm      # == max(|x|, MIN_NORM)
    inv_mx_norm = lax.rsqrt(jnp.maximum(mx_ss, MIN_NORM_SQ))
    mx_norm = jnp.maximum(mx_ss, MIN_NORM_SQ) * inv_mx_norm

    scale_mv = _tanh(mx_norm * inv_x_norm * _artanh(sqrt_c * x_norm)) \
        * (inv_mx_norm * inv_sqrt_c)                          # (tn, 1)
    # all-zero mx row  <=>  mx_ss == 0; select on the scale column, not the tile
    scale_mv = jnp.where(mx_ss == 0.0, 0.0, scale_mv)

    # ---- proj(mv, c) folded into the per-row scale ----
    mv_ss = mx_ss * (scale_mv * scale_mv)                     # = sum(mv*mv)
    p1 = _proj_scale(mv_ss, maxnorm)
    s = scale_mv * p1                                         # res = mx * s (not materialized)
    x2 = mv_ss * (p1 * p1)                                    # = sum(res*res)
    xy = s * mxhb                                             # = sum(res*hb)

    # ---- mobius_add(res, hyp_bias, c) + final proj, all as row coefficients ----
    t = 1.0 + 2.0 * c * xy
    A = t + c * y2
    B = 1.0 - c * x2
    inv_denom = 1.0 / jnp.maximum(t + (c * c) * x2 * y2, MIN_NORM)

    # ||out||^2 computed analytically (no reduction over the tile).
    out_ss = (A * A * x2 + 2.0 * (A * B) * xy + (B * B) * y2) * (inv_denom * inv_denom)
    p2 = _proj_scale(out_ss, maxnorm)

    coef_res = (s * A) * (inv_denom * p2)                     # (tn, 1)
    coef_hb = B * (inv_denom * p2)                            # (tn, 1)

    # Epilogue: 2 full-tile muls + 1 add.
    o_ref[...] = (mx * coef_res + hb * coef_hb).astype(o_ref.dtype)


# -------------------------------- wrappers --------------------------------
def prepare_hyp_linear_params(weight, bias, c):
    """One-time, cacheable prep (call once per layer, reuse across steps):
       - transpose + zero-pad weight to (in_f_pad, out_f_pad), lane-dense last dims
       - map the bias onto the manifold: proj(expmap0(proj_tan0(bias), c), c), f32
       - y2 = sum(hb*hb) as a Python float (baked into the kernel as a constant)
    """
    out_f, in_f = weight.shape
    in_f_pad = _round_up(in_f, 128)
    out_f_pad = _round_up(out_f, 128)
    # NOTE: store the weight in bf16 here if tolerance allows; the matmul already
    # runs in the weight's native dtype and it halves VMEM residency + weight DMA.
    wt = jnp.pad(weight.T, ((0, in_f_pad - in_f), (0, out_f_pad - out_f)))

    sqrt_c = float(c) ** 0.5
    b = bias.reshape(1, -1).astype(jnp.float32)               # proj_tan0 == identity
    b_norm = jnp.maximum(jnp.sqrt(jnp.sum(b * b, axis=-1, keepdims=True)), MIN_NORM)
    hb = _tanh(sqrt_c * b_norm) * b / (sqrt_c * b_norm)       # expmap0
    hb = _proj_ref(hb, sqrt_c)                                # proj
    y2 = float(jnp.sum(hb * hb))                              # hoisted constant
    hb = jnp.pad(hb, ((0, 0), (0, out_f_pad - out_f)))        # zero padding is transparent
    return wt, hb, y2


def _vmem_estimate(tn, in_f_pad, out_f_pad, x_itemsize, w_itemsize):
    w = 2 * in_f_pad * out_f_pad * w_itemsize                 # conservative (2x buffers)
    hb = 2 * out_f_pad * 4
    xin = 2 * tn * in_f_pad * x_itemsize
    xout = 2 * tn * out_f_pad * x_itemsize
    interm = tn * in_f_pad * 4 + 3 * tn * out_f_pad * 4       # f32 x, mx, epilogue temps
    return w + hb + xin + xout + interm


def hyp_linear_prepared(x, wt_pad, hb_pad, c, *, out_features, y2=None,
                        tile_n=512, vmem_limit_bytes=None):
    """x: (N, in_f); wt_pad: (in_f_pad, out_f_pad); hb_pad: (1, out_f_pad) f32."""
    n, in_f = x.shape
    in_f_pad, out_f_pad = wt_pad.shape
    if y2 is None:
        y2 = float(jnp.sum(hb_pad.astype(jnp.float32) ** 2))

    x_itemsize = jnp.dtype(x.dtype).itemsize
    w_itemsize = jnp.dtype(wt_pad.dtype).itemsize
    sub = {4: 8, 2: 16, 1: 32}.get(x_itemsize, 8)             # packed-sublane multiple

    n_rows = _round_up(max(n, sub), sub)
    tn = min(_round_up(tile_n, sub), n_rows)

    # Shrink the row tile until the estimate fits a conservative compute budget.
    budget = 40 << 20
    while tn > sub and _vmem_estimate(tn, in_f_pad, out_f_pad, x_itemsize, w_itemsize) > budget:
        tn = max(sub, _round_up(tn // 2, sub))

    # Split into (at least) 2 grid steps only where the "parallel" axis can shard
    # across 2 TensorCores (v4 / v5p / v7x); on v5e / v6e the grid is a serial loop.
    if _tensorcores_per_device() >= 2 and n_rows <= tn and n_rows >= 2 * sub:
        tn = _round_up((n_rows + 1) // 2, sub)

    n_pad = _round_up(n_rows, tn)
    x_pad = jnp.pad(x, ((0, n_pad - n), (0, in_f_pad - in_f)))

    if vmem_limit_bytes is None:
        est = _vmem_estimate(tn, in_f_pad, out_f_pad, x_itemsize, w_itemsize)
        vmem_limit_bytes = int(min(max(est + (8 << 20), 32 << 20), 64 << 20))

    kernel = functools.partial(hyp_linear_kernel, c=float(c), y2=y2)

    def build_call(single_buffer):
        inv_kwargs = dict(pipeline_mode=pl.Buffered(1)) if single_buffer else {}
        return pl.pallas_call(
            kernel,
            out_shape=jax.ShapeDtypeStruct((n_pad, out_f_pad), x.dtype),
            grid_spec=pltpu.PrefetchScalarGridSpec(
                num_scalar_prefetch=0,
                grid=(n_pad // tn,),
                in_specs=[
                    pl.BlockSpec((tn, in_f_pad), lambda i: (i, 0)),           # x row tile
                    pl.BlockSpec((in_f_pad, out_f_pad), lambda i: (0, 0),     # weight (invariant)
                                 **inv_kwargs),
                    pl.BlockSpec((1, out_f_pad), lambda i: (0, 0),            # hyp_bias (invariant)
                                 **inv_kwargs),
                ],
                out_specs=pl.BlockSpec((tn, out_f_pad), lambda i: (i, 0)),
            ),
            compiler_params=pltpu.CompilerParams(
                dimension_semantics=("parallel",),
                vmem_limit_bytes=vmem_limit_bytes),
        )

    try:
        out_pad = build_call(True)(x_pad, wt_pad, hb_pad)
    except Exception:
        # Fallback for Pallas versions that reject single-buffered pipeline_mode.
        out_pad = build_call(False)(x_pad, wt_pad, hb_pad)

    return out_pad[:n, :out_features]


def hyp_linear(x, weight, bias, c, *, use_bias=True, tile_n=512, vmem_limit_bytes=None):
    """Convenience wrapper. weight: (out_f, in_f) (PyTorch convention), bias: (out_f,).
    For repeated calls (per layer per step), call prepare_hyp_linear_params once and
    reuse its outputs with hyp_linear_prepared."""
    if not use_bias:
        # hb = 0 makes mobius_add + the final proj the identity (proj is idempotent).
        bias = jnp.zeros((weight.shape[0],), jnp.float32)
    wt_pad, hb_pad, y2 = prepare_hyp_linear_params(weight, bias, c)
    return hyp_linear_prepared(x, wt_pad, hb_pad, c, out_features=weight.shape[0],
                               y2=y2, tile_n=tile_n, vmem_limit_bytes=vmem_limit_bytes)


# ------------------- pure-JAX reference (sanity check) -------------------
def hyp_linear_ref(x, weight, bias, c):
    sqrt_c = c ** 0.5
    x_norm = jnp.maximum(jnp.linalg.norm(x, axis=-1, keepdims=True), MIN_NORM)
    mx = x @ weight.T
    mx_norm = jnp.maximum(jnp.linalg.norm(mx, axis=-1, keepdims=True), MIN_NORM)
    res_c = _tanh(mx_norm / x_norm * _artanh(sqrt_c * x_norm)) * mx / (mx_norm * sqrt_c)
    mv = jnp.where(jnp.all(mx == 0.0, axis=-1, keepdims=True), 0.0, res_c)
    res = _proj_ref(mv, sqrt_c)
    b = bias.reshape(1, -1)
    b_norm = jnp.maximum(jnp.linalg.norm(b, axis=-1, keepdims=True), MIN_NORM)
    hb = _proj_ref(_tanh(sqrt_c * b_norm) * b / (sqrt_c * b_norm), sqrt_c)
    x2 = jnp.sum(res * res, -1, keepdims=True)
    y2 = jnp.sum(hb * hb, -1, keepdims=True)
    xy = jnp.sum(res * hb, -1, keepdims=True)
    num = (1 + 2 * c * xy + c * y2) * res + (1 - c * x2) * hb
    denom = jnp.maximum(1 + 2 * c * xy + c * c * x2 * y2, MIN_NORM)
    return _proj_ref(num / denom, sqrt_c)


if __name__ == "__main__":
    key = jax.random.PRNGKey(0)
    kx, kw, kb = jax.random.split(key, 3)

    # Deliberately unaligned shapes to exercise row padding (N), lane padding (in/out),
    # and (on 2-TC parts) the 2-tile grid split.
    N, IN_F, OUT_F = 200, 48, 80
    c = 1.0

    # Xavier-uniform(gain=sqrt(2)) weight as in reset_parameters(); small non-zero bias
    # so the mobius_add / bias path is actually exercised (reset_parameters uses zeros).
    limit = math.sqrt(2.0) * math.sqrt(6.0 / (IN_F + OUT_F))
    weight = jax.random.uniform(kw, (OUT_F, IN_F), jnp.float32, -limit, limit)
    bias = 0.01 * jax.random.normal(kb, (OUT_F,), jnp.float32)

    # Input points well inside the Poincare ball.
    x = 0.05 * jax.random.normal(kx, (N, IN_F), jnp.float32)

    out = hyp_linear(x, weight, bias, c)
    out = jax.block_until_ready(out)

    ref = hyp_linear_ref(x, weight, bias, c)
    assert out.shape == (N, OUT_F)
    assert bool(jnp.all(jnp.isfinite(out))), "non-finite output"
    assert jnp.allclose(out, ref, rtol=1e-4, atol=1e-5), (
        "mismatch vs reference, max abs diff = %e" % float(jnp.max(jnp.abs(out - ref))))

    print("KERNEL_OK")
</pallas_src>

<mosaic_0001>
module attributes {stable_mosaic.version = 11 : i64} {
  func.func @hyp_linear_kernel(%arg0: i32, %arg1: memref<200x128xf32, #tpu.memory_space<vmem>>, %arg2: memref<128x128xf32, #tpu.memory_space<vmem>>, %arg3: memref<1x128xf32, #tpu.memory_space<vmem>>, %arg4: memref<200x128xf32, #tpu.memory_space<vmem>>) attributes {dimension_semantics = [#tpu.dimension_semantics<parallel>], iteration_bounds = array<i64: 1>, scalar_prefetch = 0 : i64, scratch_operands = 0 : i64, tpu.core_type = #tpu.core_type<tc>, window_params = [{transform_indices = @transform_0, window_bounds = array<i64: 200, 128>}, {pipeline_mode = #tpu.pipeline_mode<synchronous>, transform_indices = @transform_1, window_bounds = array<i64: 128, 128>}, {pipeline_mode = #tpu.pipeline_mode<synchronous>, transform_indices = @transform_2, window_bounds = array<i64: 1, 128>}, {transform_indices = @transform_3, window_bounds = array<i64: 200, 128>}]} {
    %c0 = arith.constant 0 : index
    %c0_0 = arith.constant 0 : index
    %0 = vector.load %arg1[%c0, %c0_0] : memref<200x128xf32, #tpu.memory_space<vmem>>, vector<200x128xf32>
    %c0_1 = arith.constant 0 : index
    %c0_2 = arith.constant 0 : index
    %1 = vector.load %arg2[%c0_1, %c0_2] : memref<128x128xf32, #tpu.memory_space<vmem>>, vector<128x128xf32>
    %cst = arith.constant dense<0.000000e+00> : vector<200x128xf32>
    %2 = tpu.matmul %0, %1, %cst {dimension_numbers = #tpu.dot_dimension_numbers<[1], [0], [0], [1], [0, 0, 1, 1], [], []>} : vector<200x128xf32>, vector<128x128xf32>, vector<200x128xf32> -> vector<200x128xf32>
    %c0_3 = arith.constant 0 : index
    %c0_4 = arith.constant 0 : index
    %3 = vector.load %arg1[%c0_3, %c0_4] : memref<200x128xf32, #tpu.memory_space<vmem>>, vector<200x128xf32>
    %c0_5 = arith.constant 0 : index
    %c0_6 = arith.constant 0 : index
    %4 = vector.load %arg3[%c0_5, %c0_6] : memref<1x128xf32, #tpu.memory_space<vmem>>, vector<1x128xf32>
    %5 = arith.mulf %3, %3 : vector<200x128xf32>
    %cst_7 = arith.constant dense<0.000000e+00> : vector<200xf32>
    %6 = vector.multi_reduction <add>, %5, %cst_7 [1] : vector<200x128xf32> to vector<200xf32>
    %7 = vector.shape_cast %6 : vector<200xf32> to vector<200x1xf32>
    %8 = arith.mulf %2, %2 : vector<200x128xf32>
    %cst_8 = arith.constant dense<0.000000e+00> : vector<200xf32>
    %9 = vector.multi_reduction <add>, %8, %cst_8 [1] : vector<200x128xf32> to vector<200xf32>
    %10 = vector.shape_cast %9 : vector<200xf32> to vector<200x1xf32>
    %11 = vector.broadcast %4 : vector<1x128xf32> to vector<200x128xf32>
    %12 = arith.mulf %2, %11 : vector<200x128xf32>
    %cst_9 = arith.constant dense<0.000000e+00> : vector<200xf32>
    %13 = vector.multi_reduction <add>, %12, %cst_9 [1] : vector<200x128xf32> to vector<200xf32>
    %14 = vector.shape_cast %13 : vector<200xf32> to vector<200x1xf32>
    %cst_10 = arith.constant 1.000000e-30 : f32
    %15 = vector.broadcast %cst_10 : f32 to vector<200x1xf32>
    %16 = arith.maximumf %7, %15 : vector<200x1xf32>
    %17 = math.rsqrt %16 : vector<200x1xf32>
    %cst_11 = arith.constant 1.000000e-30 : f32
    %18 = vector.broadcast %cst_11 : f32 to vector<200x1xf32>
    %19 = arith.maximumf %7, %18 : vector<200x1xf32>
    %20 = arith.mulf %19, %17 : vector<200x1xf32>
    %cst_12 = arith.constant 1.000000e-30 : f32
    %21 = vector.broadcast %cst_12 : f32 to vector<200x1xf32>
    %22 = arith.maximumf %10, %21 : vector<200x1xf32>
    %23 = math.rsqrt %22 : vector<200x1xf32>
    %cst_13 = arith.constant 1.000000e-30 : f32
    %24 = vector.broadcast %cst_13 : f32 to vector<200x1xf32>
    %25 = arith.maximumf %10, %24 : vector<200x1xf32>
    %26 = arith.mulf %25, %23 : vector<200x1xf32>
    %27 = arith.mulf %26, %17 : vector<200x1xf32>
    %cst_14 = arith.constant 1.000000e+00 : f32
    %28 = vector.broadcast %cst_14 : f32 to vector<200x1xf32>
    %29 = arith.mulf %28, %20 : vector<200x1xf32>
    %cst_15 = arith.constant -1.000000e+00 : f32
    %cst_16 = arith.constant 1.000000e+00 : f32
    %30 = vector.broadcast %cst_15 : f32 to vector<200x1xf32>
    %31 = arith.maximumf %30, %29 : vector<200x1xf32>
    %32 = vector.broadcast %cst_16 : f32 to vector<200x1xf32>
    %33 = arith.minimumf %32, %31 : vector<200x1xf32>
    %34 = math.log1p %33 : vector<200x1xf32>
    %cst_17 = arith.constant 0.000000e+00 : f32
    %35 = vector.broadcast %cst_17 : f32 to vector<200x1xf32>
    %36 = arith.subf %35, %33 : vector<200x1xf32>
    %37 = math.log1p %36 : vector<200x1xf32>
    %38 = arith.subf %34, %37 : vector<200x1xf32>
    %cst_18 = arith.constant 5.000000e-01 : f32
    %39 = vector.broadcast %cst_18 : f32 to vector<200x1xf32>
    %40 = arith.mulf %39, %38 : vector<200x1xf32>
    %41 = arith.mulf %27, %40 : vector<200x1xf32>
    %cst_19 = arith.constant -1.500000e+01 : f32
    %cst_20 = arith.constant 1.500000e+01 : f32
    %42 = vector.broadcast %cst_19 : f32 to vector<200x1xf32>
    %43 = arith.maximumf %42, %41 : vector<200x1xf32>
    %44 = vector.broadcast %cst_20 : f32 to vector<200x1xf32>
    %45 = arith.minimumf %44, %43 : vector<200x1xf32>
    %46 = math.tanh %45 : vector<200x1xf32>
    %cst_21 = arith.constant 1.000000e+00 : f32
    %47 = vector.broadcast %cst_21 : f32 to vector<200x1xf32>
    %48 = arith.mulf %23, %47 : vector<200x1xf32>
    %49 = arith.mulf %46, %48 : vector<200x1xf32>
    %cst_22 = arith.constant 0.000000e+00 : f32
    %50 = vector.broadcast %cst_22 : f32 to vector<200x1xf32>
    %51 = arith.cmpf oeq, %10, %50 : vector<200x1xf32>
    %cst_23 = arith.constant 0.000000e+00 : f32
    %52 = vector.broadcast %cst_23 : f32 to vector<200x1xf32>
    %53 = arith.select %51, %52, %49 : vector<200x1xi1>, vector<200x1xf32>
    %54 = arith.mulf %53, %53 : vector<200x1xf32>
    %55 = arith.mulf %10, %54 : vector<200x1xf32>
    %cst_24 = arith.constant 1.000000e-30 : f32
    %56 = vector.broadcast %cst_24 : f32 to vector<200x1xf32>
    %57 = arith.maximumf %55, %56 : vector<200x1xf32>
    %58 = math.rsqrt %57 : vector<200x1xf32>
    %59 = arith.mulf %57, %58 : vector<200x1xf32>
    %cst_25 = arith.constant 0.995999991 : f32
    %60 = vector.broadcast %cst_25 : f32 to vector<200x1xf32>
    %61 = arith.cmpf ogt, %59, %60 : vector<200x1xf32>
    %cst_26 = arith.constant 0.995999991 : f32
    %62 = vector.broadcast %cst_26 : f32 to vector<200x1xf32>
    %63 = arith.mulf %62, %58 : vector<200x1xf32>
    %cst_27 = arith.constant 1.000000e+00 : f32
    %64 = vector.broadcast %cst_27 : f32 to vector<200x1xf32>
    %65 = arith.select %61, %63, %64 : vector<200x1xi1>, vector<200x1xf32>
    %66 = arith.mulf %53, %65 : vector<200x1xf32>
    %67 = arith.mulf %65, %65 : vector<200x1xf32>
    %68 = arith.mulf %55, %67 : vector<200x1xf32>
    %69 = arith.mulf %66, %14 : vector<200x1xf32>
    %cst_28 = arith.constant 2.000000e+00 : f32
    %70 = vector.broadcast %cst_28 : f32 to vector<200x1xf32>
    %71 = arith.mulf %70, %69 : vector<200x1xf32>
    %cst_29 = arith.constant 1.000000e+00 : f32
    %72 = vector.broadcast %cst_29 : f32 to vector<200x1xf32>
    %73 = arith.addf %72, %71 : vector<200x1xf32>
    %cst_30 = arith.constant 7.527470e-03 : f32
    %74 = vector.broadcast %cst_30 : f32 to vector<200x1xf32>
    %75 = arith.addf %73, %74 : vector<200x1xf32>
    %cst_31 = arith.constant 1.000000e+00 : f32
    %76 = vector.broadcast %cst_31 : f32 to vector<200x1xf32>
    %77 = arith.mulf %76, %68 : vector<200x1xf32>
    %cst_32 = arith.constant 1.000000e+00 : f32
    %78 = vector.broadcast %cst_32 : f32 to vector<200x1xf32>
    %79 = arith.subf %78, %77 : vector<200x1xf32>
    %cst_33 = arith.constant 1.000000e+00 : f32
    %80 = vector.broadcast %cst_33 : f32 to vector<200x1xf32>
    %81 = arith.mulf %80, %68 : vector<200x1xf32>
    %cst_34 = arith.constant 7.527470e-03 : f32
    %82 = vector.broadcast %cst_34 : f32 to vector<200x1xf32>
    %83 = arith.mulf %81, %82 : vector<200x1xf32>
    %84 = arith.addf %73, %83 : vector<200x1xf32>
    %cst_35 = arith.constant 1.000000e-15 : f32
    %85 = vector.broadcast %cst_35 : f32 to vector<200x1xf32>
    %86 = arith.maximumf %84, %85 : vector<200x1xf32>
    %cst_36 = arith.constant 1.000000e+00 : f32
    %87 = vector.broadcast %cst_36 : f32 to vector<200x1xf32>
    %88 = arith.divf %87, %86 : vector<200x1xf32>
    %89 = arith.mulf %75, %75 : vector<200x1xf32>
    %90 = arith.mulf %89, %68 : vector<200x1xf32>
    %91 = arith.mulf %75, %79 : vector<200x1xf32>
    %cst_37 = arith.constant 2.000000e+00 : f32
    %92 = vector.broadcast %cst_37 : f32 to vector<200x1xf32>
    %93 = arith.mulf %92, %91 : vector<200x1xf32>
    %94 = arith.mulf %93, %69 : vector<200x1xf32>
    %95 = arith.addf %90, %94 : vector<200x1xf32>
    %96 = arith.mulf %79, %79 : vector<200x1xf32>
    %cst_38 = arith.constant 7.527470e-03 : f32
    %97 = vector.broadcast %cst_38 : f32 to vector<200x1xf32>
    %98 = arith.mulf %96, %97 : vector<200x1xf32>
    %99 = arith.addf %95, %98 : vector<200x1xf32>
    %100 = arith.mulf %88, %88 : vector<200x1xf32>
    %101 = arith.mulf %99, %100 : vector<200x1xf32>
    %cst_39 = arith.constant 1.000000e-30 : f32
    %102 = vector.broadcast %cst_39 : f32 to vector<200x1xf32>
    %103 = arith.maximumf %101, %102 : vector<200x1xf32>
    %104 = math.rsqrt %103 : vector<200x1xf32>
    %105 = arith.mulf %103, %104 : vector<200x1xf32>
    %cst_40 = arith.constant 0.995999991 : f32
    %106 = vector.broadcast %cst_40 : f32 to vector<200x1xf32>
    %107 = arith.cmpf ogt, %105, %106 : vector<200x1xf32>
    %cst_41 = arith.constant 0.995999991 : f32
    %108 = vector.broadcast %cst_41 : f32 to vector<200x1xf32>
    %109 = arith.mulf %108, %104 : vector<200x1xf32>
    %cst_42 = arith.constant 1.000000e+00 : f32
    %110 = vector.broadcast %cst_42 : f32 to vector<200x1xf32>
    %111 = arith.select %107, %109, %110 : vector<200x1xi1>, vector<200x1xf32>
    %112 = arith.mulf %66, %75 : vector<200x1xf32>
    %113 = arith.mulf %88, %111 : vector<200x1xf32>
    %114 = arith.mulf %112, %113 : vector<200x1xf32>
    %115 = arith.mulf %88, %111 : vector<200x1xf32>
    %116 = arith.mulf %79, %115 : vector<200x1xf32>
    %117 = vector.broadcast %114 : vector<200x1xf32> to vector<200x128xf32>
    %118 = arith.mulf %2, %117 : vector<200x128xf32>
    %119 = vector.broadcast %4 : vector<1x128xf32> to vector<200x128xf32>
    %120 = vector.broadcast %116 : vector<200x1xf32> to vector<200x128xf32>
    %121 = arith.mulf %119, %120 : vector<200x128xf32>
    %122 = arith.addf %118, %121 : vector<200x128xf32>
    %c0_43 = arith.constant 0 : index
    %c0_44 = arith.constant 0 : index
    %123 = vector.load %arg4[%c0_43, %c0_44] : memref<200x128xf32, #tpu.memory_space<vmem>>, vector<200x128xf32>
    tpu.vector_store %arg4[%c0_43, %c0_44], %122 {strides = array<i32>} : memref<200x128xf32, #tpu.memory_space<vmem>>, vector<200x128xf32>,
    return
  }
  func.func @transform_0(%arg0: i32) -> (i32, i32) {
    %c0_i32 = arith.constant 0 : i32
    %c0_i32_0 = arith.constant 0 : i32
    return %arg0, %c0_i32 : i32, i32
  }
  func.func @transform_1(%arg0: i32) -> (i32, i32) {
    %c0_i32 = arith.constant 0 : i32
    %c0_i32_0 = arith.constant 0 : i32
    %c0_i32_1 = arith.constant 0 : i32
    return %c0_i32, %c0_i32_0 : i32, i32
  }
  func.func @transform_2(%arg0: i32) -> (i32, i32) {
    %c0_i32 = arith.constant 0 : i32
    %c0_i32_0 = arith.constant 0 : i32
    %c0_i32_1 = arith.constant 0 : i32
    return %c0_i32, %c0_i32_0 : i32, i32
  }
  func.func @transform_3(%arg0: i32) -> (i32, i32) {
    %c0_i32 = arith.constant 0 : i32
    %c0_i32_0 = arith.constant 0 : i32
    return %arg0, %c0_i32 : i32, i32
  }
}

module attributes {stable_mosaic.version = 11 : i64} {
  func.func @hyp_linear_kernel(%arg0: i32, %arg1: memref<200x128xf32, #tpu.memory_space<vmem>>, %arg2: memref<128x128xf32, #tpu.memory_space<vmem>>, %arg3: memref<1x128xf32, #tpu.memory_space<vmem>>, %arg4: memref<200x128xf32, #tpu.memory_space<vmem>>) attributes {dimension_semantics = [#tpu.dimension_semantics<parallel>], iteration_bounds = array<i64: 1>, scalar_prefetch = 0 : i64, scratch_operands = 0 : i64, tpu.core_type = #tpu.core_type<tc>, window_params = [{transform_indices = @transform_0, window_bounds = array<i64: 200, 128>}, {pipeline_mode = #tpu.pipeline_mode<synchronous>, transform_indices = @transform_1, window_bounds = array<i64: 128, 128>}, {pipeline_mode = #tpu.pipeline_mode<synchronous>, transform_indices = @transform_2, window_bounds = array<i64: 1, 128>}, {transform_indices = @transform_3, window_bounds = array<i64: 200, 128>}]} {
    %c0 = arith.constant 0 : index
    %c0_0 = arith.constant 0 : index
    %0 = vector.load %arg1[%c0, %c0_0] : memref<200x128xf32, #tpu.memory_space<vmem>>, vector<200x128xf32>
    %c0_1 = arith.constant 0 : index
    %c0_2 = arith.constant 0 : index
    %1 = vector.load %arg2[%c0_1, %c0_2] : memref<128x128xf32, #tpu.memory_space<vmem>>, vector<128x128xf32>
    %cst = arith.constant dense<0.000000e+00> : vector<200x128xf32>
    %2 = tpu.matmul %0, %1, %cst {dimension_numbers = #tpu.dot_dimension_numbers<[1], [0], [0], [1], [0, 0, 1, 1], [], []>} : vector<200x128xf32>, vector<128x128xf32>, vector<200x128xf32> -> vector<200x128xf32>
    %c0_3 = arith.constant 0 : index
    %c0_4 = arith.constant 0 : index
    %3 = vector.load %arg1[%c0_3, %c0_4] : memref<200x128xf32, #tpu.memory_space<vmem>>, vector<200x128xf32>
    %c0_5 = arith.constant 0 : index
    %c0_6 = arith.constant 0 : index
    %4 = vector.load %arg3[%c0_5, %c0_6] : memref<1x128xf32, #tpu.memory_space<vmem>>, vector<1x128xf32>
    %5 = arith.mulf %3, %3 : vector<200x128xf32>
    %cst_7 = arith.constant dense<0.000000e+00> : vector<200xf32>
    %6 = vector.multi_reduction <add>, %5, %cst_7 [1] : vector<200x128xf32> to vector<200xf32>
    %7 = vector.shape_cast %6 : vector<200xf32> to vector<200x1xf32>
    %8 = arith.mulf %2, %2 : vector<200x128xf32>
    %cst_8 = arith.constant dense<0.000000e+00> : vector<200xf32>
    %9 = vector.multi_reduction <add>, %8, %cst_8 [1] : vector<200x128xf32> to vector<200xf32>
    %10 = vector.shape_cast %9 : vector<200xf32> to vector<200x1xf32>
    %11 = vector.broadcast %4 : vector<1x128xf32> to vector<200x128xf32>
    %12 = arith.mulf %2, %11 : vector<200x128xf32>
    %cst_9 = arith.constant dense<0.000000e+00> : vector<200xf32>
    %13 = vector.multi_reduction <add>, %12, %cst_9 [1] : vector<200x128xf32> to vector<200xf32>
    %14 = vector.shape_cast %13 : vector<200xf32> to vector<200x1xf32>
    %cst_10 = arith.constant 1.000000e-30 : f32
    %15 = vector.broadcast %cst_10 : f32 to vector<200x1xf32>
    %16 = arith.maximumf %7, %15 : vector<200x1xf32>
    %17 = math.rsqrt %16 : vector<200x1xf32>
    %cst_11 = arith.constant 1.000000e-30 : f32
    %18 = vector.broadcast %cst_11 : f32 to vector<200x1xf32>
    %19 = arith.maximumf %7, %18 : vector<200x1xf32>
    %20 = arith.mulf %19, %17 : vector<200x1xf32>
    %cst_12 = arith.constant 1.000000e-30 : f32
    %21 = vector.broadcast %cst_12 : f32 to vector<200x1xf32>
    %22 = arith.maximumf %10, %21 : vector<200x1xf32>
    %23 = math.rsqrt %22 : vector<200x1xf32>
    %cst_13 = arith.constant 1.000000e-30 : f32
    %24 = vector.broadcast %cst_13 : f32 to vector<200x1xf32>
    %25 = arith.maximumf %10, %24 : vector<200x1xf32>
    %26 = arith.mulf %25, %23 : vector<200x1xf32>
    %27 = arith.mulf %26, %17 : vector<200x1xf32>
    %cst_14 = arith.constant 1.000000e+00 : f32
    %28 = vector.broadcast %cst_14 : f32 to vector<200x1xf32>
    %29 = arith.mulf %28, %20 : vector<200x1xf32>
    %cst_15 = arith.constant -1.000000e+00 : f32
    %cst_16 = arith.constant 1.000000e+00 : f32
    %30 = vector.broadcast %cst_15 : f32 to vector<200x1xf32>
    %31 = arith.maximumf %30, %29 : vector<200x1xf32>
    %32 = vector.broadcast %cst_16 : f32 to vector<200x1xf32>
    %33 = arith.minimumf %32, %31 : vector<200x1xf32>
    %34 = math.log1p %33 : vector<200x1xf32>
    %cst_17 = arith.constant 0.000000e+00 : f32
    %35 = vector.broadcast %cst_17 : f32 to vector<200x1xf32>
    %36 = arith.subf %35, %33 : vector<200x1xf32>
    %37 = math.log1p %36 : vector<200x1xf32>
    %38 = arith.subf %34, %37 : vector<200x1xf32>
    %cst_18 = arith.constant 5.000000e-01 : f32
    %39 = vector.broadcast %cst_18 : f32 to vector<200x1xf32>
    %40 = arith.mulf %39, %38 : vector<200x1xf32>
    %41 = arith.mulf %27, %40 : vector<200x1xf32>
    %cst_19 = arith.constant -1.500000e+01 : f32
    %cst_20 = arith.constant 1.500000e+01 : f32
    %42 = vector.broadcast %cst_19 : f32 to vector<200x1xf32>
    %43 = arith.maximumf %42, %41 : vector<200x1xf32>
    %44 = vector.broadcast %cst_20 : f32 to vector<200x1xf32>
    %45 = arith.minimumf %44, %43 : vector<200x1xf32>
    %46 = math.tanh %45 : vector<200x1xf32>
    %cst_21 = arith.constant 1.000000e+00 : f32
    %47 = vector.broadcast %cst_21 : f32 to vector<200x1xf32>
    %48 = arith.mulf %23, %47 : vector<200x1xf32>
    %49 = arith.mulf %46, %48 : vector<200x1xf32>
    %cst_22 = arith.constant 0.000000e+00 : f32
    %50 = vector.broadcast %cst_22 : f32 to vector<200x1xf32>
    %51 = arith.cmpf oeq, %10, %50 : vector<200x1xf32>
    %cst_23 = arith.constant 0.000000e+00 : f32
    %52 = vector.broadcast %cst_23 : f32 to vector<200x1xf32>
    %53 = arith.select %51, %52, %49 : vector<200x1xi1>, vector<200x1xf32>
    %54 = arith.mulf %53, %53 : vector<200x1xf32>
    %55 = arith.mulf %10, %54 : vector<200x1xf32>
    %cst_24 = arith.constant 1.000000e-30 : f32
    %56 = vector.broadcast %cst_24 : f32 to vector<200x1xf32>
    %57 = arith.maximumf %55, %56 : vector<200x1xf32>
    %58 = math.rsqrt %57 : vector<200x1xf32>
    %59 = arith.mulf %57, %58 : vector<200x1xf32>
    %cst_25 = arith.constant 0.995999991 : f32
    %60 = vector.broadcast %cst_25 : f32 to vector<200x1xf32>
    %61 = arith.cmpf ogt, %59, %60 : vector<200x1xf32>
    %cst_26 = arith.constant 0.995999991 : f32
    %62 = vector.broadcast %cst_26 : f32 to vector<200x1xf32>
    %63 = arith.mulf %62, %58 : vector<200x1xf32>
    %cst_27 = arith.constant 1.000000e+00 : f32
    %64 = vector.broadcast %cst_27 : f32 to vector<200x1xf32>
    %65 = arith.select %61, %63, %64 : vector<200x1xi1>, vector<200x1xf32>
    %66 = arith.mulf %53, %65 : vector<200x1xf32>
    %67 = arith.mulf %65, %65 : vector<200x1xf32>
    %68 = arith.mulf %55, %67 : vector<200x1xf32>
    %69 = arith.mulf %66, %14 : vector<200x1xf32>
    %cst_28 = arith.constant 2.000000e+00 : f32
    %70 = vector.broadcast %cst_28 : f32 to vector<200x1xf32>
    %71 = arith.mulf %70, %69 : vector<200x1xf32>
    %cst_29 = arith.constant 1.000000e+00 : f32
    %72 = vector.broadcast %cst_29 : f32 to vector<200x1xf32>
    %73 = arith.addf %72, %71 : vector<200x1xf32>
    %cst_30 = arith.constant 7.527470e-03 : f32
    %74 = vector.broadcast %cst_30 : f32 to vector<200x1xf32>
    %75 = arith.addf %73, %74 : vector<200x1xf32>
    %cst_31 = arith.constant 1.000000e+00 : f32
    %76 = vector.broadcast %cst_31 : f32 to vector<200x1xf32>
    %77 = arith.mulf %76, %68 : vector<200x1xf32>
    %cst_32 = arith.constant 1.000000e+00 : f32
    %78 = vector.broadcast %cst_32 : f32 to vector<200x1xf32>
    %79 = arith.subf %78, %77 : vector<200x1xf32>
    %cst_33 = arith.constant 1.000000e+00 : f32
    %80 = vector.broadcast %cst_33 : f32 to vector<200x1xf32>
    %81 = arith.mulf %80, %68 : vector<200x1xf32>
    %cst_34 = arith.constant 7.527470e-03 : f32
    %82 = vector.broadcast %cst_34 : f32 to vector<200x1xf32>
    %83 = arith.mulf %81, %82 : vector<200x1xf32>
    %84 = arith.addf %73, %83 : vector<200x1xf32>
    %cst_35 = arith.constant 1.000000e-15 : f32
    %85 = vector.broadcast %cst_35 : f32 to vector<200x1xf32>
    %86 = arith.maximumf %84, %85 : vector<200x1xf32>
    %cst_36 = arith.constant 1.000000e+00 : f32
    %87 = vector.broadcast %cst_36 : f32 to vector<200x1xf32>
    %88 = arith.divf %87, %86 : vector<200x1xf32>
    %89 = arith.mulf %75, %75 : vector<200x1xf32>
    %90 = arith.mulf %89, %68 : vector<200x1xf32>
    %91 = arith.mulf %75, %79 : vector<200x1xf32>
    %cst_37 = arith.constant 2.000000e+00 : f32
    %92 = vector.broadcast %cst_37 : f32 to vector<200x1xf32>
    %93 = arith.mulf %92, %91 : vector<200x1xf32>
    %94 = arith.mulf %93, %69 : vector<200x1xf32>
    %95 = arith.addf %90, %94 : vector<200x1xf32>
    %96 = arith.mulf %79, %79 : vector<200x1xf32>
    %cst_38 = arith.constant 7.527470e-03 : f32
    %97 = vector.broadcast %cst_38 : f32 to vector<200x1xf32>
    %98 = arith.mulf %96, %97 : vector<200x1xf32>
    %99 = arith.addf %95, %98 : vector<200x1xf32>
    %100 = arith.mulf %88, %88 : vector<200x1xf32>
    %101 = arith.mulf %99, %100 : vector<200x1xf32>
    %cst_39 = arith.constant 1.000000e-30 : f32
    %102 = vector.broadcast %cst_39 : f32 to vector<200x1xf32>
    %103 = arith.maximumf %101, %102 : vector<200x1xf32>
    %104 = math.rsqrt %103 : vector<200x1xf32>
    %105 = arith.mulf %103, %104 : vector<200x1xf32>
    %cst_40 = arith.constant 0.995999991 : f32
    %106 = vector.broadcast %cst_40 : f32 to vector<200x1xf32>
    %107 = arith.cmpf ogt, %105, %106 : vector<200x1xf32>
    %cst_41 = arith.constant 0.995999991 : f32
    %108 = vector.broadcast %cst_41 : f32 to vector<200x1xf32>
    %109 = arith.mulf %108, %104 : vector<200x1xf32>
    %cst_42 = arith.constant 1.000000e+00 : f32
    %110 = vector.broadcast %cst_42 : f32 to vector<200x1xf32>
    %111 = arith.select %107, %109, %110 : vector<200x1xi1>, vector<200x1xf32>
    %112 = arith.mulf %66, %75 : vector<200x1xf32>
    %113 = arith.mulf %88, %111 : vector<200x1xf32>
    %114 = arith.mulf %112, %113 : vector<200x1xf32>
    %115 = arith.mulf %88, %111 : vector<200x1xf32>
    %116 = arith.mulf %79, %115 : vector<200x1xf32>
    %117 = vector.broadcast %114 : vector<200x1xf32> to vector<200x128xf32>
    %118 = arith.mulf %2, %117 : vector<200x128xf32>
    %119 = vector.broadcast %4 : vector<1x128xf32> to vector<200x128xf32>
    %120 = vector.broadcast %116 : vector<200x1xf32> to vector<200x128xf32>
    %121 = arith.mulf %119, %120 : vector<200x128xf32>
    %122 = arith.addf %118, %121 : vector<200x128xf32>
    %c0_43 = arith.constant 0 : index
    %c0_44 = arith.constant 0 : index
    %123 = vector.load %arg4[%c0_43, %c0_44] : memref<200x128xf32, #tpu.memory_space<vmem>>, vector<200x128xf32>
    tpu.vector_store %arg4[%c0_43, %c0_44], %122 {strides = array<i32>} : memref<200x128xf32, #tpu.memory_space<vmem>>, vector<200x128xf32>,
    return
  }
  func.func @transform_0(%arg0: i32) -> (i32, i32) {
    %c0_i32 = arith.constant 0 : i32
    %c0_i32_0 = arith.constant 0 : i32
    return %arg0, %c0_i32 : i32, i32
  }
  func.func @transform_1(%arg0: i32) -> (i32, i32) {
    %c0_i32 = arith.constant 0 : i32
    %c0_i32_0 = arith.constant 0 : i32
    %c0_i32_1 = arith.constant 0 : i32
    return %c0_i32, %c0_i32_0 : i32, i32
  }
  func.func @transform_2(%arg0: i32) -> (i32, i32) {
    %c0_i32 = arith.constant 0 : i32
    %c0_i32_0 = arith.constant 0 : i32
    %c0_i32_1 = arith.constant 0 : i32
    return %c0_i32, %c0_i32_0 : i32, i32
  }
  func.func @transform_3(%arg0: i32) -> (i32, i32) {
    %c0_i32 = arith.constant 0 : i32
    %c0_i32_0 = arith.constant 0 : i32
    return %arg0, %c0_i32 : i32, i32
  }
}

</mosaic_0001>

<llo_original>
// kernel: tpu_custom_call.1
$region0: #{tpu_custom_call.1}
  #allocation0 [shape = 'u32[]', space=smem, size = 0x4, offset = 0x4, fixed_abs, tag = 'smem constant byte address 0x4 - core index']
  #allocation1 [shape = 'u32[144,128]{1,0:T(1,128)}', space=vmem, size = 0x12000, scoped, tag = 'internal scratch']
  %s0 = inlined_call_operand.hbm [shape: f32[200,128], index: 0, kind: input, shape index: {}]
  %s1 = inlined_call_operand.hbm [shape: f32[128,128], index: 1, kind: input, shape index: {}]
  %s2 = inlined_call_operand.vmem [shape: f32[1,128], index: 2, kind: input, shape index: {}]
  %s3 = inlined_call_operand.hbm [shape: f32[200,128], index: 3, kind: output, shape index: {}]
  %s4 = sld [smem:[#allocation0]]
  $region30: #{tpu_custom_call.1} parent=0
    _
  %s6 = ssub.s32 1, %s4
  %s7 = scalar_select 0, %s6, %s4
  $region1: #{tpu_custom_call.1} parent=0
    #allocation2 [shape = 'u8[102400]{0}', space=vmem, size = 0x19000, scoped, tag = 'input window, operand 0, single buffered']
    #allocation3 [shape = 's32[1]{0}', space=sflag, size = 0x4, scoped, tag = 'scoped memory for tpu_custom_call.1']
    #allocation4 [shape = 's32[1]{0}', space=sflag, size = 0x4, scoped, tag = 'scoped memory for tpu_custom_call.1']
    #allocation5 [shape = 'u8[65536]{0}', space=vmem, size = 0x10000, scoped, tag = 'input window, operand 1, single buffered']
    #allocation6 [shape = 's32[1]{0}', space=sflag, size = 0x4, scoped, tag = 'scoped memory for tpu_custom_call.1']
    #allocation7 [shape = 'u8[102400]{0}', space=vmem, size = 0x19000, scoped, tag = 'output window, operand 0, single buffered']
    %8 = vsyncpa [#allocation3], 0
    %9 = vsyncpa [#allocation6], 0
    %10 = vsyncpa [#allocation4], 0
    // Predicated region
    $region2: #{tpu_custom_call.1} parent=1 // pred_check
      _
    $region3: #{tpu_custom_call.1} parent=1 // pred_check_branch
      %12 = sbr.rel (0) target = $region5
    $region4: #{tpu_custom_call.1} parent=1 // pred_region
      %s14 = ssub.s32 3200, 3200
      %15 = vsyncadd [#allocation3], %s14
      %s16 = sshll.u32 [#allocation2], 4
      %s17 = int_to_ptr.vmem [resolvable:$true] %s16
      %22 = dma.hbm_to_vmem [thread:$0]  %s0, 3200, %s17, [#allocation3], 128, 128, 8
    $region5: #{tpu_custom_call.1} parent=1 // pred_fallthru
      _
    // Predicated region
    $region6: #{tpu_custom_call.1} parent=1 // pred_check
      _
    $region7: #{tpu_custom_call.1} parent=1 // pred_check_branch
      %24 = sbr.rel (0) target = $region9
    $region8: #{tpu_custom_call.1} parent=1 // pred_region
      %s26 = ssub.s32 2048, 2048
      %27 = vsyncadd [#allocation6], %s26
      %s28 = sshll.u32 [#allocation5], 4
      %s29 = int_to_ptr.vmem [resolvable:$true] %s28
      %34 = dma.hbm_to_vmem [thread:$0]  %s1, 2048, %s29, [#allocation6], 128, 128, 8
    $region9: #{tpu_custom_call.1} parent=1 // pred_fallthru
      _
    // Predicated region
    $region10: #{tpu_custom_call.1} parent=1 // pred_check
      _
    $region11: #{tpu_custom_call.1} parent=1 // pred_check_branch
      %36 = sbr.rel (0) target = $region13
    $region12: #{tpu_custom_call.1} parent=1 // pred_region
      _
    $region13: #{tpu_custom_call.1} parent=1 // pred_fallthru
      _
    // Predicated region
    $region14: #{tpu_custom_call.1} parent=1 // pred_check
      _
    $region15: #{tpu_custom_call.1} parent=1 // pred_check_branch
      %38 = sbr.rel (0) target = $region17
    $region16: #{tpu_custom_call.1} parent=1 // pred_region
      %39 = dma.done [#allocation3], 3200
    $region17: #{tpu_custom_call.1} parent=1 // pred_fallthru
      _
    // Predicated region
    $region18: #{tpu_custom_call.1} parent=1 // pred_check
      _
    $region19: #{tpu_custom_call.1} parent=1 // pred_check_branch
      %41 = sbr.rel (0) target = $region21
    $region20: #{tpu_custom_call.1} parent=1 // pred_region
      %42 = dma.done [#allocation6], 2048
    $region21: #{tpu_custom_call.1} parent=1 // pred_fallthru
      _
    %v43 = vld [vmem:[#allocation2] sm:$0xff]
    %v44 = vld [vmem:[#allocation2 + $0x8] sm:$0xff]
    %v45 = vld [vmem:[#allocation2 + $0x10] sm:$0xff]
    %v46 = vld [vmem:[#allocation2 + $0x18] sm:$0xff]
    %v47 = vld [vmem:[#allocation2 + $0x20] sm:$0xff]
    %v48 = vld [vmem:[#allocation2 + $0x28] sm:$0xff]
    %v49 = vld [vmem:[#allocation2 + $0x30] sm:$0xff]
    %v50 = vld [vmem:[#allocation2 + $0x38] sm:$0xff]
    %v51 = vld [vmem:[#allocation2 + $0x40] sm:$0xff]
    %v52 = vld [vmem:[#allocation2 + $0x48] sm:$0xff]
    %v53 = vld [vmem:[#allocation2 + $0x50] sm:$0xff]
    %v54 = vld [vmem:[#allocation2 + $0x58] sm:$0xff]
    %v55 = vld [vmem:[#allocation2 + $0x60] sm:$0xff]
    %v56 = vld [vmem:[#allocation2 + $0x68] sm:$0xff]
    %v57 = vld [vmem:[#allocation2 + $0x70] sm:$0xff]
    %v58 = vld [vmem:[#allocation2 + $0x78] sm:$0xff]
    %v59 = vld [vmem:[#allocation2 + $0x80] sm:$0xff]
    %v60 = vld [vmem:[#allocation2 + $0x88] sm:$0xff]
    %v61 = vld [vmem:[#allocation2 + $0x90] sm:$0xff]
    %v62 = vld [vmem:[#allocation2 + $0x98] sm:$0xff]
    %v63 = vld [vmem:[#allocation2 + $0xa0] sm:$0xff]
    %v64 = vld [vmem:[#allocation2 + $0xa8] sm:$0xff]
    %v65 = vld [vmem:[#allocation2 + $0xb0] sm:$0xff]
    %v66 = vld [vmem:[#allocation2 + $0xb8] sm:$0xff]
    %v67 = vld [vmem:[#allocation2 + $0xc0] sm:$0xff]
    %v68 = vld [vmem:[#allocation5] sm:$0xff]
    %v69 = vld [vmem:[#allocation5 + $0x8] sm:$0xff]
    %v70 = vld [vmem:[#allocation5 + $0x10] sm:$0xff]
    %v71 = vld [vmem:[#allocation5 + $0x18] sm:$0xff]
    %v72 = vld [vmem:[#allocation5 + $0x20] sm:$0xff]
    %v73 = vld [vmem:[#allocation5 + $0x28] sm:$0xff]
    %v74 = vld [vmem:[#allocation5 + $0x30] sm:$0xff]
    %v75 = vld [vmem:[#allocation5 + $0x38] sm:$0xff]
    %v76 = vld [vmem:[#allocation5 + $0x40] sm:$0xff]
    %v77 = vld [vmem:[#allocation5 + $0x48] sm:$0xff]
    %v78 = vld [vmem:[#allocation5 + $0x50] sm:$0xff]
    %v79 = vld [vmem:[#allocation5 + $0x58] sm:$0xff]
    %v80 = vld [vmem:[#allocation5 + $0x60] sm:$0xff]
    %v81 = vld [vmem:[#allocation5 + $0x68] sm:$0xff]
    %v82 = vld [vmem:[#allocation5 + $0x70] sm:$0xff]
    %v83 = vld [vmem:[#allocation5 + $0x78] sm:$0xff]
    %84 = vmatprep.subr.mxu0 0.0
    %85 = vmatpush1.msra.mxu0 %v83
    %86 = vmatprep.subr.mxu0 0.0
    %87 = vmatpush1.msra.mxu0 %v82
    %88 = vmatprep.subr.mxu0 0.0
    %89 = vmatpush1.msra.mxu0 %v81
    %90 = vmatprep.subr.mxu0 0.0
    %91 = vmatpush1.msra.mxu0 %v80
    %92 = vmatprep.subr.mxu0 0.0
    %93 = vmatpush1.msra.mxu0 %v79
    %94 = vmatprep.subr.mxu0 0.0
    %95 = vmatpush1.msra.mxu0 %v78
    %96 = vmatprep.subr.mxu0 0.0
    %97 = vmatpush1.msra.mxu0 %v77
    %98 = vmatprep.subr.mxu0 0.0
    %99 = vmatpush1.msra.mxu0 %v76
    %100 = vmatprep.subr.mxu0 0.0
    %101 = vmatpush1.msra.mxu0 %v75
    %102 = vmatprep.subr.mxu0 0.0
    %103 = vmatpush1.msra.mxu0 %v74
    %104 = vmatprep.subr.mxu0 0.0
    %105 = vmatpush1.msra.mxu0 %v73
    %106 = vmatprep.subr.mxu0 0.0
    %107 = vmatpush1.msra.mxu0 %v72
    %108 = vmatprep.subr.mxu0 0.0
    %109 = vmatpush1.msra.mxu0 %v71
    %110 = vmatprep.subr.mxu0 0.0
    %111 = vmatpush1.msra.mxu0 %v70
    %112 = vmatprep.subr.mxu0 0.0
    %113 = vmatpush1.msra.mxu0 %v69
    %114 = vmatprep.subr.mxu0 0.0
    %115 = vmatpush1.msra.mxu0 %v68
    %116 = vmatprep.subr.mxu0 0.0
    %117 = vmatpush2.msra.mxu0 0.0
    %118 = vmatprep.subr.mxu0 0.0
    %119 = vmatpush2.msra.mxu0 0.0
    %120 = vmatprep.subr.mxu0 0.0
    %121 = vmatpush2.msra.mxu0 0.0
    %122 = vmatprep.subr.mxu0 0.0
    %123 = vmatpush2.msra.mxu0 0.0
    %124 = vmatprep.subr.mxu0 0.0
    %125 = vmatpush2.msra.mxu0 0.0
    %126 = vmatprep.subr.mxu0 0.0
    %127 = vmatpush2.msra.mxu0 0.0
    %128 = vmatprep.subr.mxu0 0.0
    %129 = vmatpush2.msra.mxu0 0.0
    %130 = vmatprep.subr.mxu0 0.0
    %131 = vmatpush2.msra.mxu0 0.0
    %132 = vmatprep.subr.mxu0 0.0
    %133 = vmatpush2.msra.mxu0 0.0
    %134 = vmatprep.subr.mxu0 0.0
    %135 = vmatpush2.msra.mxu0 0.0
    %136 = vmatprep.subr.mxu0 0.0
    %137 = vmatpush2.msra.mxu0 0.0
    %138 = vmatprep.subr.mxu0 0.0
    %139 = vmatpush2.msra.mxu0 0.0
    %140 = vmatprep.subr.mxu0 0.0
    %141 = vmatpush2.msra.mxu0 0.0
    %142 = vmatprep.subr.mxu0 0.0
    %143 = vmatpush2.msra.mxu0 0.0
    %144 = vmatprep.subr.mxu0 0.0
    %145 = vmatpush2.msra.mxu0 0.0
    %146 = vmatprep.subr.mxu0 0.0
    %147 = vmatpush2.msra.mxu0 0.0
    %148 = vmatprep.mubr.f32.mxu0 0.0
    %149 = vmatmul.mubr.f32.gmra.mxu0 %v43
    %v150 = vpop.f32.mrf.mxu0
    %v151 = vadd.f32 0.0, %v150
    %v152 = vpop.f32.mrf.mxu0
    %153 = vmatprep.mubr.f32.mxu0 0.0
    %154 = vmatmul.mubr.f32.gmra.mxu0 %v44
    %v155 = vpop.f32.mrf.mxu0
    %v156 = vadd.f32 0.0, %v155
    %v157 = vpop.f32.mrf.mxu0
    %158 = vmatprep.mubr.f32.mxu0 0.0
    %159 = vmatmul.mubr.f32.gmra.mxu0 %v45
    %v160 = vpop.f32.mrf.mxu0
    %v161 = vadd.f32 0.0, %v160
    %v162 = vpop.f32.mrf.mxu0
    %163 = vmatprep.mubr.f32.mxu0 0.0
    %164 = vmatmul.mubr.f32.gmra.mxu0 %v46
    %v165 = vpop.f32.mrf.mxu0
    %v166 = vadd.f32 0.0, %v165
    %v167 = vpop.f32.mrf.mxu0
    %168 = vmatprep.mubr.f32.mxu0 0.0
    %169 = vmatmul.mubr.f32.gmra.mxu0 %v47
    %v170 = vpop.f32.mrf.mxu0
    %v171 = vadd.f32 0.0, %v170
    %v172 = vpop.f32.mrf.mxu0
    %173 = vmatprep.mubr.f32.mxu0 0.0
    %174 = vmatmul.mubr.f32.gmra.mxu0 %v48
    %v175 = vpop.f32.mrf.mxu0
    %v176 = vadd.f32 0.0, %v175
    %v177 = vpop.f32.mrf.mxu0
    %178 = vmatprep.mubr.f32.mxu0 0.0
    %179 = vmatmul.mubr.f32.gmra.mxu0 %v49
    %v180 = vpop.f32.mrf.mxu0
    %v181 = vadd.f32 0.0, %v180
    %v182 = vpop.f32.mrf.mxu0
    %183 = vmatprep.mubr.f32.mxu0 0.0
    %184 = vmatmul.mubr.f32.gmra.mxu0 %v50
    %v185 = vpop.f32.mrf.mxu0
    %v186 = vadd.f32 0.0, %v185
    %v187 = vpop.f32.mrf.mxu0
    %188 = vmatprep.mubr.f32.mxu0 0.0
    %189 = vmatmul.mubr.f32.gmra.mxu0 %v51
    %v190 = vpop.f32.mrf.mxu0
    %v191 = vadd.f32 0.0, %v190
    %v192 = vpop.f32.mrf.mxu0
    %193 = vmatprep.mubr.f32.mxu0 0.0
    %194 = vmatmul.mubr.f32.gmra.mxu0 %v52
    %v195 = vpop.f32.mrf.mxu0
    %v196 = vadd.f32 0.0, %v195
    %v197 = vpop.f32.mrf.mxu0
    %198 = vmatprep.mubr.f32.mxu0 0.0
    %199 = vmatmul.mubr.f32.gmra.mxu0 %v53
    %v200 = vpop.f32.mrf.mxu0
    %v201 = vadd.f32 0.0, %v200
    %v202 = vpop.f32.mrf.mxu0
    %203 = vmatprep.mubr.f32.mxu0 0.0
    %204 = vmatmul.mubr.f32.gmra.mxu0 %v54
    %v205 = vpop.f32.mrf.mxu0
    %v206 = vadd.f32 0.0, %v205
    %v207 = vpop.f32.mrf.mxu0
    %208 = vmatprep.mubr.f32.mxu0 0.0
    %209 = vmatmul.mubr.f32.gmra.mxu0 %v55
    %v210 = vpop.f32.mrf.mxu0
    %v211 = vadd.f32 0.0, %v210
    %v212 = vpop.f32.mrf.mxu0
    %213 = vmatprep.mubr.f32.mxu0 0.0
    %214 = vmatmul.mubr.f32.gmra.mxu0 %v56
    %v215 = vpop.f32.mrf.mxu0
    %v216 = vadd.f32 0.0, %v215
    %v217 = vpop.f32.mrf.mxu0
    %218 = vmatprep.mubr.f32.mxu0 0.0
    %219 = vmatmul.mubr.f32.gmra.mxu0 %v57
    %v220 = vpop.f32.mrf.mxu0
    %v221 = vadd.f32 0.0, %v220
    %v222 = vpop.f32.mrf.mxu0
    %223 = vmatprep.mubr.f32.mxu0 0.0
    %224 = vmatmul.mubr.f32.gmra.mxu0 %v58
    %v225 = vpop.f32.mrf.mxu0
    %v226 = vadd.f32 0.0, %v225
    %v227 = vpop.f32.mrf.mxu0
    %228 = vmatprep.mubr.f32.mxu0 0.0
    %229 = vmatmul.mubr.f32.gmra.mxu0 %v59
    %v230 = vpop.f32.mrf.mxu0
    %v231 = vadd.f32 0.0, %v230
    %v232 = vpop.f32.mrf.mxu0
    %233 = vmatprep.mubr.f32.mxu0 0.0
    %234 = vmatmul.mubr.f32.gmra.mxu0 %v60
    %v235 = vpop.f32.mrf.mxu0
    %v236 = vadd.f32 0.0, %v235
    %v237 = vpop.f32.mrf.mxu0
    %238 = vmatprep.mubr.f32.mxu0 0.0
    %239 = vmatmul.mubr.f32.gmra.mxu0 %v61
    %v240 = vpop.f32.mrf.mxu0
    %v241 = vadd.f32 0.0, %v240
    %v242 = vpop.f32.mrf.mxu0
    %243 = vmatprep.mubr.f32.mxu0 0.0
    %244 = vmatmul.mubr.f32.gmra.mxu0 %v62
    %v245 = vpop.f32.mrf.mxu0
    %v246 = vadd.f32 0.0, %v245
    %v247 = vpop.f32.mrf.mxu0
    %248 = vmatprep.mubr.f32.mxu0 0.0
    %249 = vmatmul.mubr.f32.gmra.mxu0 %v63
    %v250 = vpop.f32.mrf.mxu0
    %v251 = vadd.f32 0.0, %v250
    %v252 = vpop.f32.mrf.mxu0
    %253 = vmatprep.mubr.f32.mxu0 0.0
    %254 = vmatmul.mubr.f32.gmra.mxu0 %v64
    %v255 = vpop.f32.mrf.mxu0
    %v256 = vadd.f32 0.0, %v255
    %v257 = vpop.f32.mrf.mxu0
    %258 = vmatprep.mubr.f32.mxu0 0.0
    %259 = vmatmul.mubr.f32.gmra.mxu0 %v65
    %v260 = vpop.f32.mrf.mxu0
    %v261 = vadd.f32 0.0, %v260
    %v262 = vpop.f32.mrf.mxu0
    %263 = vmatprep.mubr.f32.mxu0 0.0
    %264 = vmatmul.mubr.f32.gmra.mxu0 %v66
    %v265 = vpop.f32.mrf.mxu0
    %v266 = vadd.f32 0.0, %v265
    %v267 = vpop.f32.mrf.mxu0
    %268 = vmatprep.mubr.f32.mxu0 0.0
    %269 = vmatmul.mubr.f32.gmra.mxu0 %v67
    %v270 = vpop.f32.mrf.mxu0
    %v271 = vadd.f32 0.0, %v270
    %v272 = vpop.f32.mrf.mxu0
    %273 = vdwg.mxu0
    %v274 = vld [vmem:[%s2] sm:$0x1]
    %v275 = vmul.f32 %v43, %v43
    %v276 = vmul.f32 %v44, %v44
    %v277 = vmul.f32 %v45, %v45
    %v278 = vmul.f32 %v46, %v46
    %v279 = vmul.f32 %v47, %v47
    %v280 = vmul.f32 %v48, %v48
    %v281 = vmul.f32 %v49, %v49
    %v282 = vmul.f32 %v50, %v50
    %v283 = vmul.f32 %v51, %v51
    %v284 = vmul.f32 %v52, %v52
    %v285 = vmul.f32 %v53, %v53
    %v286 = vmul.f32 %v54, %v54
    %v287 = vmul.f32 %v55, %v55
    %v288 = vmul.f32 %v56, %v56
    %v289 = vmul.f32 %v57, %v57
    %v290 = vmul.f32 %v58, %v58
    %v291 = vmul.f32 %v59, %v59
    %v292 = vmul.f32 %v60, %v60
    %v293 = vmul.f32 %v61, %v61
    %v294 = vmul.f32 %v62, %v62
    %v295 = vmul.f32 %v63, %v63
    %v296 = vmul.f32 %v64, %v64
    %v297 = vmul.f32 %v65, %v65
    %v298 = vmul.f32 %v66, %v66
    %v299 = vmul.f32 %v67, %v67
    %300 = vadd.xlane.f32.xlu0 %v275
    %v301 = vpop.xlane.xlu0 %300
    %302 = vadd.xlane.f32.xlu0 %v276
    %v303 = vpop.xlane.xlu0 %302
    %304 = vadd.xlane.f32.xlu0 %v277
    %v305 = vpop.xlane.xlu0 %304
    %306 = vadd.xlane.f32.xlu0 %v278
    %v307 = vpop.xlane.xlu0 %306
    %308 = vadd.xlane.f32.xlu0 %v279
    %v309 = vpop.xlane.xlu0 %308
    %310 = vadd.xlane.f32.xlu0 %v280
    %v311 = vpop.xlane.xlu0 %310
    %312 = vadd.xlane.f32.xlu0 %v281
    %v313 = vpop.xlane.xlu0 %312
    %314 = vadd.xlane.f32.xlu0 %v282
    %v315 = vpop.xlane.xlu0 %314
    %316 = vadd.xlane.f32.xlu0 %v283
    %v317 = vpop.xlane.xlu0 %316
    %318 = vadd.xlane.f32.xlu0 %v284
    %v319 = vpop.xlane.xlu0 %318
    %320 = vadd.xlane.f32.xlu0 %v285
    %v321 = vpop.xlane.xlu0 %320
    %322 = vadd.xlane.f32.xlu0 %v286
    %v323 = vpop.xlane.xlu0 %322
    %324 = vadd.xlane.f32.xlu0 %v287
    %v325 = vpop.xlane.xlu0 %324
    %326 = vadd.xlane.f32.xlu0 %v288
    %v327 = vpop.xlane.xlu0 %326
    %328 = vadd.xlane.f32.xlu0 %v289
    %v329 = vpop.xlane.xlu0 %328
    %330 = vadd.xlane.f32.xlu0 %v290
    %v331 = vpop.xlane.xlu0 %330
    %332 = vadd.xlane.f32.xlu0 %v291
    %v333 = vpop.xlane.xlu0 %332
    %334 = vadd.xlane.f32.xlu0 %v292
    %v335 = vpop.xlane.xlu0 %334
    %336 = vadd.xlane.f32.xlu0 %v293
    %v337 = vpop.xlane.xlu0 %336
    %338 = vadd.xlane.f32.xlu0 %v294
    %v339 = vpop.xlane.xlu0 %338
    %340 = vadd.xlane.f32.xlu0 %v295
    %v341 = vpop.xlane.xlu0 %340
    %342 = vadd.xlane.f32.xlu0 %v296
    %v343 = vpop.xlane.xlu0 %342
    %344 = vadd.xlane.f32.xlu0 %v297
    %v345 = vpop.xlane.xlu0 %344
    %346 = vadd.xlane.f32.xlu0 %v298
    %v347 = vpop.xlane.xlu0 %346
    %348 = vadd.xlane.f32.xlu0 %v299
    %v349 = vpop.xlane.xlu0 %348
    %v350 = vmul.f32 %v151, %v151
    %v351 = vmul.f32 %v156, %v156
    %v352 = vmul.f32 %v161, %v161
    %v353 = vmul.f32 %v166, %v166
    %v354 = vmul.f32 %v171, %v171
    %v355 = vmul.f32 %v176, %v176
    %v356 = vmul.f32 %v181, %v181
    %v357 = vmul.f32 %v186, %v186
    %v358 = vmul.f32 %v191, %v191
    %v359 = vmul.f32 %v196, %v196
    %v360 = vmul.f32 %v201, %v201
    %v361 = vmul.f32 %v206, %v206
    %v362 = vmul.f32 %v211, %v211
    %v363 = vmul.f32 %v216, %v216
    %v364 = vmul.f32 %v221, %v221
    %v365 = vmul.f32 %v226, %v226
    %v366 = vmul.f32 %v231, %v231
    %v367 = vmul.f32 %v236, %v236
    %v368 = vmul.f32 %v241, %v241
    %v369 = vmul.f32 %v246, %v246
    %v370 = vmul.f32 %v251, %v251
    %v371 = vmul.f32 %v256, %v256
    %v372 = vmul.f32 %v261, %v261
    %v373 = vmul.f32 %v266, %v266
    %v374 = vmul.f32 %v271, %v271
    %375 = vadd.xlane.f32.xlu0 %v350
    %v376 = vpop.xlane.xlu0 %375
    %377 = vadd.xlane.f32.xlu0 %v351
    %v378 = vpop.xlane.xlu0 %377
    %379 = vadd.xlane.f32.xlu0 %v352
    %v380 = vpop.xlane.xlu0 %379
    %381 = vadd.xlane.f32.xlu0 %v353
    %v382 = vpop.xlane.xlu0 %381
    %383 = vadd.xlane.f32.xlu0 %v354
    %v384 = vpop.xlane.xlu0 %383
    %385 = vadd.xlane.f32.xlu0 %v355
    %v386 = vpop.xlane.xlu0 %385
    %387 = vadd.xlane.f32.xlu0 %v356
    %v388 = vpop.xlane.xlu0 %387
    %389 = vadd.xlane.f32.xlu0 %v357
    %v390 = vpop.xlane.xlu0 %389
    %391 = vadd.xlane.f32.xlu0 %v358
    %v392 = vpop.xlane.xlu0 %391
    %393 = vadd.xlane.f32.xlu0 %v359
    %v394 = vpop.xlane.xlu0 %393
    %395 = vadd.xlane.f32.xlu0 %v360
    %v396 = vpop.xlane.xlu0 %395
    %397 = vadd.xlane.f32.xlu0 %v361
    %v398 = vpop.xlane.xlu0 %397
    %399 = vadd.xlane.f32.xlu0 %v362
    %v400 = vpop.xlane.xlu0 %399
    %401 = vadd.xlane.f32.xlu0 %v363
    %v402 = vpop.xlane.xlu0 %401
    %403 = vadd.xlane.f32.xlu0 %v364
    %v404 = vpop.xlane.xlu0 %403
    %405 = vadd.xlane.f32.xlu0 %v365
    %v406 = vpop.xlane.xlu0 %405
    %407 = vadd.xlane.f32.xlu0 %v366
    %v408 = vpop.xlane.xlu0 %407
    %409 = vadd.xlane.f32.xlu0 %v367
    %v410 = vpop.xlane.xlu0 %409
    %411 = vadd.xlane.f32.xlu0 %v368
    %v412 = vpop.xlane.xlu0 %411
    %413 = vadd.xlane.f32.xlu0 %v369
    %v414 = vpop.xlane.xlu0 %413
    %415 = vadd.xlane.f32.xlu0 %v370
    %v416 = vpop.xlane.xlu0 %415
    %417 = vadd.xlane.f32.xlu0 %v371
    %v418 = vpop.xlane.xlu0 %417
    %419 = vadd.xlane.f32.xlu0 %v372
    %v420 = vpop.xlane.xlu0 %419
    %421 = vadd.xlane.f32.xlu0 %v373
    %v422 = vpop.xlane.xlu0 %421
    %423 = vadd.xlane.f32.xlu0 %v374
    %v424 = vpop.xlane.xlu0 %423
    %v426 = vlaneseq
    %v427 = vshrl.u32 %v426, 7
    %v428 = vsub.s32 0, %v427
    %v429 = vrot.slane %v274, %v428
    %v431 = vmul.f32 %v151, %v429
    %v432 = vmul.f32 %v156, %v429
    %v433 = vmul.f32 %v161, %v429
    %v434 = vmul.f32 %v166, %v429
    %v435 = vmul.f32 %v171, %v429
    %v436 = vmul.f32 %v176, %v429
    %v437 = vmul.f32 %v181, %v429
    %v438 = vmul.f32 %v186, %v429
    %v439 = vmul.f32 %v191, %v429
    %v440 = vmul.f32 %v196, %v429
    %v441 = vmul.f32 %v201, %v429
    %v442 = vmul.f32 %v206, %v429
    %v443 = vmul.f32 %v211, %v429
    %v444 = vmul.f32 %v216, %v429
    %v445 = vmul.f32 %v221, %v429
    %v446 = vmul.f32 %v226, %v429
    %v447 = vmul.f32 %v231, %v429
    %v448 = vmul.f32 %v236, %v429
    %v449 = vmul.f32 %v241, %v429
    %v450 = vmul.f32 %v246, %v429
    %v451 = vmul.f32 %v251, %v429
    %v452 = vmul.f32 %v256, %v429
    %v453 = vmul.f32 %v261, %v429
    %v454 = vmul.f32 %v266, %v429
    %v455 = vmul.f32 %v271, %v429
    %456 = vadd.xlane.f32.xlu0 %v431
    %v457 = vpop.xlane.xlu0 %456
    %458 = vadd.xlane.f32.xlu0 %v432
    %v459 = vpop.xlane.xlu0 %458
    %460 = vadd.xlane.f32.xlu0 %v433
    %v461 = vpop.xlane.xlu0 %460
    %462 = vadd.xlane.f32.xlu0 %v434
    %v463 = vpop.xlane.xlu0 %462
    %464 = vadd.xlane.f32.xlu0 %v435
    %v465 = vpop.xlane.xlu0 %464
    %466 = vadd.xlane.f32.xlu0 %v436
    %v467 = vpop.xlane.xlu0 %466
    %468 = vadd.xlane.f32.xlu0 %v437
    %v469 = vpop.xlane.xlu0 %468
    %470 = vadd.xlane.f32.xlu0 %v438
    %v471 = vpop.xlane.xlu0 %470
    %472 = vadd.xlane.f32.xlu0 %v439
    %v473 = vpop.xlane.xlu0 %472
    %474 = vadd.xlane.f32.xlu0 %v440
    %v475 = vpop.xlane.xlu0 %474
    %476 = vadd.xlane.f32.xlu0 %v441
    %v477 = vpop.xlane.xlu0 %476
    %478 = vadd.xlane.f32.xlu0 %v442
    %v479 = vpop.xlane.xlu0 %478
    %480 = vadd.xlane.f32.xlu0 %v443
    %v481 = vpop.xlane.xlu0 %480
    %482 = vadd.xlane.f32.xlu0 %v444
    %v483 = vpop.xlane.xlu0 %482
    %484 = vadd.xlane.f32.xlu0 %v445
    %v485 = vpop.xlane.xlu0 %484
    %486 = vadd.xlane.f32.xlu0 %v446
    %v487 = vpop.xlane.xlu0 %486
    %488 = vadd.xlane.f32.xlu0 %v447
    %v489 = vpop.xlane.xlu0 %488
    %490 = vadd.xlane.f32.xlu0 %v448
    %v491 = vpop.xlane.xlu0 %490
    %492 = vadd.xlane.f32.xlu0 %v449
    %v493 = vpop.xlane.xlu0 %492
    %494 = vadd.xlane.f32.xlu0 %v450
    %v495 = vpop.xlane.xlu0 %494
    %496 = vadd.xlane.f32.xlu0 %v451
    %v497 = vpop.xlane.xlu0 %496
    %498 = vadd.xlane.f32.xlu0 %v452
    %v499 = vpop.xlane.xlu0 %498
    %500 = vadd.xlane.f32.xlu0 %v453
    %v501 = vpop.xlane.xlu0 %500
    %502 = vadd.xlane.f32.xlu0 %v454
    %v503 = vpop.xlane.xlu0 %502
    %504 = vadd.xlane.f32.xlu0 %v455
    %v505 = vpop.xlane.xlu0 %504
    %v506 = vmax.f32 %v301, 1e-30
    %v507 = vmax.f32 %v303, 1e-30
    %v508 = vmax.f32 %v305, 1e-30
    %v509 = vmax.f32 %v307, 1e-30
    %v510 = vmax.f32 %v309, 1e-30
    %v511 = vmax.f32 %v311, 1e-30
    %v512 = vmax.f32 %v313, 1e-30
    %v513 = vmax.f32 %v315, 1e-30
    %v514 = vmax.f32 %v317, 1e-30
    %v515 = vmax.f32 %v319, 1e-30
    %v516 = vmax.f32 %v321, 1e-30
    %v517 = vmax.f32 %v323, 1e-30
    %v518 = vmax.f32 %v325, 1e-30
    %v519 = vmax.f32 %v327, 1e-30
    %v520 = vmax.f32 %v329, 1e-30
    %v521 = vmax.f32 %v331, 1e-30
    %v522 = vmax.f32 %v333, 1e-30
    %v523 = vmax.f32 %v335, 1e-30
    %v524 = vmax.f32 %v337, 1e-30
    %v525 = vmax.f32 %v339, 1e-30
    %v526 = vmax.f32 %v341, 1e-30
    %v527 = vmax.f32 %v343, 1e-30
    %v528 = vmax.f32 %v345, 1e-30
    %v529 = vmax.f32 %v347, 1e-30
    %v530 = vmax.f32 %v349, 1e-30
    %v531 = vrsqrt.pop %v506
    %v532 = vrsqrt.pop %v507
    %v533 = vrsqrt.pop %v508
    %v534 = vrsqrt.pop %v509
    %v535 = vrsqrt.pop %v510
    %v536 = vrsqrt.pop %v511
    %v537 = vrsqrt.pop %v512
    %v538 = vrsqrt.pop %v513
    %v539 = vrsqrt.pop %v514
    %v540 = vrsqrt.pop %v515
    %v541 = vrsqrt.pop %v516
    %v542 = vrsqrt.pop %v517
    %v543 = vrsqrt.pop %v518
    %v544 = vrsqrt.pop %v519
    %v545 = vrsqrt.pop %v520
    %v546 = vrsqrt.pop %v521
    %v547 = vrsqrt.pop %v522
    %v548 = vrsqrt.pop %v523
    %v549 = vrsqrt.pop %v524
    %v550 = vrsqrt.pop %v525
    %v551 = vrsqrt.pop %v526
    %v552 = vrsqrt.pop %v527
    %v553 = vrsqrt.pop %v528
    %v554 = vrsqrt.pop %v529
    %v555 = vrsqrt.pop %v530
    %v556 = vmul.f32 %v506, %v531
    %v557 = vmul.f32 %v507, %v532
    %v558 = vmul.f32 %v508, %v533
    %v559 = vmul.f32 %v509, %v534
    %v560 = vmul.f32 %v510, %v535
    %v561 = vmul.f32 %v511, %v536
    %v562 = vmul.f32 %v512, %v537
    %v563 = vmul.f32 %v513, %v538
    %v564 = vmul.f32 %v514, %v539
    %v565 = vmul.f32 %v515, %v540
    %v566 = vmul.f32 %v516, %v541
    %v567 = vmul.f32 %v517, %v542
    %v568 = vmul.f32 %v518, %v543
    %v569 = vmul.f32 %v519, %v544
    %v570 = vmul.f32 %v520, %v545
    %v571 = vmul.f32 %v521, %v546
    %v572 = vmul.f32 %v522, %v547
    %v573 = vmul.f32 %v523, %v548
    %v574 = vmul.f32 %v524, %v549
    %v575 = vmul.f32 %v525, %v550
    %v576 = vmul.f32 %v526, %v551
    %v577 = vmul.f32 %v527, %v552
    %v578 = vmul.f32 %v528, %v553
    %v579 = vmul.f32 %v529, %v554
    %v580 = vmul.f32 %v530, %v555
    %v581 = vmax.f32 %v376, 1e-30
    %v582 = vmax.f32 %v378, 1e-30
    %v583 = vmax.f32 %v380, 1e-30
    %v584 = vmax.f32 %v382, 1e-30
    %v585 = vmax.f32 %v384, 1e-30
    %v586 = vmax.f32 %v386, 1e-30
    %v587 = vmax.f32 %v388, 1e-30
    %v588 = vmax.f32 %v390, 1e-30
    %v589 = vmax.f32 %v392, 1e-30
    %v590 = vmax.f32 %v394, 1e-30
    %v591 = vmax.f32 %v396, 1e-30
    %v592 = vmax.f32 %v398, 1e-30
    %v593 = vmax.f32 %v400, 1e-30
    %v594 = vmax.f32 %v402, 1e-30
    %v595 = vmax.f32 %v404, 1e-30
    %v596 = vmax.f32 %v406, 1e-30
    %v597 = vmax.f32 %v408, 1e-30
    %v598 = vmax.f32 %v410, 1e-30
    %v599 = vmax.f32 %v412, 1e-30
    %v600 = vmax.f32 %v414, 1e-30
    %v601 = vmax.f32 %v416, 1e-30
    %v602 = vmax.f32 %v418, 1e-30
    %v603 = vmax.f32 %v420, 1e-30
    %v604 = vmax.f32 %v422, 1e-30
    %v605 = vmax.f32 %v424, 1e-30
    %v606 = vrsqrt.pop %v581
    %v607 = vrsqrt.pop %v582
    %v608 = vrsqrt.pop %v583
    %v609 = vrsqrt.pop %v584
    %v610 = vrsqrt.pop %v585
    %v611 = vrsqrt.pop %v586
    %v612 = vrsqrt.pop %v587
    %v613 = vrsqrt.pop %v588
    %v614 = vrsqrt.pop %v589
    %v615 = vrsqrt.pop %v590
    %v616 = vrsqrt.pop %v591
    %v617 = vrsqrt.pop %v592
    %v618 = vrsqrt.pop %v593
    %v619 = vrsqrt.pop %v594
    %v620 = vrsqrt.pop %v595
    %v621 = vrsqrt.pop %v596
    %v622 = vrsqrt.pop %v597
    %v623 = vrsqrt.pop %v598
    %v624 = vrsqrt.pop %v599
    %v625 = vrsqrt.pop %v600
    %v626 = vrsqrt.pop %v601
    %v627 = vrsqrt.pop %v602
    %v628 = vrsqrt.pop %v603
    %v629 = vrsqrt.pop %v604
    %v630 = vrsqrt.pop %v605
    %v631 = vmul.f32 %v581, %v606
    %v632 = vmul.f32 %v582, %v607
    %v633 = vmul.f32 %v583, %v608
    %v634 = vmul.f32 %v584, %v609
    %v635 = vmul.f32 %v585, %v610
    %v636 = vmul.f32 %v586, %v611
    %v637 = vmul.f32 %v587, %v612
    %v638 = vmul.f32 %v588, %v613
    %v639 = vmul.f32 %v589, %v614
    %v640 = vmul.f32 %v590, %v615
    %v641 = vmul.f32 %v591, %v616
    %v642 = vmul.f32 %v592, %v617
    %v643 = vmul.f32 %v593, %v618
    %v644 = vmul.f32 %v594, %v619
    %v645 = vmul.f32 %v595, %v620
    %v646 = vmul.f32 %v596, %v621
    %v647 = vmul.f32 %v597, %v622
    %v648 = vmul.f32 %v598, %v623
    %v649 = vmul.f32 %v599, %v624
    %v650 = vmul.f32 %v600, %v625
    %v651 = vmul.f32 %v601, %v626
    %v652 = vmul.f32 %v602, %v627
    %v653 = vmul.f32 %v603, %v628
    %v654 = vmul.f32 %v604, %v629
    %v655 = vmul.f32 %v605, %v630
    %v656 = vmul.f32 %v631, %v531
    %v657 = vmul.f32 %v632, %v532
    %v658 = vmul.f32 %v633, %v533
    %v659 = vmul.f32 %v634, %v534
    %v660 = vmul.f32 %v635, %v535
    %v661 = vmul.f32 %v636, %v536
    %v662 = vmul.f32 %v637, %v537
    %v663 = vmul.f32 %v638, %v538
    %v664 = vmul.f32 %v639, %v539
    %v665 = vmul.f32 %v640, %v540
    %v666 = vmul.f32 %v641, %v541
    %v667 = vmul.f32 %v642, %v542
    %v668 = vmul.f32 %v643, %v543
    %v669 = vmul.f32 %v644, %v544
    %v670 = vmul.f32 %v645, %v545
    %v671 = vmul.f32 %v646, %v546
    %v672 = vmul.f32 %v647, %v547
    %v673 = vmul.f32 %v648, %v548
    %v674 = vmul.f32 %v649, %v549
    %v675 = vmul.f32 %v650, %v550
    %v676 = vmul.f32 %v651, %v551
    %v677 = vmul.f32 %v652, %v552
    %v678 = vmul.f32 %v653, %v553
    %v679 = vmul.f32 %v654, %v554
    %v680 = vmul.f32 %v655, %v555
    %v681 = vmax.f32 %v556, -1.0
    %v682 = vmax.f32 %v557, -1.0
    %v683 = vmax.f32 %v558, -1.0
    %v684 = vmax.f32 %v559, -1.0
    %v685 = vmax.f32 %v560, -1.0
    %v686 = vmax.f32 %v561, -1.0
    %v687 = vmax.f32 %v562, -1.0
    %v688 = vmax.f32 %v563, -1.0
    %v689 = vmax.f32 %v564, -1.0
    %v690 = vmax.f32 %v565, -1.0
    %v691 = vmax.f32 %v566, -1.0
    %v692 = vmax.f32 %v567, -1.0
    %v693 = vmax.f32 %v568, -1.0
    %v694 = vmax.f32 %v569, -1.0
    %v695 = vmax.f32 %v570, -1.0
    %v696 = vmax.f32 %v571, -1.0
    %v697 = vmax.f32 %v572, -1.0
    %v698 = vmax.f32 %v573, -1.0
    %v699 = vmax.f32 %v574, -1.0
    %v700 = vmax.f32 %v575, -1.0
    %v701 = vmax.f32 %v576, -1.0
    %v702 = vmax.f32 %v577, -1.0
    %v703 = vmax.f32 %v578, -1.0
    %v704 = vmax.f32 %v579, -1.0
    %v705 = vmax.f32 %v580, -1.0
    %v706 = vmin.f32 %v681, 1.0
    %v707 = vmin.f32 %v682, 1.0
    %v708 = vmin.f32 %v683, 1.0
    %v709 = vmin.f32 %v684, 1.0
    %v710 = vmin.f32 %v685, 1.0
    %v711 = vmin.f32 %v686, 1.0
    %v712 = vmin.f32 %v687, 1.0
    %v713 = vmin.f32 %v688, 1.0
    %v714 = vmin.f32 %v689, 1.0
    %v715 = vmin.f32 %v690, 1.0
    %v716 = vmin.f32 %v691, 1.0
    %v717 = vmin.f32 %v692, 1.0
    %v718 = vmin.f32 %v693, 1.0
    %v719 = vmin.f32 %v694, 1.0
    %v720 = vmin.f32 %v695, 1.0
    %v721 = vmin.f32 %v696, 1.0
    %v722 = vmin.f32 %v697, 1.0
    %v723 = vmin.f32 %v698, 1.0
    %v724 = vmin.f32 %v699, 1.0
    %v725 = vmin.f32 %v700, 1.0
    %v726 = vmin.f32 %v701, 1.0
    %v727 = vmin.f32 %v702, 1.0
    %v728 = vmin.f32 %v703, 1.0
    %v729 = vmin.f32 %v704, 1.0
    %v730 = vmin.f32 %v705, 1.0
    %v731 = vadd.f32 %v706, 1.0
    %v732 = vlog2.pop %v731
    %v733 = vmul.f32 %v732, 0.6931472
    %v734 = vmul.f32 -0.5, %v706
    %v735 = vadd.f32 %v734, 1.0
    %v736 = vmul.f32 %v735, %v706
    %v737 = vand.u32 2147483647, %v706
    %vm738 = vcmp.lt.f32.partialorder %v737, 0.0004427343
    %v739 = vsel %vm738, %v736, %v733
    %v740 = vadd.f32 %v707, 1.0
    %v741 = vlog2.pop %v740
    %v742 = vmul.f32 %v741, 0.6931472
    %v743 = vmul.f32 -0.5, %v707
    %v744 = vadd.f32 %v743, 1.0
    %v745 = vmul.f32 %v744, %v707
    %v746 = vand.u32 2147483647, %v707
    %vm747 = vcmp.lt.f32.partialorder %v746, 0.0004427343
    %v748 = vsel %vm747, %v745, %v742
    %v749 = vadd.f32 %v708, 1.0
    %v750 = vlog2.pop %v749
    %v751 = vmul.f32 %v750, 0.6931472
    %v752 = vmul.f32 -0.5, %v708
    %v753 = vadd.f32 %v752, 1.0
    %v754 = vmul.f32 %v753, %v708
    %v755 = vand.u32 2147483647, %v708
    %vm756 = vcmp.lt.f32.partialorder %v755, 0.0004427343
    %v757 = vsel %vm756, %v754, %v751
    %v758 = vadd.f32 %v709, 1.0
    %v759 = vlog2.pop %v758
    %v760 = vmul.f32 %v759, 0.6931472
    %v761 = vmul.f32 -0.5, %v709
    %v762 = vadd.f32 %v761, 1.0
    %v763 = vmul.f32 %v762, %v709
    %v764 = vand.u32 2147483647, %v709
    %vm765 = vcmp.lt.f32.partialorder %v764, 0.0004427343
    %v766 = vsel %vm765, %v763, %v760
    %v767 = vadd.f32 %v710, 1.0
    %v768 = vlog2.pop %v767
    %v769 = vmul.f32 %v768, 0.6931472
    %v770 = vmul.f32 -0.5, %v710
    %v771 = vadd.f32 %v770, 1.0
    %v772 = vmul.f32 %v771, %v710
    %v773 = vand.u32 2147483647, %v710
    %vm774 = vcmp.lt.f32.partialorder %v773, 0.0004427343
    %v775 = vsel %vm774, %v772, %v769
    %v776 = vadd.f32 %v711, 1.0
    %v777 = vlog2.pop %v776
    %v778 = vmul.f32 %v777, 0.6931472
    %v779 = vmul.f32 -0.5, %v711
    %v780 = vadd.f32 %v779, 1.0
    %v781 = vmul.f32 %v780, %v711
    %v782 = vand.u32 2147483647, %v711
    %vm783 = vcmp.lt.f32.partialorder %v782, 0.0004427343
    %v784 = vsel %vm783, %v781, %v778
    %v785 = vadd.f32 %v712, 1.0
    %v786 = vlog2.pop %v785
    %v787 = vmul.f32 %v786, 0.6931472
    %v788 = vmul.f32 -0.5, %v712
    %v789 = vadd.f32 %v788, 1.0
    %v790 = vmul.f32 %v789, %v712
    %v791 = vand.u32 2147483647, %v712
    %vm792 = vcmp.lt.f32.partialorder %v791, 0.0004427343
    %v793 = vsel %vm792, %v790, %v787
    %v794 = vadd.f32 %v713, 1.0
    %v795 = vlog2.pop %v794
    %v796 = vmul.f32 %v795, 0.6931472
    %v797 = vmul.f32 -0.5, %v713
    %v798 = vadd.f32 %v797, 1.0
    %v799 = vmul.f32 %v798, %v713
    %v800 = vand.u32 2147483647, %v713
    %vm801 = vcmp.lt.f32.partialorder %v800, 0.0004427343
    %v802 = vsel %vm801, %v799, %v796
    %v803 = vadd.f32 %v714, 1.0
    %v804 = vlog2.pop %v803
    %v805 = vmul.f32 %v804, 0.6931472
    %v806 = vmul.f32 -0.5, %v714
    %v807 = vadd.f32 %v806, 1.0
    %v808 = vmul.f32 %v807, %v714
    %v809 = vand.u32 2147483647, %v714
    %vm810 = vcmp.lt.f32.partialorder %v809, 0.0004427343
    %v811 = vsel %vm810, %v808, %v805
    %v812 = vadd.f32 %v715, 1.0
    %v813 = vlog2.pop %v812
    %v814 = vmul.f32 %v813, 0.6931472
    %v815 = vmul.f32 -0.5, %v715
    %v816 = vadd.f32 %v815, 1.0
    %v817 = vmul.f32 %v816, %v715
    %v818 = vand.u32 2147483647, %v715
    %vm819 = vcmp.lt.f32.partialorder %v818, 0.0004427343
    %v820 = vsel %vm819, %v817, %v814
    %v821 = vadd.f32 %v716, 1.0
    %v822 = vlog2.pop %v821
    %v823 = vmul.f32 %v822, 0.6931472
    %v824 = vmul.f32 -0.5, %v716
    %v825 = vadd.f32 %v824, 1.0
    %v826 = vmul.f32 %v825, %v716
    %v827 = vand.u32 2147483647, %v716
    %vm828 = vcmp.lt.f32.partialorder %v827, 0.0004427343
    %v829 = vsel %vm828, %v826, %v823
    %v830 = vadd.f32 %v717, 1.0
    %v831 = vlog2.pop %v830
    %v832 = vmul.f32 %v831, 0.6931472
    %v833 = vmul.f32 -0.5, %v717
    %v834 = vadd.f32 %v833, 1.0
    %v835 = vmul.f32 %v834, %v717
    %v836 = vand.u32 2147483647, %v717
    %vm837 = vcmp.lt.f32.partialorder %v836, 0.0004427343
    %v838 = vsel %vm837, %v835, %v832
    %v839 = vadd.f32 %v718, 1.0
    %v840 = vlog2.pop %v839
    %v841 = vmul.f32 %v840, 0.6931472
    %v842 = vmul.f32 -0.5, %v718
    %v843 = vadd.f32 %v842, 1.0
    %v844 = vmul.f32 %v843, %v718
    %v845 = vand.u32 2147483647, %v718
    %vm846 = vcmp.lt.f32.partialorder %v845, 0.0004427343
    %v847 = vsel %vm846, %v844, %v841
    %v848 = vadd.f32 %v719, 1.0
    %v849 = vlog2.pop %v848
    %v850 = vmul.f32 %v849, 0.6931472
    %v851 = vmul.f32 -0.5, %v719
    %v852 = vadd.f32 %v851, 1.0
    %v853 = vmul.f32 %v852, %v719
    %v854 = vand.u32 2147483647, %v719
    %vm855 = vcmp.lt.f32.partialorder %v854, 0.0004427343
    %v856 = vsel %vm855, %v853, %v850
    %v857 = vadd.f32 %v720, 1.0
    %v858 = vlog2.pop %v857
    %v859 = vmul.f32 %v858, 0.6931472
    %v860 = vmul.f32 -0.5, %v720
    %v861 = vadd.f32 %v860, 1.0
    %v862 = vmul.f32 %v861, %v720
    %v863 = vand.u32 2147483647, %v720
    %vm864 = vcmp.lt.f32.partialorder %v863, 0.0004427343
    %v865 = vsel %vm864, %v862, %v859
    %v866 = vadd.f32 %v721, 1.0
    %v867 = vlog2.pop %v866
    %v868 = vmul.f32 %v867, 0.6931472
    %v869 = vmul.f32 -0.5, %v721
    %v870 = vadd.f32 %v869, 1.0
    %v871 = vmul.f32 %v870, %v721
    %v872 = vand.u32 2147483647, %v721
    %vm873 = vcmp.lt.f32.partialorder %v872, 0.0004427343
    %v874 = vsel %vm873, %v871, %v868
    %v875 = vadd.f32 %v722, 1.0
    %v876 = vlog2.pop %v875
    %v877 = vmul.f32 %v876, 0.6931472
    %v878 = vmul.f32 -0.5, %v722
    %v879 = vadd.f32 %v878, 1.0
    %v880 = vmul.f32 %v879, %v722
    %v881 = vand.u32 2147483647, %v722
    %vm882 = vcmp.lt.f32.partialorder %v881, 0.0004427343
    %v883 = vsel %vm882, %v880, %v877
    %v884 = vadd.f32 %v723, 1.0
    %v885 = vlog2.pop %v884
    %v886 = vmul.f32 %v885, 0.6931472
    %v887 = vmul.f32 -0.5, %v723
    %v888 = vadd.f32 %v887, 1.0
    %v889 = vmul.f32 %v888, %v723
    %v890 = vand.u32 2147483647, %v723
    %vm891 = vcmp.lt.f32.partialorder %v890, 0.0004427343
    %v892 = vsel %vm891, %v889, %v886
    %v893 = vadd.f32 %v724, 1.0
    %v894 = vlog2.pop %v893
    %v895 = vmul.f32 %v894, 0.6931472
    %v896 = vmul.f32 -0.5, %v724
    %v897 = vadd.f32 %v896, 1.0
    %v898 = vmul.f32 %v897, %v724
    %v899 = vand.u32 2147483647, %v724
    %vm900 = vcmp.lt.f32.partialorder %v899, 0.0004427343
    %v901 = vsel %vm900, %v898, %v895
    %v902 = vadd.f32 %v725, 1.0
    %v903 = vlog2.pop %v902
    %v904 = vmul.f32 %v903, 0.6931472
    %v905 = vmul.f32 -0.5, %v725
    %v906 = vadd.f32 %v905, 1.0
    %v907 = vmul.f32 %v906, %v725
    %v908 = vand.u32 2147483647, %v725
    %vm909 = vcmp.lt.f32.partialorder %v908, 0.0004427343
    %v910 = vsel %vm909, %v907, %v904
    %v911 = vadd.f32 %v726, 1.0
    %v912 = vlog2.pop %v911
    %v913 = vmul.f32 %v912, 0.6931472
    %v914 = vmul.f32 -0.5, %v726
    %v915 = vadd.f32 %v914, 1.0
    %v916 = vmul.f32 %v915, %v726
    %v917 = vand.u32 2147483647, %v726
    %vm918 = vcmp.lt.f32.partialorder %v917, 0.0004427343
    %v919 = vsel %vm918, %v916, %v913
    %v920 = vadd.f32 %v727, 1.0
    %v921 = vlog2.pop %v920
    %v922 = vmul.f32 %v921, 0.6931472
    %v923 = vmul.f32 -0.5, %v727
    %v924 = vadd.f32 %v923, 1.0
    %v925 = vmul.f32 %v924, %v727
    %v926 = vand.u32 2147483647, %v727
    %vm927 = vcmp.lt.f32.partialorder %v926, 0.0004427343
    %v928 = vsel %vm927, %v925, %v922
    %v929 = vadd.f32 %v728, 1.0
    %v930 = vlog2.pop %v929
    %v931 = vmul.f32 %v930, 0.6931472
    %v932 = vmul.f32 -0.5, %v728
    %v933 = vadd.f32 %v932, 1.0
    %v934 = vmul.f32 %v933, %v728
    %v935 = vand.u32 2147483647, %v728
    %vm936 = vcmp.lt.f32.partialorder %v935, 0.0004427343
    %v937 = vsel %vm936, %v934, %v931
    %v938 = vadd.f32 %v729, 1.0
    %v939 = vlog2.pop %v938
    %v940 = vmul.f32 %v939, 0.6931472
    %v941 = vmul.f32 -0.5, %v729
    %v942 = vadd.f32 %v941, 1.0
    %v943 = vmul.f32 %v942, %v729
    %v944 = vand.u32 2147483647, %v729
    %vm945 = vcmp.lt.f32.partialorder %v944, 0.0004427343
    %v946 = vsel %vm945, %v943, %v940
    %v947 = vadd.f32 %v730, 1.0
    %v948 = vlog2.pop %v947
    %v949 = vmul.f32 %v948, 0.6931472
    %v950 = vmul.f32 -0.5, %v730
    %v951 = vadd.f32 %v950, 1.0
    %v952 = vmul.f32 %v951, %v730
    %v953 = vand.u32 2147483647, %v730
    %vm954 = vcmp.lt.f32.partialorder %v953, 0.0004427343
    %v955 = vsel %vm954, %v952, %v949
    %v956 = vsub.f32 0.0, %v706
    %v957 = vsub.f32 0.0, %v707
    %v958 = vsub.f32 0.0, %v708
    %v959 = vsub.f32 0.0, %v709
    %v960 = vsub.f32 0.0, %v710
    %v961 = vsub.f32 0.0, %v711
    %v962 = vsub.f32 0.0, %v712
    %v963 = vsub.f32 0.0, %v713
    %v964 = vsub.f32 0.0, %v714
    %v965 = vsub.f32 0.0, %v715
    %v966 = vsub.f32 0.0, %v716
    %v967 = vsub.f32 0.0, %v717
    %v968 = vsub.f32 0.0, %v718
    %v969 = vsub.f32 0.0, %v719
    %v970 = vsub.f32 0.0, %v720
    %v971 = vsub.f32 0.0, %v721
    %v972 = vsub.f32 0.0, %v722
    %v973 = vsub.f32 0.0, %v723
    %v974 = vsub.f32 0.0, %v724
    %v975 = vsub.f32 0.0, %v725
    %v976 = vsub.f32 0.0, %v726
    %v977 = vsub.f32 0.0, %v727
    %v978 = vsub.f32 0.0, %v728
    %v979 = vsub.f32 0.0, %v729
    %v980 = vsub.f32 0.0, %v730
    %v981 = vadd.f32 %v956, 1.0
    %v982 = vlog2.pop %v981
    %v983 = vmul.f32 %v982, 0.6931472
    %v984 = vmul.f32 -0.5, %v956
    %v985 = vadd.f32 %v984, 1.0
    %v986 = vmul.f32 %v985, %v956
    %v987 = vand.u32 2147483647, %v956
    %vm988 = vcmp.lt.f32.partialorder %v987, 0.0004427343
    %v989 = vsel %vm988, %v986, %v983
    %v990 = vadd.f32 %v957, 1.0
    %v991 = vlog2.pop %v990
    %v992 = vmul.f32 %v991, 0.6931472
    %v993 = vmul.f32 -0.5, %v957
    %v994 = vadd.f32 %v993, 1.0
    %v995 = vmul.f32 %v994, %v957
    %v996 = vand.u32 2147483647, %v957
    %vm997 = vcmp.lt.f32.partialorder %v996, 0.0004427343
    %v998 = vsel %vm997, %v995, %v992
    %v999 = vadd.f32 %v958, 1.0
    %v1000 = vlog2.pop %v999
    %v1001 = vmul.f32 %v1000, 0.6931472
    %v1002 = vmul.f32 -0.5, %v958
    %v1003 = vadd.f32 %v1002, 1.0
    %v1004 = vmul.f32 %v1003, %v958
    %v1005 = vand.u32 2147483647, %v958
    %vm1006 = vcmp.lt.f32.partialorder %v1005, 0.0004427343
    %v1007 = vsel %vm1006, %v1004, %v1001
    %v1008 = vadd.f32 %v959, 1.0
    %v1009 = vlog2.pop %v1008
    %v1010 = vmul.f32 %v1009, 0.6931472
    %v1011 = vmul.f32 -0.5, %v959
    %v1012 = vadd.f32 %v1011, 1.0
    %v1013 = vmul.f32 %v1012, %v959
    %v1014 = vand.u32 2147483647, %v959
    %vm1015 = vcmp.lt.f32.partialorder %v1014, 0.0004427343
    %v1016 = vsel %vm1015, %v1013, %v1010
    %v1017 = vadd.f32 %v960, 1.0
    %v1018 = vlog2.pop %v1017
    %v1019 = vmul.f32 %v1018, 0.6931472
    %v1020 = vmul.f32 -0.5, %v960
    %v1021 = vadd.f32 %v1020, 1.0
    %v1022 = vmul.f32 %v1021, %v960
    %v1023 = vand.u32 2147483647, %v960
    %vm1024 = vcmp.lt.f32.partialorder %v1023, 0.0004427343
    %v1025 = vsel %vm1024, %v1022, %v1019
    %v1026 = vadd.f32 %v961, 1.0
    %v1027 = vlog2.pop %v1026
    %v1028 = vmul.f32 %v1027, 0.6931472
    %v1029 = vmul.f32 -0.5, %v961
    %v1030 = vadd.f32 %v1029, 1.0
    %v1031 = vmul.f32 %v1030, %v961
    %v1032 = vand.u32 2147483647, %v961
    %vm1033 = vcmp.lt.f32.partialorder %v1032, 0.0004427343
    %v1034 = vsel %vm1033, %v1031, %v1028
    %v1035 = vadd.f32 %v962, 1.0
    %v1036 = vlog2.pop %v1035
    %v1037 = vmul.f32 %v1036, 0.6931472
    %v1038 = vmul.f32 -0.5, %v962
    %v1039 = vadd.f32 %v1038, 1.0
    %v1040 = vmul.f32 %v1039, %v962
    %v1041 = vand.u32 2147483647, %v962
    %vm1042 = vcmp.lt.f32.partialorder %v1041, 0.0004427343
    %v1043 = vsel %vm1042, %v1040, %v1037
    %v1044 = vadd.f32 %v963, 1.0
    %v1045 = vlog2.pop %v1044
    %v1046 = vmul.f32 %v1045, 0.6931472
    %v1047 = vmul.f32 -0.5, %v963
    %v1048 = vadd.f32 %v1047, 1.0
    %v1049 = vmul.f32 %v1048, %v963
    %v1050 = vand.u32 2147483647, %v963
    %vm1051 = vcmp.lt.f32.partialorder %v1050, 0.0004427343
    %v1052 = vsel %vm1051, %v1049, %v1046
    %v1053 = vadd.f32 %v964, 1.0
    %v1054 = vlog2.pop %v1053
    %v1055 = vmul.f32 %v1054, 0.6931472
    %v1056 = vmul.f32 -0.5, %v964
    %v1057 = vadd.f32 %v1056, 1.0
    %v1058 = vmul.f32 %v1057, %v964
    %v1059 = vand.u32 2147483647, %v964
    %vm1060 = vcmp.lt.f32.partialorder %v1059, 0.0004427343
    %v1061 = vsel %vm1060, %v1058, %v1055
    %v1062 = vadd.f32 %v965, 1.0
    %v1063 = vlog2.pop %v1062
    %v1064 = vmul.f32 %v1063, 0.6931472
    %v1065 = vmul.f32 -0.5, %v965
    %v1066 = vadd.f32 %v1065, 1.0
    %v1067 = vmul.f32 %v1066, %v965
    %v1068 = vand.u32 2147483647, %v965
    %vm1069 = vcmp.lt.f32.partialorder %v1068, 0.0004427343
    %v1070 = vsel %vm1069, %v1067, %v1064
    %v1071 = vadd.f32 %v966, 1.0
    %v1072 = vlog2.pop %v1071
    %v1073 = vmul.f32 %v1072, 0.6931472
    %v1074 = vmul.f32 -0.5, %v966
    %v1075 = vadd.f32 %v1074, 1.0
    %v1076 = vmul.f32 %v1075, %v966
    %v1077 = vand.u32 2147483647, %v966
    %vm1078 = vcmp.lt.f32.partialorder %v1077, 0.0004427343
    %v1079 = vsel %vm1078, %v1076, %v1073
    %v1080 = vadd.f32 %v967, 1.0
    %v1081 = vlog2.pop %v1080
    %v1082 = vmul.f32 %v1081, 0.6931472
    %v1083 = vmul.f32 -0.5, %v967
    %v1084 = vadd.f32 %v1083, 1.0
    %v1085 = vmul.f32 %v1084, %v967
    %v1086 = vand.u32 2147483647, %v967
    %vm1087 = vcmp.lt.f32.partialorder %v1086, 0.0004427343
    %v1088 = vsel %vm1087, %v1085, %v1082
    %v1089 = vadd.f32 %v968, 1.0
    %v1090 = vlog2.pop %v1089
    %v1091 = vmul.f32 %v1090, 0.6931472
    %v1092 = vmul.f32 -0.5, %v968
    %v1093 = vadd.f32 %v1092, 1.0
    %v1094 = vmul.f32 %v1093, %v968
    %v1095 = vand.u32 2147483647, %v968
    %vm1096 = vcmp.lt.f32.partialorder %v1095, 0.0004427343
    %v1097 = vsel %vm1096, %v1094, %v1091
    %v1098 = vadd.f32 %v969, 1.0
    %v1099 = vlog2.pop %v1098
    %v1100 = vmul.f32 %v1099, 0.6931472
    %v1101 = vmul.f32 -0.5, %v969
    %v1102 = vadd.f32 %v1101, 1.0
    %v1103 = vmul.f32 %v1102, %v969
    %v1104 = vand.u32 2147483647, %v969
    %vm1105 = vcmp.lt.f32.partialorder %v1104, 0.0004427343
    %v1106 = vsel %vm1105, %v1103, %v1100
    %v1107 = vadd.f32 %v970, 1.0
    %v1108 = vlog2.pop %v1107
    %v1109 = vmul.f32 %v1108, 0.6931472
    %v1110 = vmul.f32 -0.5, %v970
    %v1111 = vadd.f32 %v1110, 1.0
    %v1112 = vmul.f32 %v1111, %v970
    %v1113 = vand.u32 2147483647, %v970
    %vm1114 = vcmp.lt.f32.partialorder %v1113, 0.0004427343
    %v1115 = vsel %vm1114, %v1112, %v1109
    %v1116 = vadd.f32 %v971, 1.0
    %v1117 = vlog2.pop %v1116
    %v1118 = vmul.f32 %v1117, 0.6931472
    %v1119 = vmul.f32 -0.5, %v971
    %v1120 = vadd.f32 %v1119, 1.0
    %v1121 = vmul.f32 %v1120, %v971
    %v1122 = vand.u32 2147483647, %v971
    %vm1123 = vcmp.lt.f32.partialorder %v1122, 0.0004427343
    %v1124 = vsel %vm1123, %v1121, %v1118
    %v1125 = vadd.f32 %v972, 1.0
    %v1126 = vlog2.pop %v1125
    %v1127 = vmul.f32 %v1126, 0.6931472
    %v1128 = vmul.f32 -0.5, %v972
    %v1129 = vadd.f32 %v1128, 1.0
    %v1130 = vmul.f32 %v1129, %v972
    %v1131 = vand.u32 2147483647, %v972
    %vm1132 = vcmp.lt.f32.partialorder %v1131, 0.0004427343
    %v1133 = vsel %vm1132, %v1130, %v1127
    %v1134 = vadd.f32 %v973, 1.0
    %v1135 = vlog2.pop %v1134
    %v1136 = vmul.f32 %v1135, 0.6931472
    %v1137 = vmul.f32 -0.5, %v973
    %v1138 = vadd.f32 %v1137, 1.0
    %v1139 = vmul.f32 %v1138, %v973
    %v1140 = vand.u32 2147483647, %v973
    %vm1141 = vcmp.lt.f32.partialorder %v1140, 0.0004427343
    %v1142 = vsel %vm1141, %v1139, %v1136
    %v1143 = vadd.f32 %v974, 1.0
    %v1144 = vlog2.pop %v1143
    %v1145 = vmul.f32 %v1144, 0.6931472
    %v1146 = vmul.f32 -0.5, %v974
    %v1147 = vadd.f32 %v1146, 1.0
    %v1148 = vmul.f32 %v1147, %v974
    %v1149 = vand.u32 2147483647, %v974
    %vm1150 = vcmp.lt.f32.partialorder %v1149, 0.0004427343
    %v1151 = vsel %vm1150, %v1148, %v1145
    %v1152 = vadd.f32 %v975, 1.0
    %v1153 = vlog2.pop %v1152
    %v1154 = vmul.f32 %v1153, 0.6931472
    %v1155 = vmul.f32 -0.5, %v975
    %v1156 = vadd.f32 %v1155, 1.0
    %v1157 = vmul.f32 %v1156, %v975
    %v1158 = vand.u32 2147483647, %v975
    %vm1159 = vcmp.lt.f32.partialorder %v1158, 0.0004427343
    %v1160 = vsel %vm1159, %v1157, %v1154
    %v1161 = vadd.f32 %v976, 1.0
    %v1162 = vlog2.pop %v1161
    %v1163 = vmul.f32 %v1162, 0.6931472
    %v1164 = vmul.f32 -0.5, %v976
    %v1165 = vadd.f32 %v1164, 1.0
    %v1166 = vmul.f32 %v1165, %v976
    %v1167 = vand.u32 2147483647, %v976
    %vm1168 = vcmp.lt.f32.partialorder %v1167, 0.0004427343
    %v1169 = vsel %vm1168, %v1166, %v1163
    %v1170 = vadd.f32 %v977, 1.0
    %v1171 = vlog2.pop %v1170
    %v1172 = vmul.f32 %v1171, 0.6931472
    %v1173 = vmul.f32 -0.5, %v977
    %v1174 = vadd.f32 %v1173, 1.0
    %v1175 = vmul.f32 %v1174, %v977
    %v1176 = vand.u32 2147483647, %v977
    %vm1177 = vcmp.lt.f32.partialorder %v1176, 0.0004427343
    %v1178 = vsel %vm1177, %v1175, %v1172
    %v1179 = vadd.f32 %v978, 1.0
    %v1180 = vlog2.pop %v1179
    %v1181 = vmul.f32 %v1180, 0.6931472
    %v1182 = vmul.f32 -0.5, %v978
    %v1183 = vadd.f32 %v1182, 1.0
    %v1184 = vmul.f32 %v1183, %v978
    %v1185 = vand.u32 2147483647, %v978
    %vm1186 = vcmp.lt.f32.partialorder %v1185, 0.0004427343
    %v1187 = vsel %vm1186, %v1184, %v1181
    %v1188 = vadd.f32 %v979, 1.0
    %v1189 = vlog2.pop %v1188
    %v1190 = vmul.f32 %v1189, 0.6931472
    %v1191 = vmul.f32 -0.5, %v979
    %v1192 = vadd.f32 %v1191, 1.0
    %v1193 = vmul.f32 %v1192, %v979
    %v1194 = vand.u32 2147483647, %v979
    %vm1195 = vcmp.lt.f32.partialorder %v1194, 0.0004427343
    %v1196 = vsel %vm1195, %v1193, %v1190
    %v1197 = vadd.f32 %v980, 1.0
    %v1198 = vlog2.pop %v1197
    %v1199 = vmul.f32 %v1198, 0.6931472
    %v1200 = vmul.f32 -0.5, %v980
    %v1201 = vadd.f32 %v1200, 1.0
    %v1202 = vmul.f32 %v1201, %v980
    %v1203 = vand.u32 2147483647, %v980
    %vm1204 = vcmp.lt.f32.partialorder %v1203, 0.0004427343
    %v1205 = vsel %vm1204, %v1202, %v1199
    %v1206 = vsub.f32 %v739, %v989
    %v1207 = vsub.f32 %v748, %v998
    %v1208 = vsub.f32 %v757, %v1007
    %v1209 = vsub.f32 %v766, %v1016
    %v1210 = vsub.f32 %v775, %v1025
    %v1211 = vsub.f32 %v784, %v1034
    %v1212 = vsub.f32 %v793, %v1043
    %v1213 = vsub.f32 %v802, %v1052
    %v1214 = vsub.f32 %v811, %v1061
    %v1215 = vsub.f32 %v820, %v1070
    %v1216 = vsub.f32 %v829, %v1079
    %v1217 = vsub.f32 %v838, %v1088
    %v1218 = vsub.f32 %v847, %v1097
    %v1219 = vsub.f32 %v856, %v1106
    %v1220 = vsub.f32 %v865, %v1115
    %v1221 = vsub.f32 %v874, %v1124
    %v1222 = vsub.f32 %v883, %v1133
    %v1223 = vsub.f32 %v892, %v1142
    %v1224 = vsub.f32 %v901, %v1151
    %v1225 = vsub.f32 %v910, %v1160
    %v1226 = vsub.f32 %v919, %v1169
    %v1227 = vsub.f32 %v928, %v1178
    %v1228 = vsub.f32 %v937, %v1187
    %v1229 = vsub.f32 %v946, %v1196
    %v1230 = vsub.f32 %v955, %v1205
    %v1231 = vmul.f32 %v1206, 0.5
    %v1232 = vmul.f32 %v1207, 0.5
    %v1233 = vmul.f32 %v1208, 0.5
    %v1234 = vmul.f32 %v1209, 0.5
    %v1235 = vmul.f32 %v1210, 0.5
    %v1236 = vmul.f32 %v1211, 0.5
    %v1237 = vmul.f32 %v1212, 0.5
    %v1238 = vmul.f32 %v1213, 0.5
    %v1239 = vmul.f32 %v1214, 0.5
    %v1240 = vmul.f32 %v1215, 0.5
    %v1241 = vmul.f32 %v1216, 0.5
    %v1242 = vmul.f32 %v1217, 0.5
    %v1243 = vmul.f32 %v1218, 0.5
    %v1244 = vmul.f32 %v1219, 0.5
    %v1245 = vmul.f32 %v1220, 0.5
    %v1246 = vmul.f32 %v1221, 0.5
    %v1247 = vmul.f32 %v1222, 0.5
    %v1248 = vmul.f32 %v1223, 0.5
    %v1249 = vmul.f32 %v1224, 0.5
    %v1250 = vmul.f32 %v1225, 0.5
    %v1251 = vmul.f32 %v1226, 0.5
    %v1252 = vmul.f32 %v1227, 0.5
    %v1253 = vmul.f32 %v1228, 0.5
    %v1254 = vmul.f32 %v1229, 0.5
    %v1255 = vmul.f32 %v1230, 0.5
    %v1256 = vmul.f32 %v656, %v1231
    %v1257 = vmul.f32 %v657, %v1232
    %v1258 = vmul.f32 %v658, %v1233
    %v1259 = vmul.f32 %v659, %v1234
    %v1260 = vmul.f32 %v660, %v1235
    %v1261 = vmul.f32 %v661, %v1236
    %v1262 = vmul.f32 %v662, %v1237
    %v1263 = vmul.f32 %v663, %v1238
    %v1264 = vmul.f32 %v664, %v1239
    %v1265 = vmul.f32 %v665, %v1240
    %v1266 = vmul.f32 %v666, %v1241
    %v1267 = vmul.f32 %v667, %v1242
    %v1268 = vmul.f32 %v668, %v1243
    %v1269 = vmul.f32 %v669, %v1244
    %v1270 = vmul.f32 %v670, %v1245
    %v1271 = vmul.f32 %v671, %v1246
    %v1272 = vmul.f32 %v672, %v1247
    %v1273 = vmul.f32 %v673, %v1248
    %v1274 = vmul.f32 %v674, %v1249
    %v1275 = vmul.f32 %v675, %v1250
    %v1276 = vmul.f32 %v676, %v1251
    %v1277 = vmul.f32 %v677, %v1252
    %v1278 = vmul.f32 %v678, %v1253
    %v1279 = vmul.f32 %v679, %v1254
    %v1280 = vmul.f32 %v680, %v1255
    %v1281 = vmax.f32 %v1256, -15.0
    %v1282 = vmax.f32 %v1257, -15.0
    %v1283 = vmax.f32 %v1258, -15.0
    %v1284 = vmax.f32 %v1259, -15.0
    %v1285 = vmax.f32 %v1260, -15.0
    %v1286 = vmax.f32 %v1261, -15.0
    %v1287 = vmax.f32 %v1262, -15.0
    %v1288 = vmax.f32 %v1263, -15.0
    %v1289 = vmax.f32 %v1264, -15.0
    %v1290 = vmax.f32 %v1265, -15.0
    %v1291 = vmax.f32 %v1266, -15.0
    %v1292 = vmax.f32 %v1267, -15.0
    %v1293 = vmax.f32 %v1268, -15.0
    %v1294 = vmax.f32 %v1269, -15.0
    %v1295 = vmax.f32 %v1270, -15.0
    %v1296 = vmax.f32 %v1271, -15.0
    %v1297 = vmax.f32 %v1272, -15.0
    %v1298 = vmax.f32 %v1273, -15.0
    %v1299 = vmax.f32 %v1274, -15.0
    %v1300 = vmax.f32 %v1275, -15.0
    %v1301 = vmax.f32 %v1276, -15.0
    %v1302 = vmax.f32 %v1277, -15.0
    %v1303 = vmax.f32 %v1278, -15.0
    %v1304 = vmax.f32 %v1279, -15.0
    %v1305 = vmax.f32 %v1280, -15.0
    %v1306 = vmin.f32 %v1281, 15.0
    %v1307 = vmin.f32 %v1282, 15.0
    %v1308 = vmin.f32 %v1283, 15.0
    %v1309 = vmin.f32 %v1284, 15.0
    %v1310 = vmin.f32 %v1285, 15.0
    %v1311 = vmin.f32 %v1286, 15.0
    %v1312 = vmin.f32 %v1287, 15.0
    %v1313 = vmin.f32 %v1288, 15.0
    %v1314 = vmin.f32 %v1289, 15.0
    %v1315 = vmin.f32 %v1290, 15.0
    %v1316 = vmin.f32 %v1291, 15.0
    %v1317 = vmin.f32 %v1292, 15.0
    %v1318 = vmin.f32 %v1293, 15.0
    %v1319 = vmin.f32 %v1294, 15.0
    %v1320 = vmin.f32 %v1295, 15.0
    %v1321 = vmin.f32 %v1296, 15.0
    %v1322 = vmin.f32 %v1297, 15.0
    %v1323 = vmin.f32 %v1298, 15.0
    %v1324 = vmin.f32 %v1299, 15.0
    %v1325 = vmin.f32 %v1300, 15.0
    %v1326 = vmin.f32 %v1301, 15.0
    %v1327 = vmin.f32 %v1302, 15.0
    %v1328 = vmin.f32 %v1303, 15.0
    %v1329 = vmin.f32 %v1304, 15.0
    %v1330 = vmin.f32 %v1305, 15.0
    %v1331 = vtanh.pop %v1306
    %v1332 = vtanh.pop %v1307
    %v1333 = vtanh.pop %v1308
    %v1334 = vtanh.pop %v1309
    %v1335 = vtanh.pop %v1310
    %v1336 = vtanh.pop %v1311
    %v1337 = vtanh.pop %v1312
    %v1338 = vtanh.pop %v1313
    %v1339 = vtanh.pop %v1314
    %v1340 = vtanh.pop %v1315
    %v1341 = vtanh.pop %v1316
    %v1342 = vtanh.pop %v1317
    %v1343 = vtanh.pop %v1318
    %v1344 = vtanh.pop %v1319
    %v1345 = vtanh.pop %v1320
    %v1346 = vtanh.pop %v1321
    %v1347 = vtanh.pop %v1322
    %v1348 = vtanh.pop %v1323
    %v1349 = vtanh.pop %v1324
    %v1350 = vtanh.pop %v1325
    %v1351 = vtanh.pop %v1326
    %v1352 = vtanh.pop %v1327
    %v1353 = vtanh.pop %v1328
    %v1354 = vtanh.pop %v1329
    %v1355 = vtanh.pop %v1330
    %v1356 = vmul.f32 %v1331, %v606
    %v1357 = vmul.f32 %v1332, %v607
    %v1358 = vmul.f32 %v1333, %v608
    %v1359 = vmul.f32 %v1334, %v609
    %v1360 = vmul.f32 %v1335, %v610
    %v1361 = vmul.f32 %v1336, %v611
    %v1362 = vmul.f32 %v1337, %v612
    %v1363 = vmul.f32 %v1338, %v613
    %v1364 = vmul.f32 %v1339, %v614
    %v1365 = vmul.f32 %v1340, %v615
    %v1366 = vmul.f32 %v1341, %v616
    %v1367 = vmul.f32 %v1342, %v617
    %v1368 = vmul.f32 %v1343, %v618
    %v1369 = vmul.f32 %v1344, %v619
    %v1370 = vmul.f32 %v1345, %v620
    %v1371 = vmul.f32 %v1346, %v621
    %v1372 = vmul.f32 %v1347, %v622
    %v1373 = vmul.f32 %v1348, %v623
    %v1374 = vmul.f32 %v1349, %v624
    %v1375 = vmul.f32 %v1350, %v625
    %v1376 = vmul.f32 %v1351, %v626
    %v1377 = vmul.f32 %v1352, %v627
    %v1378 = vmul.f32 %v1353, %v628
    %v1379 = vmul.f32 %v1354, %v629
    %v1380 = vmul.f32 %v1355, %v630
    %vm1381 = vcmp.eq.f32.partialorder %v376, 0.0
    %vm1382 = vcmp.eq.f32.partialorder %v378, 0.0
    %vm1383 = vcmp.eq.f32.partialorder %v380, 0.0
    %vm1384 = vcmp.eq.f32.partialorder %v382, 0.0
    %vm1385 = vcmp.eq.f32.partialorder %v384, 0.0
    %vm1386 = vcmp.eq.f32.partialorder %v386, 0.0
    %vm1387 = vcmp.eq.f32.partialorder %v388, 0.0
    %vm1388 = vcmp.eq.f32.partialorder %v390, 0.0
    %vm1389 = vcmp.eq.f32.partialorder %v392, 0.0
    %vm1390 = vcmp.eq.f32.partialorder %v394, 0.0
    %vm1391 = vcmp.eq.f32.partialorder %v396, 0.0
    %vm1392 = vcmp.eq.f32.partialorder %v398, 0.0
    %vm1393 = vcmp.eq.f32.partialorder %v400, 0.0
    %vm1394 = vcmp.eq.f32.partialorder %v402, 0.0
    %vm1395 = vcmp.eq.f32.partialorder %v404, 0.0
    %vm1396 = vcmp.eq.f32.partialorder %v406, 0.0
    %vm1397 = vcmp.eq.f32.partialorder %v408, 0.0
    %vm1398 = vcmp.eq.f32.partialorder %v410, 0.0
    %vm1399 = vcmp.eq.f32.partialorder %v412, 0.0
    %vm1400 = vcmp.eq.f32.partialorder %v414, 0.0
    %vm1401 = vcmp.eq.f32.partialorder %v416, 0.0
    %vm1402 = vcmp.eq.f32.partialorder %v418, 0.0
    %vm1403 = vcmp.eq.f32.partialorder %v420, 0.0
    %vm1404 = vcmp.eq.f32.partialorder %v422, 0.0
    %vm1405 = vcmp.eq.f32.partialorder %v424, 0.0
    %v1406 = vsel %vm1381, 0.0, %v1356
    %v1407 = vsel %vm1382, 0.0, %v1357
    %v1408 = vsel %vm1383, 0.0, %v1358
    %v1409 = vsel %vm1384, 0.0, %v1359
    %v1410 = vsel %vm1385, 0.0, %v1360
    %v1411 = vsel %vm1386, 0.0, %v1361
    %v1412 = vsel %vm1387, 0.0, %v1362
    %v1413 = vsel %vm1388, 0.0, %v1363
    %v1414 = vsel %vm1389, 0.0, %v1364
    %v1415 = vsel %vm1390, 0.0, %v1365
    %v1416 = vsel %vm1391, 0.0, %v1366
    %v1417 = vsel %vm1392, 0.0, %v1367
    %v1418 = vsel %vm1393, 0.0, %v1368
    %v1419 = vsel %vm1394, 0.0, %v1369
    %v1420 = vsel %vm1395, 0.0, %v1370
    %v1421 = vsel %vm1396, 0.0, %v1371
    %v1422 = vsel %vm1397, 0.0, %v1372
    %v1423 = vsel %vm1398, 0.0, %v1373
    %v1424 = vsel %vm1399, 0.0, %v1374
    %v1425 = vsel %vm1400, 0.0, %v1375
    %v1426 = vsel %vm1401, 0.0, %v1376
    %v1427 = vsel %vm1402, 0.0, %v1377
    %v1428 = vsel %vm1403, 0.0, %v1378
    %v1429 = vsel %vm1404, 0.0, %v1379
    %v1430 = vsel %vm1405, 0.0, %v1380
    %v1431 = vmul.f32 %v1406, %v1406
    %v1432 = vmul.f32 %v1407, %v1407
    %v1433 = vmul.f32 %v1408, %v1408
    %v1434 = vmul.f32 %v1409, %v1409
    %v1435 = vmul.f32 %v1410, %v1410
    %v1436 = vmul.f32 %v1411, %v1411
    %v1437 = vmul.f32 %v1412, %v1412
    %v1438 = vmul.f32 %v1413, %v1413
    %v1439 = vmul.f32 %v1414, %v1414
    %v1440 = vmul.f32 %v1415, %v1415
    %v1441 = vmul.f32 %v1416, %v1416
    %v1442 = vmul.f32 %v1417, %v1417
    %v1443 = vmul.f32 %v1418, %v1418
    %v1444 = vmul.f32 %v1419, %v1419
    %v1445 = vmul.f32 %v1420, %v1420
    %v1446 = vmul.f32 %v1421, %v1421
    %v1447 = vmul.f32 %v1422, %v1422
    %v1448 = vmul.f32 %v1423, %v1423
    %v1449 = vmul.f32 %v1424, %v1424
    %v1450 = vmul.f32 %v1425, %v1425
    %v1451 = vmul.f32 %v1426, %v1426
    %v1452 = vmul.f32 %v1427, %v1427
    %v1453 = vmul.f32 %v1428, %v1428
    %v1454 = vmul.f32 %v1429, %v1429
    %v1455 = vmul.f32 %v1430, %v1430
    %v1456 = vmul.f32 %v376, %v1431
    %v1457 = vmul.f32 %v378, %v1432
    %v1458 = vmul.f32 %v380, %v1433
    %v1459 = vmul.f32 %v382, %v1434
    %v1460 = vmul.f32 %v384, %v1435
    %v1461 = vmul.f32 %v386, %v1436
    %v1462 = vmul.f32 %v388, %v1437
    %v1463 = vmul.f32 %v390, %v1438
    %v1464 = vmul.f32 %v392, %v1439
    %v1465 = vmul.f32 %v394, %v1440
    %v1466 = vmul.f32 %v396, %v1441
    %v1467 = vmul.f32 %v398, %v1442
    %v1468 = vmul.f32 %v400, %v1443
    %v1469 = vmul.f32 %v402, %v1444
    %v1470 = vmul.f32 %v404, %v1445
    %v1471 = vmul.f32 %v406, %v1446
    %v1472 = vmul.f32 %v408, %v1447
    %v1473 = vmul.f32 %v410, %v1448
    %v1474 = vmul.f32 %v412, %v1449
    %v1475 = vmul.f32 %v414, %v1450
    %v1476 = vmul.f32 %v416, %v1451
    %v1477 = vmul.f32 %v418, %v1452
    %v1478 = vmul.f32 %v420, %v1453
    %v1479 = vmul.f32 %v422, %v1454
    %v1480 = vmul.f32 %v424, %v1455
    %v1481 = vmax.f32 %v1456, 1e-30
    %v1482 = vmax.f32 %v1457, 1e-30
    %v1483 = vmax.f32 %v1458, 1e-30
    %v1484 = vmax.f32 %v1459, 1e-30
    %v1485 = vmax.f32 %v1460, 1e-30
    %v1486 = vmax.f32 %v1461, 1e-30
    %v1487 = vmax.f32 %v1462, 1e-30
    %v1488 = vmax.f32 %v1463, 1e-30
    %v1489 = vmax.f32 %v1464, 1e-30
    %v1490 = vmax.f32 %v1465, 1e-30
    %v1491 = vmax.f32 %v1466, 1e-30
    %v1492 = vmax.f32 %v1467, 1e-30
    %v1493 = vmax.f32 %v1468, 1e-30
    %v1494 = vmax.f32 %v1469, 1e-30
    %v1495 = vmax.f32 %v1470, 1e-30
    %v1496 = vmax.f32 %v1471, 1e-30
    %v1497 = vmax.f32 %v1472, 1e-30
    %v1498 = vmax.f32 %v1473, 1e-30
    %v1499 = vmax.f32 %v1474, 1e-30
    %v1500 = vmax.f32 %v1475, 1e-30
    %v1501 = vmax.f32 %v1476, 1e-30
    %v1502 = vmax.f32 %v1477, 1e-30
    %v1503 = vmax.f32 %v1478, 1e-30
    %v1504 = vmax.f32 %v1479, 1e-30
    %v1505 = vmax.f32 %v1480, 1e-30
    %v1506 = vrsqrt.pop %v1481
    %v1507 = vrsqrt.pop %v1482
    %v1508 = vrsqrt.pop %v1483
    %v1509 = vrsqrt.pop %v1484
    %v1510 = vrsqrt.pop %v1485
    %v1511 = vrsqrt.pop %v1486
    %v1512 = vrsqrt.pop %v1487
    %v1513 = vrsqrt.pop %v1488
    %v1514 = vrsqrt.pop %v1489
    %v1515 = vrsqrt.pop %v1490
    %v1516 = vrsqrt.pop %v1491
    %v1517 = vrsqrt.pop %v1492
    %v1518 = vrsqrt.pop %v1493
    %v1519 = vrsqrt.pop %v1494
    %v1520 = vrsqrt.pop %v1495
    %v1521 = vrsqrt.pop %v1496
    %v1522 = vrsqrt.pop %v1497
    %v1523 = vrsqrt.pop %v1498
    %v1524 = vrsqrt.pop %v1499
    %v1525 = vrsqrt.pop %v1500
    %v1526 = vrsqrt.pop %v1501
    %v1527 = vrsqrt.pop %v1502
    %v1528 = vrsqrt.pop %v1503
    %v1529 = vrsqrt.pop %v1504
    %v1530 = vrsqrt.pop %v1505
    %v1531 = vmul.f32 %v1481, %v1506
    %v1532 = vmul.f32 %v1482, %v1507
    %v1533 = vmul.f32 %v1483, %v1508
    %v1534 = vmul.f32 %v1484, %v1509
    %v1535 = vmul.f32 %v1485, %v1510
    %v1536 = vmul.f32 %v1486, %v1511
    %v1537 = vmul.f32 %v1487, %v1512
    %v1538 = vmul.f32 %v1488, %v1513
    %v1539 = vmul.f32 %v1489, %v1514
    %v1540 = vmul.f32 %v1490, %v1515
    %v1541 = vmul.f32 %v1491, %v1516
    %v1542 = vmul.f32 %v1492, %v1517
    %v1543 = vmul.f32 %v1493, %v1518
    %v1544 = vmul.f32 %v1494, %v1519
    %v1545 = vmul.f32 %v1495, %v1520
    %v1546 = vmul.f32 %v1496, %v1521
    %v1547 = vmul.f32 %v1497, %v1522
    %v1548 = vmul.f32 %v1498, %v1523
    %v1549 = vmul.f32 %v1499, %v1524
    %v1550 = vmul.f32 %v1500, %v1525
    %v1551 = vmul.f32 %v1501, %v1526
    %v1552 = vmul.f32 %v1502, %v1527
    %v1553 = vmul.f32 %v1503, %v1528
    %v1554 = vmul.f32 %v1504, %v1529
    %v1555 = vmul.f32 %v1505, %v1530
    %vm1556 = vcmp.gt.f32.partialorder %v1531, 0.996
    %vm1557 = vcmp.gt.f32.partialorder %v1532, 0.996
    %vm1558 = vcmp.gt.f32.partialorder %v1533, 0.996
    %vm1559 = vcmp.gt.f32.partialorder %v1534, 0.996
    %vm1560 = vcmp.gt.f32.partialorder %v1535, 0.996
    %vm1561 = vcmp.gt.f32.partialorder %v1536, 0.996
    %vm1562 = vcmp.gt.f32.partialorder %v1537, 0.996
    %vm1563 = vcmp.gt.f32.partialorder %v1538, 0.996
    %vm1564 = vcmp.gt.f32.partialorder %v1539, 0.996
    %vm1565 = vcmp.gt.f32.partialorder %v1540, 0.996
    %vm1566 = vcmp.gt.f32.partialorder %v1541, 0.996
    %vm1567 = vcmp.gt.f32.partialorder %v1542, 0.996
    %vm1568 = vcmp.gt.f32.partialorder %v1543, 0.996
    %vm1569 = vcmp.gt.f32.partialorder %v1544, 0.996
    %vm1570 = vcmp.gt.f32.partialorder %v1545, 0.996
    %vm1571 = vcmp.gt.f32.partialorder %v1546, 0.996
    %vm1572 = vcmp.gt.f32.partialorder %v1547, 0.996
    %vm1573 = vcmp.gt.f32.partialorder %v1548, 0.996
    %vm1574 = vcmp.gt.f32.partialorder %v1549, 0.996
    %vm1575 = vcmp.gt.f32.partialorder %v1550, 0.996
    %vm1576 = vcmp.gt.f32.partialorder %v1551, 0.996
    %vm1577 = vcmp.gt.f32.partialorder %v1552, 0.996
    %vm1578 = vcmp.gt.f32.partialorder %v1553, 0.996
    %vm1579 = vcmp.gt.f32.partialorder %v1554, 0.996
    %vm1580 = vcmp.gt.f32.partialorder %v1555, 0.996
    %v1581 = vmul.f32 %v1506, 0.996
    %v1582 = vmul.f32 %v1507, 0.996
    %v1583 = vmul.f32 %v1508, 0.996
    %v1584 = vmul.f32 %v1509, 0.996
    %v1585 = vmul.f32 %v1510, 0.996
    %v1586 = vmul.f32 %v1511, 0.996
    %v1587 = vmul.f32 %v1512, 0.996
    %v1588 = vmul.f32 %v1513, 0.996
    %v1589 = vmul.f32 %v1514, 0.996
    %v1590 = vmul.f32 %v1515, 0.996
    %v1591 = vmul.f32 %v1516, 0.996
    %v1592 = vmul.f32 %v1517, 0.996
    %v1593 = vmul.f32 %v1518, 0.996
    %v1594 = vmul.f32 %v1519, 0.996
    %v1595 = vmul.f32 %v1520, 0.996
    %v1596 = vmul.f32 %v1521, 0.996
    %v1597 = vmul.f32 %v1522, 0.996
    %v1598 = vmul.f32 %v1523, 0.996
    %v1599 = vmul.f32 %v1524, 0.996
    %v1600 = vmul.f32 %v1525, 0.996
    %v1601 = vmul.f32 %v1526, 0.996
    %v1602 = vmul.f32 %v1527, 0.996
    %v1603 = vmul.f32 %v1528, 0.996
    %v1604 = vmul.f32 %v1529, 0.996
    %v1605 = vmul.f32 %v1530, 0.996
    %v1606 = vsel %vm1556, %v1581, 1.0
    %v1607 = vsel %vm1557, %v1582, 1.0
    %v1608 = vsel %vm1558, %v1583, 1.0
    %v1609 = vsel %vm1559, %v1584, 1.0
    %v1610 = vsel %vm1560, %v1585, 1.0
    %v1611 = vsel %vm1561, %v1586, 1.0
    %v1612 = vsel %vm1562, %v1587, 1.0
    %v1613 = vsel %vm1563, %v1588, 1.0
    %v1614 = vsel %vm1564, %v1589, 1.0
    %v1615 = vsel %vm1565, %v1590, 1.0
    %v1616 = vsel %vm1566, %v1591, 1.0
    %v1617 = vsel %vm1567, %v1592, 1.0
    %v1618 = vsel %vm1568, %v1593, 1.0
    %v1619 = vsel %vm1569, %v1594, 1.0
    %v1620 = vsel %vm1570, %v1595, 1.0
    %v1621 = vsel %vm1571, %v1596, 1.0
    %v1622 = vsel %vm1572, %v1597, 1.0
    %v1623 = vsel %vm1573, %v1598, 1.0
    %v1624 = vsel %vm1574, %v1599, 1.0
    %v1625 = vsel %vm1575, %v1600, 1.0
    %v1626 = vsel %vm1576, %v1601, 1.0
    %v1627 = vsel %vm1577, %v1602, 1.0
    %v1628 = vsel %vm1578, %v1603, 1.0
    %v1629 = vsel %vm1579, %v1604, 1.0
    %v1630 = vsel %vm1580, %v1605, 1.0
    %v1631 = vmul.f32 %v1406, %v1606
    %v1632 = vmul.f32 %v1407, %v1607
    %v1633 = vmul.f32 %v1408, %v1608
    %v1634 = vmul.f32 %v1409, %v1609
    %v1635 = vmul.f32 %v1410, %v1610
    %v1636 = vmul.f32 %v1411, %v1611
    %v1637 = vmul.f32 %v1412, %v1612
    %v1638 = vmul.f32 %v1413, %v1613
    %v1639 = vmul.f32 %v1414, %v1614
    %v1640 = vmul.f32 %v1415, %v1615
    %v1641 = vmul.f32 %v1416, %v1616
    %v1642 = vmul.f32 %v1417, %v1617
    %v1643 = vmul.f32 %v1418, %v1618
    %v1644 = vmul.f32 %v1419, %v1619
    %v1645 = vmul.f32 %v1420, %v1620
    %v1646 = vmul.f32 %v1421, %v1621
    %v1647 = vmul.f32 %v1422, %v1622
    %v1648 = vmul.f32 %v1423, %v1623
    %v1649 = vmul.f32 %v1424, %v1624
    %v1650 = vmul.f32 %v1425, %v1625
    %v1651 = vmul.f32 %v1426, %v1626
    %v1652 = vmul.f32 %v1427, %v1627
    %v1653 = vmul.f32 %v1428, %v1628
    %v1654 = vmul.f32 %v1429, %v1629
    %v1655 = vmul.f32 %v1430, %v1630
    %v1656 = vmul.f32 %v1606, %v1606
    %v1657 = vmul.f32 %v1607, %v1607
    %v1658 = vmul.f32 %v1608, %v1608
    %v1659 = vmul.f32 %v1609, %v1609
    %v1660 = vmul.f32 %v1610, %v1610
    %v1661 = vmul.f32 %v1611, %v1611
    %v1662 = vmul.f32 %v1612, %v1612
    %v1663 = vmul.f32 %v1613, %v1613
    %v1664 = vmul.f32 %v1614, %v1614
    %v1665 = vmul.f32 %v1615, %v1615
    %v1666 = vmul.f32 %v1616, %v1616
    %v1667 = vmul.f32 %v1617, %v1617
    %v1668 = vmul.f32 %v1618, %v1618
    %v1669 = vmul.f32 %v1619, %v1619
    %v1670 = vmul.f32 %v1620, %v1620
    %v1671 = vmul.f32 %v1621, %v1621
    %v1672 = vmul.f32 %v1622, %v1622
    %v1673 = vmul.f32 %v1623, %v1623
    %v1674 = vmul.f32 %v1624, %v1624
    %v1675 = vmul.f32 %v1625, %v1625
    %v1676 = vmul.f32 %v1626, %v1626
    %v1677 = vmul.f32 %v1627, %v1627
    %v1678 = vmul.f32 %v1628, %v1628
    %v1679 = vmul.f32 %v1629, %v1629
    %v1680 = vmul.f32 %v1630, %v1630
    %v1681 = vmul.f32 %v1456, %v1656
    %v1682 = vmul.f32 %v1457, %v1657
    %v1683 = vmul.f32 %v1458, %v1658
    %v1684 = vmul.f32 %v1459, %v1659
    %v1685 = vmul.f32 %v1460, %v1660
    %v1686 = vmul.f32 %v1461, %v1661
    %v1687 = vmul.f32 %v1462, %v1662
    %v1688 = vmul.f32 %v1463, %v1663
    %v1689 = vmul.f32 %v1464, %v1664
    %v1690 = vmul.f32 %v1465, %v1665
    %v1691 = vmul.f32 %v1466, %v1666
    %v1692 = vmul.f32 %v1467, %v1667
    %v1693 = vmul.f32 %v1468, %v1668
    %v1694 = vmul.f32 %v1469, %v1669
    %v1695 = vmul.f32 %v1470, %v1670
    %v1696 = vmul.f32 %v1471, %v1671
    %v1697 = vmul.f32 %v1472, %v1672
    %v1698 = vmul.f32 %v1473, %v1673
    %v1699 = vmul.f32 %v1474, %v1674
    %v1700 = vmul.f32 %v1475, %v1675
    %v1701 = vmul.f32 %v1476, %v1676
    %v1702 = vmul.f32 %v1477, %v1677
    %v1703 = vmul.f32 %v1478, %v1678
    %v1704 = vmul.f32 %v1479, %v1679
    %v1705 = vmul.f32 %v1480, %v1680
    %v1706 = vmul.f32 %v1631, %v457
    %v1707 = vmul.f32 %v1632, %v459
    %v1708 = vmul.f32 %v1633, %v461
    %v1709 = vmul.f32 %v1634, %v463
    %v1710 = vmul.f32 %v1635, %v465
    %v1711 = vmul.f32 %v1636, %v467
    %v1712 = vmul.f32 %v1637, %v469
    %v1713 = vmul.f32 %v1638, %v471
    %v1714 = vmul.f32 %v1639, %v473
    %v1715 = vmul.f32 %v1640, %v475
    %v1716 = vmul.f32 %v1641, %v477
    %v1717 = vmul.f32 %v1642, %v479
    %v1718 = vmul.f32 %v1643, %v481
    %v1719 = vmul.f32 %v1644, %v483
    %v1720 = vmul.f32 %v1645, %v485
    %v1721 = vmul.f32 %v1646, %v487
    %v1722 = vmul.f32 %v1647, %v489
    %v1723 = vmul.f32 %v1648, %v491
    %v1724 = vmul.f32 %v1649, %v493
    %v1725 = vmul.f32 %v1650, %v495
    %v1726 = vmul.f32 %v1651, %v497
    %v1727 = vmul.f32 %v1652, %v499
    %v1728 = vmul.f32 %v1653, %v501
    %v1729 = vmul.f32 %v1654, %v503
    %v1730 = vmul.f32 %v1655, %v505
    %v1731 = vmul.f32 %v1706, 2.0
    %v1732 = vmul.f32 %v1707, 2.0
    %v1733 = vmul.f32 %v1708, 2.0
    %v1734 = vmul.f32 %v1709, 2.0
    %v1735 = vmul.f32 %v1710, 2.0
    %v1736 = vmul.f32 %v1711, 2.0
    %v1737 = vmul.f32 %v1712, 2.0
    %v1738 = vmul.f32 %v1713, 2.0
    %v1739 = vmul.f32 %v1714, 2.0
    %v1740 = vmul.f32 %v1715, 2.0
    %v1741 = vmul.f32 %v1716, 2.0
    %v1742 = vmul.f32 %v1717, 2.0
    %v1743 = vmul.f32 %v1718, 2.0
    %v1744 = vmul.f32 %v1719, 2.0
    %v1745 = vmul.f32 %v1720, 2.0
    %v1746 = vmul.f32 %v1721, 2.0
    %v1747 = vmul.f32 %v1722, 2.0
    %v1748 = vmul.f32 %v1723, 2.0
    %v1749 = vmul.f32 %v1724, 2.0
    %v1750 = vmul.f32 %v1725, 2.0
    %v1751 = vmul.f32 %v1726, 2.0
    %v1752 = vmul.f32 %v1727, 2.0
    %v1753 = vmul.f32 %v1728, 2.0
    %v1754 = vmul.f32 %v1729, 2.0
    %v1755 = vmul.f32 %v1730, 2.0
    %v1756 = vadd.f32 %v1731, 1.0
    %v1757 = vadd.f32 %v1732, 1.0
    %v1758 = vadd.f32 %v1733, 1.0
    %v1759 = vadd.f32 %v1734, 1.0
    %v1760 = vadd.f32 %v1735, 1.0
    %v1761 = vadd.f32 %v1736, 1.0
    %v1762 = vadd.f32 %v1737, 1.0
    %v1763 = vadd.f32 %v1738, 1.0
    %v1764 = vadd.f32 %v1739, 1.0
    %v1765 = vadd.f32 %v1740, 1.0
    %v1766 = vadd.f32 %v1741, 1.0
    %v1767 = vadd.f32 %v1742, 1.0
    %v1768 = vadd.f32 %v1743, 1.0
    %v1769 = vadd.f32 %v1744, 1.0
    %v1770 = vadd.f32 %v1745, 1.0
    %v1771 = vadd.f32 %v1746, 1.0
    %v1772 = vadd.f32 %v1747, 1.0
    %v1773 = vadd.f32 %v1748, 1.0
    %v1774 = vadd.f32 %v1749, 1.0
    %v1775 = vadd.f32 %v1750, 1.0
    %v1776 = vadd.f32 %v1751, 1.0
    %v1777 = vadd.f32 %v1752, 1.0
    %v1778 = vadd.f32 %v1753, 1.0
    %v1779 = vadd.f32 %v1754, 1.0
    %v1780 = vadd.f32 %v1755, 1.0
    %v1781 = vadd.f32 %v1756, 0.00752747
    %v1782 = vadd.f32 %v1757, 0.00752747
    %v1783 = vadd.f32 %v1758, 0.00752747
    %v1784 = vadd.f32 %v1759, 0.00752747
    %v1785 = vadd.f32 %v1760, 0.00752747
    %v1786 = vadd.f32 %v1761, 0.00752747
    %v1787 = vadd.f32 %v1762, 0.00752747
    %v1788 = vadd.f32 %v1763, 0.00752747
    %v1789 = vadd.f32 %v1764, 0.00752747
    %v1790 = vadd.f32 %v1765, 0.00752747
    %v1791 = vadd.f32 %v1766, 0.00752747
    %v1792 = vadd.f32 %v1767, 0.00752747
    %v1793 = vadd.f32 %v1768, 0.00752747
    %v1794 = vadd.f32 %v1769, 0.00752747
    %v1795 = vadd.f32 %v1770, 0.00752747
    %v1796 = vadd.f32 %v1771, 0.00752747
    %v1797 = vadd.f32 %v1772, 0.00752747
    %v1798 = vadd.f32 %v1773, 0.00752747
    %v1799 = vadd.f32 %v1774, 0.00752747
    %v1800 = vadd.f32 %v1775, 0.00752747
    %v1801 = vadd.f32 %v1776, 0.00752747
    %v1802 = vadd.f32 %v1777, 0.00752747
    %v1803 = vadd.f32 %v1778, 0.00752747
    %v1804 = vadd.f32 %v1779, 0.00752747
    %v1805 = vadd.f32 %v1780, 0.00752747
    %v1806 = vsub.f32 1.0, %v1681
    %v1807 = vsub.f32 1.0, %v1682
    %v1808 = vsub.f32 1.0, %v1683
    %v1809 = vsub.f32 1.0, %v1684
    %v1810 = vsub.f32 1.0, %v1685
    %v1811 = vsub.f32 1.0, %v1686
    %v1812 = vsub.f32 1.0, %v1687
    %v1813 = vsub.f32 1.0, %v1688
    %v1814 = vsub.f32 1.0, %v1689
    %v1815 = vsub.f32 1.0, %v1690
    %v1816 = vsub.f32 1.0, %v1691
    %v1817 = vsub.f32 1.0, %v1692
    %v1818 = vsub.f32 1.0, %v1693
    %v1819 = vsub.f32 1.0, %v1694
    %v1820 = vsub.f32 1.0, %v1695
    %v1821 = vsub.f32 1.0, %v1696
    %v1822 = vsub.f32 1.0, %v1697
    %v1823 = vsub.f32 1.0, %v1698
    %v1824 = vsub.f32 1.0, %v1699
    %v1825 = vsub.f32 1.0, %v1700
    %v1826 = vsub.f32 1.0, %v1701
    %v1827 = vsub.f32 1.0, %v1702
    %v1828 = vsub.f32 1.0, %v1703
    %v1829 = vsub.f32 1.0, %v1704
    %v1830 = vsub.f32 1.0, %v1705
    %v1831 = vmul.f32 %v1681, 0.00752747
    %v1832 = vmul.f32 %v1682, 0.00752747
    %v1833 = vmul.f32 %v1683, 0.00752747
    %v1834 = vmul.f32 %v1684, 0.00752747
    %v1835 = vmul.f32 %v1685, 0.00752747
    %v1836 = vmul.f32 %v1686, 0.00752747
    %v1837 = vmul.f32 %v1687, 0.00752747
    %v1838 = vmul.f32 %v1688, 0.00752747
    %v1839 = vmul.f32 %v1689, 0.00752747
    %v1840 = vmul.f32 %v1690, 0.00752747
    %v1841 = vmul.f32 %v1691, 0.00752747
    %v1842 = vmul.f32 %v1692, 0.00752747
    %v1843 = vmul.f32 %v1693, 0.00752747
    %v1844 = vmul.f32 %v1694, 0.00752747
    %v1845 = vmul.f32 %v1695, 0.00752747
    %v1846 = vmul.f32 %v1696, 0.00752747
    %v1847 = vmul.f32 %v1697, 0.00752747
    %v1848 = vmul.f32 %v1698, 0.00752747
    %v1849 = vmul.f32 %v1699, 0.00752747
    %v1850 = vmul.f32 %v1700, 0.00752747
    %v1851 = vmul.f32 %v1701, 0.00752747
    %v1852 = vmul.f32 %v1702, 0.00752747
    %v1853 = vmul.f32 %v1703, 0.00752747
    %v1854 = vmul.f32 %v1704, 0.00752747
    %v1855 = vmul.f32 %v1705, 0.00752747
    %v1856 = vadd.f32 %v1756, %v1831
    %v1857 = vadd.f32 %v1757, %v1832
    %v1858 = vadd.f32 %v1758, %v1833
    %v1859 = vadd.f32 %v1759, %v1834
    %v1860 = vadd.f32 %v1760, %v1835
    %v1861 = vadd.f32 %v1761, %v1836
    %v1862 = vadd.f32 %v1762, %v1837
    %v1863 = vadd.f32 %v1763, %v1838
    %v1864 = vadd.f32 %v1764, %v1839
    %v1865 = vadd.f32 %v1765, %v1840
    %v1866 = vadd.f32 %v1766, %v1841
    %v1867 = vadd.f32 %v1767, %v1842
    %v1868 = vadd.f32 %v1768, %v1843
    %v1869 = vadd.f32 %v1769, %v1844
    %v1870 = vadd.f32 %v1770, %v1845
    %v1871 = vadd.f32 %v1771, %v1846
    %v1872 = vadd.f32 %v1772, %v1847
    %v1873 = vadd.f32 %v1773, %v1848
    %v1874 = vadd.f32 %v1774, %v1849
    %v1875 = vadd.f32 %v1775, %v1850
    %v1876 = vadd.f32 %v1776, %v1851
    %v1877 = vadd.f32 %v1777, %v1852
    %v1878 = vadd.f32 %v1778, %v1853
    %v1879 = vadd.f32 %v1779, %v1854
    %v1880 = vadd.f32 %v1780, %v1855
    %v1881 = vmax.f32 %v1856, 1e-15
    %v1882 = vmax.f32 %v1857, 1e-15
    %v1883 = vmax.f32 %v1858, 1e-15
    %v1884 = vmax.f32 %v1859, 1e-15
    %v1885 = vmax.f32 %v1860, 1e-15
    %v1886 = vmax.f32 %v1861, 1e-15
    %v1887 = vmax.f32 %v1862, 1e-15
    %v1888 = vmax.f32 %v1863, 1e-15
    %v1889 = vmax.f32 %v1864, 1e-15
    %v1890 = vmax.f32 %v1865, 1e-15
    %v1891 = vmax.f32 %v1866, 1e-15
    %v1892 = vmax.f32 %v1867, 1e-15
    %v1893 = vmax.f32 %v1868, 1e-15
    %v1894 = vmax.f32 %v1869, 1e-15
    %v1895 = vmax.f32 %v1870, 1e-15
    %v1896 = vmax.f32 %v1871, 1e-15
    %v1897 = vmax.f32 %v1872, 1e-15
    %v1898 = vmax.f32 %v1873, 1e-15
    %v1899 = vmax.f32 %v1874, 1e-15
    %v1900 = vmax.f32 %v1875, 1e-15
    %v1901 = vmax.f32 %v1876, 1e-15
    %v1902 = vmax.f32 %v1877, 1e-15
    %v1903 = vmax.f32 %v1878, 1e-15
    %v1904 = vmax.f32 %v1879, 1e-15
    %v1905 = vmax.f32 %v1880, 1e-15
    %v1906 = vrcp.pop %v1881
    %v1907 = vmul.f32 1.0, %v1906
    %v1908 = vrcp.pop %v1882
    %v1909 = vmul.f32 1.0, %v1908
    %v1910 = vrcp.pop %v1883
    %v1911 = vmul.f32 1.0, %v1910
    %v1912 = vrcp.pop %v1884
    %v1913 = vmul.f32 1.0, %v1912
    %v1914 = vrcp.pop %v1885
    %v1915 = vmul.f32 1.0, %v1914
    %v1916 = vrcp.pop %v1886
    %v1917 = vmul.f32 1.0, %v1916
    %v1918 = vrcp.pop %v1887
    %v1919 = vmul.f32 1.0, %v1918
    %v1920 = vrcp.pop %v1888
    %v1921 = vmul.f32 1.0, %v1920
    %v1922 = vrcp.pop %v1889
    %v1923 = vmul.f32 1.0, %v1922
    %v1924 = vrcp.pop %v1890
    %v1925 = vmul.f32 1.0, %v1924
    %v1926 = vrcp.pop %v1891
    %v1927 = vmul.f32 1.0, %v1926
    %v1928 = vrcp.pop %v1892
    %v1929 = vmul.f32 1.0, %v1928
    %v1930 = vrcp.pop %v1893
    %v1931 = vmul.f32 1.0, %v1930
    %v1932 = vrcp.pop %v1894
    %v1933 = vmul.f32 1.0, %v1932
    %v1934 = vrcp.pop %v1895
    %v1935 = vmul.f32 1.0, %v1934
    %v1936 = vrcp.pop %v1896
    %v1937 = vmul.f32 1.0, %v1936
    %v1938 = vrcp.pop %v1897
    %v1939 = vmul.f32 1.0, %v1938
    %v1940 = vrcp.pop %v1898
    %v1941 = vmul.f32 1.0, %v1940
    %v1942 = vrcp.pop %v1899
    %v1943 = vmul.f32 1.0, %v1942
    %v1944 = vrcp.pop %v1900
    %v1945 = vmul.f32 1.0, %v1944
    %v1946 = vrcp.pop %v1901
    %v1947 = vmul.f32 1.0, %v1946
    %v1948 = vrcp.pop %v1902
    %v1949 = vmul.f32 1.0, %v1948
    %v1950 = vrcp.pop %v1903
    %v1951 = vmul.f32 1.0, %v1950
    %v1952 = vrcp.pop %v1904
    %v1953 = vmul.f32 1.0, %v1952
    %v1954 = vrcp.pop %v1905
    %v1955 = vmul.f32 1.0, %v1954
    %v1956 = vmul.f32 %v1781, %v1781
    %v1957 = vmul.f32 %v1782, %v1782
    %v1958 = vmul.f32 %v1783, %v1783
    %v1959 = vmul.f32 %v1784, %v1784
    %v1960 = vmul.f32 %v1785, %v1785
    %v1961 = vmul.f32 %v1786, %v1786
    %v1962 = vmul.f32 %v1787, %v1787
    %v1963 = vmul.f32 %v1788, %v1788
    %v1964 = vmul.f32 %v1789, %v1789
    %v1965 = vmul.f32 %v1790, %v1790
    %v1966 = vmul.f32 %v1791, %v1791
    %v1967 = vmul.f32 %v1792, %v1792
    %v1968 = vmul.f32 %v1793, %v1793
    %v1969 = vmul.f32 %v1794, %v1794
    %v1970 = vmul.f32 %v1795, %v1795
    %v1971 = vmul.f32 %v1796, %v1796
    %v1972 = vmul.f32 %v1797, %v1797
    %v1973 = vmul.f32 %v1798, %v1798
    %v1974 = vmul.f32 %v1799, %v1799
    %v1975 = vmul.f32 %v1800, %v1800
    %v1976 = vmul.f32 %v1801, %v1801
    %v1977 = vmul.f32 %v1802, %v1802
    %v1978 = vmul.f32 %v1803, %v1803
    %v1979 = vmul.f32 %v1804, %v1804
    %v1980 = vmul.f32 %v1805, %v1805
    %v1981 = vmul.f32 %v1956, %v1681
    %v1982 = vmul.f32 %v1957, %v1682
    %v1983 = vmul.f32 %v1958, %v1683
    %v1984 = vmul.f32 %v1959, %v1684
    %v1985 = vmul.f32 %v1960, %v1685
    %v1986 = vmul.f32 %v1961, %v1686
    %v1987 = vmul.f32 %v1962, %v1687
    %v1988 = vmul.f32 %v1963, %v1688
    %v1989 = vmul.f32 %v1964, %v1689
    %v1990 = vmul.f32 %v1965, %v1690
    %v1991 = vmul.f32 %v1966, %v1691
    %v1992 = vmul.f32 %v1967, %v1692
    %v1993 = vmul.f32 %v1968, %v1693
    %v1994 = vmul.f32 %v1969, %v1694
    %v1995 = vmul.f32 %v1970, %v1695
    %v1996 = vmul.f32 %v1971, %v1696
    %v1997 = vmul.f32 %v1972, %v1697
    %v1998 = vmul.f32 %v1973, %v1698
    %v1999 = vmul.f32 %v1974, %v1699
    %v2000 = vmul.f32 %v1975, %v1700
    %v2001 = vmul.f32 %v1976, %v1701
    %v2002 = vmul.f32 %v1977, %v1702
    %v2003 = vmul.f32 %v1978, %v1703
    %v2004 = vmul.f32 %v1979, %v1704
    %v2005 = vmul.f32 %v1980, %v1705
    %v2006 = vmul.f32 %v1781, %v1806
    %v2007 = vmul.f32 %v1782, %v1807
    %v2008 = vmul.f32 %v1783, %v1808
    %v2009 = vmul.f32 %v1784, %v1809
    %v2010 = vmul.f32 %v1785, %v1810
    %v2011 = vmul.f32 %v1786, %v1811
    %v2012 = vmul.f32 %v1787, %v1812
    %v2013 = vmul.f32 %v1788, %v1813
    %v2014 = vmul.f32 %v1789, %v1814
    %v2015 = vmul.f32 %v1790, %v1815
    %v2016 = vmul.f32 %v1791, %v1816
    %v2017 = vmul.f32 %v1792, %v1817
    %v2018 = vmul.f32 %v1793, %v1818
    %v2019 = vmul.f32 %v1794, %v1819
    %v2020 = vmul.f32 %v1795, %v1820
    %v2021 = vmul.f32 %v1796, %v1821
    %v2022 = vmul.f32 %v1797, %v1822
    %v2023 = vmul.f32 %v1798, %v1823
    %v2024 = vmul.f32 %v1799, %v1824
    %v2025 = vmul.f32 %v1800, %v1825
    %v2026 = vmul.f32 %v1801, %v1826
    %v2027 = vmul.f32 %v1802, %v1827
    %v2028 = vmul.f32 %v1803, %v1828
    %v2029 = vmul.f32 %v1804, %v1829
    %v2030 = vmul.f32 %v1805, %v1830
    %v2031 = vmul.f32 %v2006, 2.0
    %v2032 = vmul.f32 %v2007, 2.0
    %v2033 = vmul.f32 %v2008, 2.0
    %v2034 = vmul.f32 %v2009, 2.0
    %v2035 = vmul.f32 %v2010, 2.0
    %v2036 = vmul.f32 %v2011, 2.0
    %v2037 = vmul.f32 %v2012, 2.0
    %v2038 = vmul.f32 %v2013, 2.0
    %v2039 = vmul.f32 %v2014, 2.0
    %v2040 = vmul.f32 %v2015, 2.0
    %v2041 = vmul.f32 %v2016, 2.0
    %v2042 = vmul.f32 %v2017, 2.0
    %v2043 = vmul.f32 %v2018, 2.0
    %v2044 = vmul.f32 %v2019, 2.0
    %v2045 = vmul.f32 %v2020, 2.0
    %v2046 = vmul.f32 %v2021, 2.0
    %v2047 = vmul.f32 %v2022, 2.0
    %v2048 = vmul.f32 %v2023, 2.0
    %v2049 = vmul.f32 %v2024, 2.0
    %v2050 = vmul.f32 %v2025, 2.0
    %v2051 = vmul.f32 %v2026, 2.0
    %v2052 = vmul.f32 %v2027, 2.0
    %v2053 = vmul.f32 %v2028, 2.0
    %v2054 = vmul.f32 %v2029, 2.0
    %v2055 = vmul.f32 %v2030, 2.0
    %v2056 = vmul.f32 %v2031, %v1706
    %v2057 = vmul.f32 %v2032, %v1707
    %v2058 = vmul.f32 %v2033, %v1708
    %v2059 = vmul.f32 %v2034, %v1709
    %v2060 = vmul.f32 %v2035, %v1710
    %v2061 = vmul.f32 %v2036, %v1711
    %v2062 = vmul.f32 %v2037, %v1712
    %v2063 = vmul.f32 %v2038, %v1713
    %v2064 = vmul.f32 %v2039, %v1714
    %v2065 = vmul.f32 %v2040, %v1715
    %v2066 = vmul.f32 %v2041, %v1716
    %v2067 = vmul.f32 %v2042, %v1717
    %v2068 = vmul.f32 %v2043, %v1718
    %v2069 = vmul.f32 %v2044, %v1719
    %v2070 = vmul.f32 %v2045, %v1720
    %v2071 = vmul.f32 %v2046, %v1721
    %v2072 = vmul.f32 %v2047, %v1722
    %v2073 = vmul.f32 %v2048, %v1723
    %v2074 = vmul.f32 %v2049, %v1724
    %v2075 = vmul.f32 %v2050, %v1725
    %v2076 = vmul.f32 %v2051, %v1726
    %v2077 = vmul.f32 %v2052, %v1727
    %v2078 = vmul.f32 %v2053, %v1728
    %v2079 = vmul.f32 %v2054, %v1729
    %v2080 = vmul.f32 %v2055, %v1730
    %v2081 = vadd.f32 %v1981, %v2056
    %v2082 = vadd.f32 %v1982, %v2057
    %v2083 = vadd.f32 %v1983, %v2058
    %v2084 = vadd.f32 %v1984, %v2059
    %v2085 = vadd.f32 %v1985, %v2060
    %v2086 = vadd.f32 %v1986, %v2061
    %v2087 = vadd.f32 %v1987, %v2062
    %v2088 = vadd.f32 %v1988, %v2063
    %v2089 = vadd.f32 %v1989, %v2064
    %v2090 = vadd.f32 %v1990, %v2065
    %v2091 = vadd.f32 %v1991, %v2066
    %v2092 = vadd.f32 %v1992, %v2067
    %v2093 = vadd.f32 %v1993, %v2068
    %v2094 = vadd.f32 %v1994, %v2069
    %v2095 = vadd.f32 %v1995, %v2070
    %v2096 = vadd.f32 %v1996, %v2071
    %v2097 = vadd.f32 %v1997, %v2072
    %v2098 = vadd.f32 %v1998, %v2073
    %v2099 = vadd.f32 %v1999, %v2074
    %v2100 = vadd.f32 %v2000, %v2075
    %v2101 = vadd.f32 %v2001, %v2076
    %v2102 = vadd.f32 %v2002, %v2077
    %v2103 = vadd.f32 %v2003, %v2078
    %v2104 = vadd.f32 %v2004, %v2079
    %v2105 = vadd.f32 %v2005, %v2080
    %v2106 = vmul.f32 %v1806, %v1806
    %v2107 = vmul.f32 %v1807, %v1807
    %v2108 = vmul.f32 %v1808, %v1808
    %v2109 = vmul.f32 %v1809, %v1809
    %v2110 = vmul.f32 %v1810, %v1810
    %v2111 = vmul.f32 %v1811, %v1811
    %v2112 = vmul.f32 %v1812, %v1812
    %v2113 = vmul.f32 %v1813, %v1813
    %v2114 = vmul.f32 %v1814, %v1814
    %v2115 = vmul.f32 %v1815, %v1815
    %v2116 = vmul.f32 %v1816, %v1816
    %v2117 = vmul.f32 %v1817, %v1817
    %v2118 = vmul.f32 %v1818, %v1818
    %v2119 = vmul.f32 %v1819, %v1819
    %v2120 = vmul.f32 %v1820, %v1820
    %v2121 = vmul.f32 %v1821, %v1821
    %v2122 = vmul.f32 %v1822, %v1822
    %v2123 = vmul.f32 %v1823, %v1823
    %v2124 = vmul.f32 %v1824, %v1824
    %v2125 = vmul.f32 %v1825, %v1825
    %v2126 = vmul.f32 %v1826, %v1826
    %v2127 = vmul.f32 %v1827, %v1827
    %v2128 = vmul.f32 %v1828, %v1828
    %v2129 = vmul.f32 %v1829, %v1829
    %v2130 = vmul.f32 %v1830, %v1830
    %v2131 = vmul.f32 %v2106, 0.00752747
    %v2132 = vmul.f32 %v2107, 0.00752747
    %v2133 = vmul.f32 %v2108, 0.00752747
    %v2134 = vmul.f32 %v2109, 0.00752747
    %v2135 = vmul.f32 %v2110, 0.00752747
    %v2136 = vmul.f32 %v2111, 0.00752747
    %v2137 = vmul.f32 %v2112, 0.00752747
    %v2138 = vmul.f32 %v2113, 0.00752747
    %v2139 = vmul.f32 %v2114, 0.00752747
    %v2140 = vmul.f32 %v2115, 0.00752747
    %v2141 = vmul.f32 %v2116, 0.00752747
    %v2142 = vmul.f32 %v2117, 0.00752747
    %v2143 = vmul.f32 %v2118, 0.00752747
    %v2144 = vmul.f32 %v2119, 0.00752747
    %v2145 = vmul.f32 %v2120, 0.00752747
    %v2146 = vmul.f32 %v2121, 0.00752747
    %v2147 = vmul.f32 %v2122, 0.00752747
    %v2148 = vmul.f32 %v2123, 0.00752747
    %v2149 = vmul.f32 %v2124, 0.00752747
    %v2150 = vmul.f32 %v2125, 0.00752747
    %v2151 = vmul.f32 %v2126, 0.00752747
    %v2152 = vmul.f32 %v2127, 0.00752747
    %v2153 = vmul.f32 %v2128, 0.00752747
    %v2154 = vmul.f32 %v2129, 0.00752747
    %v2155 = vmul.f32 %v2130, 0.00752747
    %v2156 = vadd.f32 %v2081, %v2131
    %v2157 = vadd.f32 %v2082, %v2132
    %v2158 = vadd.f32 %v2083, %v2133
    %v2159 = vadd.f32 %v2084, %v2134
    %v2160 = vadd.f32 %v2085, %v2135
    %v2161 = vadd.f32 %v2086, %v2136
    %v2162 = vadd.f32 %v2087, %v2137
    %v2163 = vadd.f32 %v2088, %v2138
    %v2164 = vadd.f32 %v2089, %v2139
    %v2165 = vadd.f32 %v2090, %v2140
    %v2166 = vadd.f32 %v2091, %v2141
    %v2167 = vadd.f32 %v2092, %v2142
    %v2168 = vadd.f32 %v2093, %v2143
    %v2169 = vadd.f32 %v2094, %v2144
    %v2170 = vadd.f32 %v2095, %v2145
    %v2171 = vadd.f32 %v2096, %v2146
    %v2172 = vadd.f32 %v2097, %v2147
    %v2173 = vadd.f32 %v2098, %v2148
    %v2174 = vadd.f32 %v2099, %v2149
    %v2175 = vadd.f32 %v2100, %v2150
    %v2176 = vadd.f32 %v2101, %v2151
    %v2177 = vadd.f32 %v2102, %v2152
    %v2178 = vadd.f32 %v2103, %v2153
    %v2179 = vadd.f32 %v2104, %v2154
    %v2180 = vadd.f32 %v2105, %v2155
    %v2181 = vmul.f32 %v1907, %v1907
    %v2182 = vmul.f32 %v1909, %v1909
    %v2183 = vmul.f32 %v1911, %v1911
    %v2184 = vmul.f32 %v1913, %v1913
    %v2185 = vmul.f32 %v1915, %v1915
    %v2186 = vmul.f32 %v1917, %v1917
    %v2187 = vmul.f32 %v1919, %v1919
    %v2188 = vmul.f32 %v1921, %v1921
    %v2189 = vmul.f32 %v1923, %v1923
    %v2190 = vmul.f32 %v1925, %v1925
    %v2191 = vmul.f32 %v1927, %v1927
    %v2192 = vmul.f32 %v1929, %v1929
    %v2193 = vmul.f32 %v1931, %v1931
    %v2194 = vmul.f32 %v1933, %v1933
    %v2195 = vmul.f32 %v1935, %v1935
    %v2196 = vmul.f32 %v1937, %v1937
    %v2197 = vmul.f32 %v1939, %v1939
    %v2198 = vmul.f32 %v1941, %v1941
    %v2199 = vmul.f32 %v1943, %v1943
    %v2200 = vmul.f32 %v1945, %v1945
    %v2201 = vmul.f32 %v1947, %v1947
    %v2202 = vmul.f32 %v1949, %v1949
    %v2203 = vmul.f32 %v1951, %v1951
    %v2204 = vmul.f32 %v1953, %v1953
    %v2205 = vmul.f32 %v1955, %v1955
    %v2206 = vmul.f32 %v2156, %v2181
    %v2207 = vmul.f32 %v2157, %v2182
    %v2208 = vmul.f32 %v2158, %v2183
    %v2209 = vmul.f32 %v2159, %v2184
    %v2210 = vmul.f32 %v2160, %v2185
    %v2211 = vmul.f32 %v2161, %v2186
    %v2212 = vmul.f32 %v2162, %v2187
    %v2213 = vmul.f32 %v2163, %v2188
    %v2214 = vmul.f32 %v2164, %v2189
    %v2215 = vmul.f32 %v2165, %v2190
    %v2216 = vmul.f32 %v2166, %v2191
    %v2217 = vmul.f32 %v2167, %v2192
    %v2218 = vmul.f32 %v2168, %v2193
    %v2219 = vmul.f32 %v2169, %v2194
    %v2220 = vmul.f32 %v2170, %v2195
    %v2221 = vmul.f32 %v2171, %v2196
    %v2222 = vmul.f32 %v2172, %v2197
    %v2223 = vmul.f32 %v2173, %v2198
    %v2224 = vmul.f32 %v2174, %v2199
    %v2225 = vmul.f32 %v2175, %v2200
    %v2226 = vmul.f32 %v2176, %v2201
    %v2227 = vmul.f32 %v2177, %v2202
    %v2228 = vmul.f32 %v2178, %v2203
    %v2229 = vmul.f32 %v2179, %v2204
    %v2230 = vmul.f32 %v2180, %v2205
    %v2231 = vmax.f32 %v2206, 1e-30
    %v2232 = vmax.f32 %v2207, 1e-30
    %v2233 = vmax.f32 %v2208, 1e-30
    %v2234 = vmax.f32 %v2209, 1e-30
    %v2235 = vmax.f32 %v2210, 1e-30
    %v2236 = vmax.f32 %v2211, 1e-30
    %v2237 = vmax.f32 %v2212, 1e-30
    %v2238 = vmax.f32 %v2213, 1e-30
    %v2239 = vmax.f32 %v2214, 1e-30
    %v2240 = vmax.f32 %v2215, 1e-30
    %v2241 = vmax.f32 %v2216, 1e-30
    %v2242 = vmax.f32 %v2217, 1e-30
    %v2243 = vmax.f32 %v2218, 1e-30
    %v2244 = vmax.f32 %v2219, 1e-30
    %v2245 = vmax.f32 %v2220, 1e-30
    %v2246 = vmax.f32 %v2221, 1e-30
    %v2247 = vmax.f32 %v2222, 1e-30
    %v2248 = vmax.f32 %v2223, 1e-30
    %v2249 = vmax.f32 %v2224, 1e-30
    %v2250 = vmax.f32 %v2225, 1e-30
    %v2251 = vmax.f32 %v2226, 1e-30
    %v2252 = vmax.f32 %v2227, 1e-30
    %v2253 = vmax.f32 %v2228, 1e-30
    %v2254 = vmax.f32 %v2229, 1e-30
    %v2255 = vmax.f32 %v2230, 1e-30
    %v2256 = vrsqrt.pop %v2231
    %v2257 = vrsqrt.pop %v2232
    %v2258 = vrsqrt.pop %v2233
    %v2259 = vrsqrt.pop %v2234
    %v2260 = vrsqrt.pop %v2235
    %v2261 = vrsqrt.pop %v2236
    %v2262 = vrsqrt.pop %v2237
    %v2263 = vrsqrt.pop %v2238
    %v2264 = vrsqrt.pop %v2239
    %v2265 = vrsqrt.pop %v2240
    %v2266 = vrsqrt.pop %v2241
    %v2267 = vrsqrt.pop %v2242
    %v2268 = vrsqrt.pop %v2243
    %v2269 = vrsqrt.pop %v2244
    %v2270 = vrsqrt.pop %v2245
    %v2271 = vrsqrt.pop %v2246
    %v2272 = vrsqrt.pop %v2247
    %v2273 = vrsqrt.pop %v2248
    %v2274 = vrsqrt.pop %v2249
    %v2275 = vrsqrt.pop %v2250
    %v2276 = vrsqrt.pop %v2251
    %v2277 = vrsqrt.pop %v2252
    %v2278 = vrsqrt.pop %v2253
    %v2279 = vrsqrt.pop %v2254
    %v2280 = vrsqrt.pop %v2255
    %v2281 = vmul.f32 %v2231, %v2256
    %v2282 = vmul.f32 %v2232, %v2257
    %v2283 = vmul.f32 %v2233, %v2258
    %v2284 = vmul.f32 %v2234, %v2259
    %v2285 = vmul.f32 %v2235, %v2260
    %v2286 = vmul.f32 %v2236, %v2261
    %v2287 = vmul.f32 %v2237, %v2262
    %v2288 = vmul.f32 %v2238, %v2263
    %v2289 = vmul.f32 %v2239, %v2264
    %v2290 = vmul.f32 %v2240, %v2265
    %v2291 = vmul.f32 %v2241, %v2266
    %v2292 = vmul.f32 %v2242, %v2267
    %v2293 = vmul.f32 %v2243, %v2268
    %v2294 = vmul.f32 %v2244, %v2269
    %v2295 = vmul.f32 %v2245, %v2270
    %v2296 = vmul.f32 %v2246, %v2271
    %v2297 = vmul.f32 %v2247, %v2272
    %v2298 = vmul.f32 %v2248, %v2273
    %v2299 = vmul.f32 %v2249, %v2274
    %v2300 = vmul.f32 %v2250, %v2275
    %v2301 = vmul.f32 %v2251, %v2276
    %v2302 = vmul.f32 %v2252, %v2277
    %v2303 = vmul.f32 %v2253, %v2278
    %v2304 = vmul.f32 %v2254, %v2279
    %v2305 = vmul.f32 %v2255, %v2280
    %vm2306 = vcmp.gt.f32.partialorder %v2281, 0.996
    %vm2307 = vcmp.gt.f32.partialorder %v2282, 0.996
    %vm2308 = vcmp.gt.f32.partialorder %v2283, 0.996
    %vm2309 = vcmp.gt.f32.partialorder %v2284, 0.996
    %vm2310 = vcmp.gt.f32.partialorder %v2285, 0.996
    %vm2311 = vcmp.gt.f32.partialorder %v2286, 0.996
    %vm2312 = vcmp.gt.f32.partialorder %v2287, 0.996
    %vm2313 = vcmp.gt.f32.partialorder %v2288, 0.996
    %vm2314 = vcmp.gt.f32.partialorder %v2289, 0.996
    %vm2315 = vcmp.gt.f32.partialorder %v2290, 0.996
    %vm2316 = vcmp.gt.f32.partialorder %v2291, 0.996
    %vm2317 = vcmp.gt.f32.partialorder %v2292, 0.996
    %vm2318 = vcmp.gt.f32.partialorder %v2293, 0.996
    %vm2319 = vcmp.gt.f32.partialorder %v2294, 0.996
    %vm2320 = vcmp.gt.f32.partialorder %v2295, 0.996
    %vm2321 = vcmp.gt.f32.partialorder %v2296, 0.996
    %vm2322 = vcmp.gt.f32.partialorder %v2297, 0.996
    %vm2323 = vcmp.gt.f32.partialorder %v2298, 0.996
    %vm2324 = vcmp.gt.f32.partialorder %v2299, 0.996
    %vm2325 = vcmp.gt.f32.partialorder %v2300, 0.996
    %vm2326 = vcmp.gt.f32.partialorder %v2301, 0.996
    %vm2327 = vcmp.gt.f32.partialorder %v2302, 0.996
    %vm2328 = vcmp.gt.f32.partialorder %v2303, 0.996
    %vm2329 = vcmp.gt.f32.partialorder %v2304, 0.996
    %vm2330 = vcmp.gt.f32.partialorder %v2305, 0.996
    %v2331 = vmul.f32 %v2256, 0.996
    %v2332 = vmul.f32 %v2257, 0.996
    %v2333 = vmul.f32 %v2258, 0.996
    %v2334 = vmul.f32 %v2259, 0.996
    %v2335 = vmul.f32 %v2260, 0.996
    %v2336 = vmul.f32 %v2261, 0.996
    %v2337 = vmul.f32 %v2262, 0.996
    %v2338 = vmul.f32 %v2263, 0.996
    %v2339 = vmul.f32 %v2264, 0.996
    %v2340 = vmul.f32 %v2265, 0.996
    %v2341 = vmul.f32 %v2266, 0.996
    %v2342 = vmul.f32 %v2267, 0.996
    %v2343 = vmul.f32 %v2268, 0.996
    %v2344 = vmul.f32 %v2269, 0.996
    %v2345 = vmul.f32 %v2270, 0.996
    %v2346 = vmul.f32 %v2271, 0.996
    %v2347 = vmul.f32 %v2272, 0.996
    %v2348 = vmul.f32 %v2273, 0.996
    %v2349 = vmul.f32 %v2274, 0.996
    %v2350 = vmul.f32 %v2275, 0.996
    %v2351 = vmul.f32 %v2276, 0.996
    %v2352 = vmul.f32 %v2277, 0.996
    %v2353 = vmul.f32 %v2278, 0.996
    %v2354 = vmul.f32 %v2279, 0.996
    %v2355 = vmul.f32 %v2280, 0.996
    %v2356 = vsel %vm2306, %v2331, 1.0
    %v2357 = vsel %vm2307, %v2332, 1.0
    %v2358 = vsel %vm2308, %v2333, 1.0
    %v2359 = vsel %vm2309, %v2334, 1.0
    %v2360 = vsel %vm2310, %v2335, 1.0
    %v2361 = vsel %vm2311, %v2336, 1.0
    %v2362 = vsel %vm2312, %v2337, 1.0
    %v2363 = vsel %vm2313, %v2338, 1.0
    %v2364 = vsel %vm2314, %v2339, 1.0
    %v2365 = vsel %vm2315, %v2340, 1.0
    %v2366 = vsel %vm2316, %v2341, 1.0
    %v2367 = vsel %vm2317, %v2342, 1.0
    %v2368 = vsel %vm2318, %v2343, 1.0
    %v2369 = vsel %vm2319, %v2344, 1.0
    %v2370 = vsel %vm2320, %v2345, 1.0
    %v2371 = vsel %vm2321, %v2346, 1.0
    %v2372 = vsel %vm2322, %v2347, 1.0
    %v2373 = vsel %vm2323, %v2348, 1.0
    %v2374 = vsel %vm2324, %v2349, 1.0
    %v2375 = vsel %vm2325, %v2350, 1.0
    %v2376 = vsel %vm2326, %v2351, 1.0
    %v2377 = vsel %vm2327, %v2352, 1.0
    %v2378 = vsel %vm2328, %v2353, 1.0
    %v2379 = vsel %vm2329, %v2354, 1.0
    %v2380 = vsel %vm2330, %v2355, 1.0
    %v2381 = vmul.f32 %v1631, %v1781
    %v2382 = vmul.f32 %v1632, %v1782
    %v2383 = vmul.f32 %v1633, %v1783
    %v2384 = vmul.f32 %v1634, %v1784
    %v2385 = vmul.f32 %v1635, %v1785
    %v2386 = vmul.f32 %v1636, %v1786
    %v2387 = vmul.f32 %v1637, %v1787
    %v2388 = vmul.f32 %v1638, %v1788
    %v2389 = vmul.f32 %v1639, %v1789
    %v2390 = vmul.f32 %v1640, %v1790
    %v2391 = vmul.f32 %v1641, %v1791
    %v2392 = vmul.f32 %v1642, %v1792
    %v2393 = vmul.f32 %v1643, %v1793
    %v2394 = vmul.f32 %v1644, %v1794
    %v2395 = vmul.f32 %v1645, %v1795
    %v2396 = vmul.f32 %v1646, %v1796
    %v2397 = vmul.f32 %v1647, %v1797
    %v2398 = vmul.f32 %v1648, %v1798
    %v2399 = vmul.f32 %v1649, %v1799
    %v2400 = vmul.f32 %v1650, %v1800
    %v2401 = vmul.f32 %v1651, %v1801
    %v2402 = vmul.f32 %v1652, %v1802
    %v2403 = vmul.f32 %v1653, %v1803
    %v2404 = vmul.f32 %v1654, %v1804
    %v2405 = vmul.f32 %v1655, %v1805
    %v2406 = vmul.f32 %v1907, %v2356
    %v2407 = vmul.f32 %v1909, %v2357
    %v2408 = vmul.f32 %v1911, %v2358
    %v2409 = vmul.f32 %v1913, %v2359
    %v2410 = vmul.f32 %v1915, %v2360
    %v2411 = vmul.f32 %v1917, %v2361
    %v2412 = vmul.f32 %v1919, %v2362
    %v2413 = vmul.f32 %v1921, %v2363
    %v2414 = vmul.f32 %v1923, %v2364
    %v2415 = vmul.f32 %v1925, %v2365
    %v2416 = vmul.f32 %v1927, %v2366
    %v2417 = vmul.f32 %v1929, %v2367
    %v2418 = vmul.f32 %v1931, %v2368
    %v2419 = vmul.f32 %v1933, %v2369
    %v2420 = vmul.f32 %v1935, %v2370
    %v2421 = vmul.f32 %v1937, %v2371
    %v2422 = vmul.f32 %v1939, %v2372
    %v2423 = vmul.f32 %v1941, %v2373
    %v2424 = vmul.f32 %v1943, %v2374
    %v2425 = vmul.f32 %v1945, %v2375
    %v2426 = vmul.f32 %v1947, %v2376
    %v2427 = vmul.f32 %v1949, %v2377
    %v2428 = vmul.f32 %v1951, %v2378
    %v2429 = vmul.f32 %v1953, %v2379
    %v2430 = vmul.f32 %v1955, %v2380
    %v2431 = vmul.f32 %v2381, %v2406
    %v2432 = vmul.f32 %v2382, %v2407
    %v2433 = vmul.f32 %v2383, %v2408
    %v2434 = vmul.f32 %v2384, %v2409
    %v2435 = vmul.f32 %v2385, %v2410
    %v2436 = vmul.f32 %v2386, %v2411
    %v2437 = vmul.f32 %v2387, %v2412
    %v2438 = vmul.f32 %v2388, %v2413
    %v2439 = vmul.f32 %v2389, %v2414
    %v2440 = vmul.f32 %v2390, %v2415
    %v2441 = vmul.f32 %v2391, %v2416
    %v2442 = vmul.f32 %v2392, %v2417
    %v2443 = vmul.f32 %v2393, %v2418
    %v2444 = vmul.f32 %v2394, %v2419
    %v2445 = vmul.f32 %v2395, %v2420
    %v2446 = vmul.f32 %v2396, %v2421
    %v2447 = vmul.f32 %v2397, %v2422
    %v2448 = vmul.f32 %v2398, %v2423
    %v2449 = vmul.f32 %v2399, %v2424
    %v2450 = vmul.f32 %v2400, %v2425
    %v2451 = vmul.f32 %v2401, %v2426
    %v2452 = vmul.f32 %v2402, %v2427
    %v2453 = vmul.f32 %v2403, %v2428
    %v2454 = vmul.f32 %v2404, %v2429
    %v2455 = vmul.f32 %v2405, %v2430
    %v2456 = vmul.f32 %v1806, %v2406
    %v2457 = vmul.f32 %v1807, %v2407
    %v2458 = vmul.f32 %v1808, %v2408
    %v2459 = vmul.f32 %v1809, %v2409
    %v2460 = vmul.f32 %v1810, %v2410
    %v2461 = vmul.f32 %v1811, %v2411
    %v2462 = vmul.f32 %v1812, %v2412
    %v2463 = vmul.f32 %v1813, %v2413
    %v2464 = vmul.f32 %v1814, %v2414
    %v2465 = vmul.f32 %v1815, %v2415
    %v2466 = vmul.f32 %v1816, %v2416
    %v2467 = vmul.f32 %v1817, %v2417
    %v2468 = vmul.f32 %v1818, %v2418
    %v2469 = vmul.f32 %v1819, %v2419
    %v2470 = vmul.f32 %v1820, %v2420
    %v2471 = vmul.f32 %v1821, %v2421
    %v2472 = vmul.f32 %v1822, %v2422
    %v2473 = vmul.f32 %v1823, %v2423
    %v2474 = vmul.f32 %v1824, %v2424
    %v2475 = vmul.f32 %v1825, %v2425
    %v2476 = vmul.f32 %v1826, %v2426
    %v2477 = vmul.f32 %v1827, %v2427
    %v2478 = vmul.f32 %v1828, %v2428
    %v2479 = vmul.f32 %v1829, %v2429
    %v2480 = vmul.f32 %v1830, %v2430
    %v2481 = vmul.f32 %v151, %v2431
    %v2482 = vmul.f32 %v156, %v2432
    %v2483 = vmul.f32 %v161, %v2433
    %v2484 = vmul.f32 %v166, %v2434
    %v2485 = vmul.f32 %v171, %v2435
    %v2486 = vmul.f32 %v176, %v2436
    %v2487 = vmul.f32 %v181, %v2437
    %v2488 = vmul.f32 %v186, %v2438
    %v2489 = vmul.f32 %v191, %v2439
    %v2490 = vmul.f32 %v196, %v2440
    %v2491 = vmul.f32 %v201, %v2441
    %v2492 = vmul.f32 %v206, %v2442
    %v2493 = vmul.f32 %v211, %v2443
    %v2494 = vmul.f32 %v216, %v2444
    %v2495 = vmul.f32 %v221, %v2445
    %v2496 = vmul.f32 %v226, %v2446
    %v2497 = vmul.f32 %v231, %v2447
    %v2498 = vmul.f32 %v236, %v2448
    %v2499 = vmul.f32 %v241, %v2449
    %v2500 = vmul.f32 %v246, %v2450
    %v2501 = vmul.f32 %v251, %v2451
    %v2502 = vmul.f32 %v256, %v2452
    %v2503 = vmul.f32 %v261, %v2453
    %v2504 = vmul.f32 %v266, %v2454
    %v2505 = vmul.f32 %v271, %v2455
    %v2506 = vmul.f32 %v429, %v2456
    %v2507 = vmul.f32 %v429, %v2457
    %v2508 = vmul.f32 %v429, %v2458
    %v2509 = vmul.f32 %v429, %v2459
    %v2510 = vmul.f32 %v429, %v2460
    %v2511 = vmul.f32 %v429, %v2461
    %v2512 = vmul.f32 %v429, %v2462
    %v2513 = vmul.f32 %v429, %v2463
    %v2514 = vmul.f32 %v429, %v2464
    %v2515 = vmul.f32 %v429, %v2465
    %v2516 = vmul.f32 %v429, %v2466
    %v2517 = vmul.f32 %v429, %v2467
    %v2518 = vmul.f32 %v429, %v2468
    %v2519 = vmul.f32 %v429, %v2469
    %v2520 = vmul.f32 %v429, %v2470
    %v2521 = vmul.f32 %v429, %v2471
    %v2522 = vmul.f32 %v429, %v2472
    %v2523 = vmul.f32 %v429, %v2473
    %v2524 = vmul.f32 %v429, %v2474
    %v2525 = vmul.f32 %v429, %v2475
    %v2526 = vmul.f32 %v429, %v2476
    %v2527 = vmul.f32 %v429, %v2477
    %v2528 = vmul.f32 %v429, %v2478
    %v2529 = vmul.f32 %v429, %v2479
    %v2530 = vmul.f32 %v429, %v2480
    %v2531 = vadd.f32 %v2481, %v2506
    %v2532 = vadd.f32 %v2482, %v2507
    %v2533 = vadd.f32 %v2483, %v2508
    %v2534 = vadd.f32 %v2484, %v2509
    %v2535 = vadd.f32 %v2485, %v2510
    %v2536 = vadd.f32 %v2486, %v2511
    %v2537 = vadd.f32 %v2487, %v2512
    %v2538 = vadd.f32 %v2488, %v2513
    %v2539 = vadd.f32 %v2489, %v2514
    %v2540 = vadd.f32 %v2490, %v2515
    %v2541 = vadd.f32 %v2491, %v2516
    %v2542 = vadd.f32 %v2492, %v2517
    %v2543 = vadd.f32 %v2493, %v2518
    %v2544 = vadd.f32 %v2494, %v2519
    %v2545 = vadd.f32 %v2495, %v2520
    %v2546 = vadd.f32 %v2496, %v2521
    %v2547 = vadd.f32 %v2497, %v2522
    %v2548 = vadd.f32 %v2498, %v2523
    %v2549 = vadd.f32 %v2499, %v2524
    %v2550 = vadd.f32 %v2500, %v2525
    %v2551 = vadd.f32 %v2501, %v2526
    %v2552 = vadd.f32 %v2502, %v2527
    %v2553 = vadd.f32 %v2503, %v2528
    %v2554 = vadd.f32 %v2504, %v2529
    %v2555 = vadd.f32 %v2505, %v2530
    %2556 = vst [vmem:[#allocation7] sm:$0xff] %v2531
    %2557 = vst [vmem:[#allocation7 + $0x8] sm:$0xff] %v2532
    %2558 = vst [vmem:[#allocation7 + $0x10] sm:$0xff] %v2533
    %2559 = vst [vmem:[#allocation7 + $0x18] sm:$0xff] %v2534
    %2560 = vst [vmem:[#allocation7 + $0x20] sm:$0xff] %v2535
    %2561 = vst [vmem:[#allocation7 + $0x28] sm:$0xff] %v2536
    %2562 = vst [vmem:[#allocation7 + $0x30] sm:$0xff] %v2537
    %2563 = vst [vmem:[#allocation7 + $0x38] sm:$0xff] %v2538
    %2564 = vst [vmem:[#allocation7 + $0x40] sm:$0xff] %v2539
    %2565 = vst [vmem:[#allocation7 + $0x48] sm:$0xff] %v2540
    %2566 = vst [vmem:[#allocation7 + $0x50] sm:$0xff] %v2541
    %2567 = vst [vmem:[#allocation7 + $0x58] sm:$0xff] %v2542
    %2568 = vst [vmem:[#allocation7 + $0x60] sm:$0xff] %v2543
    %2569 = vst [vmem:[#allocation7 + $0x68] sm:$0xff] %v2544
    %2570 = vst [vmem:[#allocation7 + $0x70] sm:$0xff] %v2545
    %2571 = vst [vmem:[#allocation7 + $0x78] sm:$0xff] %v2546
    %2572 = vst [vmem:[#allocation7 + $0x80] sm:$0xff] %v2547
    %2573 = vst [vmem:[#allocation7 + $0x88] sm:$0xff] %v2548
    %2574 = vst [vmem:[#allocation7 + $0x90] sm:$0xff] %v2549
    %2575 = vst [vmem:[#allocation7 + $0x98] sm:$0xff] %v2550
    %2576 = vst [vmem:[#allocation7 + $0xa0] sm:$0xff] %v2551
    %2577 = vst [vmem:[#allocation7 + $0xa8] sm:$0xff] %v2552
    %2578 = vst [vmem:[#allocation7 + $0xb0] sm:$0xff] %v2553
    %2579 = vst [vmem:[#allocation7 + $0xb8] sm:$0xff] %v2554
    %2580 = vst [vmem:[#allocation7 + $0xc0] sm:$0xff] %v2555
    // Predicated region
    $region22: #{tpu_custom_call.1} parent=1 // pred_check
      _
    $region23: #{tpu_custom_call.1} parent=1 // pred_check_branch
      %2582 = sbr.rel (0) target = $region25
    $region24: #{tpu_custom_call.1} parent=1 // pred_region
      %s2584 = ssub.s32 3200, 3200
      %2585 = vsyncadd [#allocation4], %s2584
      %s2586 = sshll.u32 [#allocation7], 4
      %s2587 = int_to_ptr.vmem [resolvable:$true] %s2586
      %2592 = dma.vmem_to_hbm [thread:$0]  %s2587, 3200, %s3, [#allocation4], 128, 128, 8
    $region25: #{tpu_custom_call.1} parent=1 // pred_fallthru
      _
    // Predicated region
    $region26: #{tpu_custom_call.1} parent=1 // pred_check
      _
    $region27: #{tpu_custom_call.1} parent=1 // pred_check_branch
      %2594 = sbr.rel (0) target = $region29
    $region28: #{tpu_custom_call.1} parent=1 // pred_region
      %2595 = dma.done [#allocation4], 3200
    $region29: #{tpu_custom_call.1} parent=1 // pred_fallthru
      _
    %2596 = vsyncpa [#allocation3], 1
    %2597 = vsyncpa [#allocation6], 1
    %2598 = vsyncpa [#allocation4], 1

// kernel: tpu_custom_call.1
$region0: #{tpu_custom_call.1}
  #allocation0 [shape = 'u32[]', space=smem, size = 0x4, offset = 0x4, fixed_abs, tag = 'smem constant byte address 0x4 - core index']
  #allocation1 [shape = 'u32[144,128]{1,0:T(1,128)}', space=vmem, size = 0x12000, scoped, tag = 'internal scratch']
  %s0 = inlined_call_operand.hbm [shape: f32[200,128], index: 0, kind: input, shape index: {}]
  %s1 = inlined_call_operand.hbm [shape: f32[128,128], index: 1, kind: input, shape index: {}]
  %s2 = inlined_call_operand.vmem [shape: f32[1,128], index: 2, kind: input, shape index: {}]
  %s3 = inlined_call_operand.hbm [shape: f32[200,128], index: 3, kind: output, shape index: {}]
  %s4 = sld [smem:[#allocation0]]
  $region30: #{tpu_custom_call.1} parent=0
    _
  %s6 = ssub.s32 1, %s4
  %s7 = scalar_select 0, %s6, %s4
  $region1: #{tpu_custom_call.1} parent=0
    #allocation2 [shape = 'u8[102400]{0}', space=vmem, size = 0x19000, scoped, tag = 'input window, operand 0, single buffered']
    #allocation3 [shape = 's32[1]{0}', space=sflag, size = 0x4, scoped, tag = 'scoped memory for tpu_custom_call.1']
    #allocation4 [shape = 's32[1]{0}', space=sflag, size = 0x4, scoped, tag = 'scoped memory for tpu_custom_call.1']
    #allocation5 [shape = 'u8[65536]{0}', space=vmem, size = 0x10000, scoped, tag = 'input window, operand 1, single buffered']
    #allocation6 [shape = 's32[1]{0}', space=sflag, size = 0x4, scoped, tag = 'scoped memory for tpu_custom_call.1']
    #allocation7 [shape = 'u8[102400]{0}', space=vmem, size = 0x19000, scoped, tag = 'output window, operand 0, single buffered']
    %8 = vsyncpa [#allocation3], 0
    %9 = vsyncpa [#allocation6], 0
    %10 = vsyncpa [#allocation4], 0
    // Predicated region
    $region2: #{tpu_custom_call.1} parent=1 // pred_check
      _
    $region3: #{tpu_custom_call.1} parent=1 // pred_check_branch
      %12 = sbr.rel (0) target = $region5
    $region4: #{tpu_custom_call.1} parent=1 // pred_region
      %s14 = ssub.s32 3200, 3200
      %15 = vsyncadd [#allocation3], %s14
      %s16 = sshll.u32 [#allocation2], 4
      %s17 = int_to_ptr.vmem [resolvable:$true] %s16
      %22 = dma.hbm_to_vmem [thread:$0]  %s0, 3200, %s17, [#allocation3], 128, 128, 8
    $region5: #{tpu_custom_call.1} parent=1 // pred_fallthru
      _
    // Predicated region
    $region6: #{tpu_custom_call.1} parent=1 // pred_check
      _
    $region7: #{tpu_custom_call.1} parent=1 // pred_check_branch
      %24 = sbr.rel (0) target = $region9
    $region8: #{tpu_custom_call.1} parent=1 // pred_region
      %s26 = ssub.s32 2048, 2048
      %27 = vsyncadd [#allocation6], %s26
      %s28 = sshll.u32 [#allocation5], 4
      %s29 = int_to_ptr.vmem [resolvable:$true] %s28
      %34 = dma.hbm_to_vmem [thread:$0]  %s1, 2048, %s29, [#allocation6], 128, 128, 8
    $region9: #{tpu_custom_call.1} parent=1 // pred_fallthru
      _
    // Predicated region
    $region10: #{tpu_custom_call.1} parent=1 // pred_check
      _
    $region11: #{tpu_custom_call.1} parent=1 // pred_check_branch
      %36 = sbr.rel (0) target = $region13
    $region12: #{tpu_custom_call.1} parent=1 // pred_region
      _
    $region13: #{tpu_custom_call.1} parent=1 // pred_fallthru
      _
    // Predicated region
    $region14: #{tpu_custom_call.1} parent=1 // pred_check
      _
    $region15: #{tpu_custom_call.1} parent=1 // pred_check_branch
      %38 = sbr.rel (0) target = $region17
    $region16: #{tpu_custom_call.1} parent=1 // pred_region
      %39 = dma.done [#allocation3], 3200
    $region17: #{tpu_custom_call.1} parent=1 // pred_fallthru
      _
    // Predicated region
    $region18: #{tpu_custom_call.1} parent=1 // pred_check
      _
    $region19: #{tpu_custom_call.1} parent=1 // pred_check_branch
      %41 = sbr.rel (0) target = $region21
    $region20: #{tpu_custom_call.1} parent=1 // pred_region
      %42 = dma.done [#allocation6], 2048
    $region21: #{tpu_custom_call.1} parent=1 // pred_fallthru
      _
    %v43 = vld [vmem:[#allocation2] sm:$0xff]
    %v44 = vld [vmem:[#allocation2 + $0x8] sm:$0xff]
    %v45 = vld [vmem:[#allocation2 + $0x10] sm:$0xff]
    %v46 = vld [vmem:[#allocation2 + $0x18] sm:$0xff]
    %v47 = vld [vmem:[#allocation2 + $0x20] sm:$0xff]
    %v48 = vld [vmem:[#allocation2 + $0x28] sm:$0xff]
    %v49 = vld [vmem:[#allocation2 + $0x30] sm:$0xff]
    %v50 = vld [vmem:[#allocation2 + $0x38] sm:$0xff]
    %v51 = vld [vmem:[#allocation2 + $0x40] sm:$0xff]
    %v52 = vld [vmem:[#allocation2 + $0x48] sm:$0xff]
    %v53 = vld [vmem:[#allocation2 + $0x50] sm:$0xff]
    %v54 = vld [vmem:[#allocation2 + $0x58] sm:$0xff]
    %v55 = vld [vmem:[#allocation2 + $0x60] sm:$0xff]
    %v56 = vld [vmem:[#allocation2 + $0x68] sm:$0xff]
    %v57 = vld [vmem:[#allocation2 + $0x70] sm:$0xff]
    %v58 = vld [vmem:[#allocation2 + $0x78] sm:$0xff]
    %v59 = vld [vmem:[#allocation2 + $0x80] sm:$0xff]
    %v60 = vld [vmem:[#allocation2 + $0x88] sm:$0xff]
    %v61 = vld [vmem:[#allocation2 + $0x90] sm:$0xff]
    %v62 = vld [vmem:[#allocation2 + $0x98] sm:$0xff]
    %v63 = vld [vmem:[#allocation2 + $0xa0] sm:$0xff]
    %v64 = vld [vmem:[#allocation2 + $0xa8] sm:$0xff]
    %v65 = vld [vmem:[#allocation2 + $0xb0] sm:$0xff]
    %v66 = vld [vmem:[#allocation2 + $0xb8] sm:$0xff]
    %v67 = vld [vmem:[#allocation2 + $0xc0] sm:$0xff]
    %v68 = vld [vmem:[#allocation5] sm:$0xff]
    %v69 = vld [vmem:[#allocation5 + $0x8] sm:$0xff]
    %v70 = vld [vmem:[#allocation5 + $0x10] sm:$0xff]
    %v71 = vld [vmem:[#allocation5 + $0x18] sm:$0xff]
    %v72 = vld [vmem:[#allocation5 + $0x20] sm:$0xff]
    %v73 = vld [vmem:[#allocation5 + $0x28] sm:$0xff]
    %v74 = vld [vmem:[#allocation5 + $0x30] sm:$0xff]
    %v75 = vld [vmem:[#allocation5 + $0x38] sm:$0xff]
    %v76 = vld [vmem:[#allocation5 + $0x40] sm:$0xff]
    %v77 = vld [vmem:[#allocation5 + $0x48] sm:$0xff]
    %v78 = vld [vmem:[#allocation5 + $0x50] sm:$0xff]
    %v79 = vld [vmem:[#allocation5 + $0x58] sm:$0xff]
    %v80 = vld [vmem:[#allocation5 + $0x60] sm:$0xff]
    %v81 = vld [vmem:[#allocation5 + $0x68] sm:$0xff]
    %v82 = vld [vmem:[#allocation5 + $0x70] sm:$0xff]
    %v83 = vld [vmem:[#allocation5 + $0x78] sm:$0xff]
    %84 = vmatprep.subr.mxu0 0.0
    %85 = vmatpush1.msra.mxu0 %v83
    %86 = vmatprep.subr.mxu0 0.0
    %87 = vmatpush1.msra.mxu0 %v82
    %88 = vmatprep.subr.mxu0 0.0
    %89 = vmatpush1.msra.mxu0 %v81
    %90 = vmatprep.subr.mxu0 0.0
    %91 = vmatpush1.msra.mxu0 %v80
    %92 = vmatprep.subr.mxu0 0.0
    %93 = vmatpush1.msra.mxu0 %v79
    %94 = vmatprep.subr.mxu0 0.0
    %95 = vmatpush1.msra.mxu0 %v78
    %96 = vmatprep.subr.mxu0 0.0
    %97 = vmatpush1.msra.mxu0 %v77
    %98 = vmatprep.subr.mxu0 0.0
    %99 = vmatpush1.msra.mxu0 %v76
    %100 = vmatprep.subr.mxu0 0.0
    %101 = vmatpush1.msra.mxu0 %v75
    %102 = vmatprep.subr.mxu0 0.0
    %103 = vmatpush1.msra.mxu0 %v74
    %104 = vmatprep.subr.mxu0 0.0
    %105 = vmatpush1.msra.mxu0 %v73
    %106 = vmatprep.subr.mxu0 0.0
    %107 = vmatpush1.msra.mxu0 %v72
    %108 = vmatprep.subr.mxu0 0.0
    %109 = vmatpush1.msra.mxu0 %v71
    %110 = vmatprep.subr.mxu0 0.0
    %111 = vmatpush1.msra.mxu0 %v70
    %112 = vmatprep.subr.mxu0 0.0
    %113 = vmatpush1.msra.mxu0 %v69
    %114 = vmatprep.subr.mxu0 0.0
    %115 = vmatpush1.msra.mxu0 %v68
    %116 = vmatprep.subr.mxu0 0.0
    %117 = vmatpush2.msra.mxu0 0.0
    %118 = vmatprep.subr.mxu0 0.0
    %119 = vmatpush2.msra.mxu0 0.0
    %120 = vmatprep.subr.mxu0 0.0
    %121 = vmatpush2.msra.mxu0 0.0
    %122 = vmatprep.subr.mxu0 0.0
    %123 = vmatpush2.msra.mxu0 0.0
    %124 = vmatprep.subr.mxu0 0.0
    %125 = vmatpush2.msra.mxu0 0.0
    %126 = vmatprep.subr.mxu0 0.0
    %127 = vmatpush2.msra.mxu0 0.0
    %128 = vmatprep.subr.mxu0 0.0
    %129 = vmatpush2.msra.mxu0 0.0
    %130 = vmatprep.subr.mxu0 0.0
    %131 = vmatpush2.msra.mxu0 0.0
    %132 = vmatprep.subr.mxu0 0.0
    %133 = vmatpush2.msra.mxu0 0.0
    %134 = vmatprep.subr.mxu0 0.0
    %135 = vmatpush2.msra.mxu0 0.0
    %136 = vmatprep.subr.mxu0 0.0
    %137 = vmatpush2.msra.mxu0 0.0
    %138 = vmatprep.subr.mxu0 0.0
    %139 = vmatpush2.msra.mxu0 0.0
    %140 = vmatprep.subr.mxu0 0.0
    %141 = vmatpush2.msra.mxu0 0.0
    %142 = vmatprep.subr.mxu0 0.0
    %143 = vmatpush2.msra.mxu0 0.0
    %144 = vmatprep.subr.mxu0 0.0
    %145 = vmatpush2.msra.mxu0 0.0
    %146 = vmatprep.subr.mxu0 0.0
    %147 = vmatpush2.msra.mxu0 0.0
    %148 = vmatprep.mubr.f32.mxu0 0.0
    %149 = vmatmul.mubr.f32.gmra.mxu0 %v43
    %v150 = vpop.f32.mrf.mxu0
    %v151 = vadd.f32 0.0, %v150
    %v152 = vpop.f32.mrf.mxu0
    %153 = vmatprep.mubr.f32.mxu0 0.0
    %154 = vmatmul.mubr.f32.gmra.mxu0 %v44
    %v155 = vpop.f32.mrf.mxu0
    %v156 = vadd.f32 0.0, %v155
    %v157 = vpop.f32.mrf.mxu0
    %158 = vmatprep.mubr.f32.mxu0 0.0
    %159 = vmatmul.mubr.f32.gmra.mxu0 %v45
    %v160 = vpop.f32.mrf.mxu0
    %v161 = vadd.f32 0.0, %v160
    %v162 = vpop.f32.mrf.mxu0
    %163 = vmatprep.mubr.f32.mxu0 0.0
    %164 = vmatmul.mubr.f32.gmra.mxu0 %v46
    %v165 = vpop.f32.mrf.mxu0
    %v166 = vadd.f32 0.0, %v165
    %v167 = vpop.f32.mrf.mxu0
    %168 = vmatprep.mubr.f32.mxu0 0.0
    %169 = vmatmul.mubr.f32.gmra.mxu0 %v47
    %v170 = vpop.f32.mrf.mxu0
    %v171 = vadd.f32 0.0, %v170
    %v172 = vpop.f32.mrf.mxu0
    %173 = vmatprep.mubr.f32.mxu0 0.0
    %174 = vmatmul.mubr.f32.gmra.mxu0 %v48
    %v175 = vpop.f32.mrf.mxu0
    %v176 = vadd.f32 0.0, %v175
    %v177 = vpop.f32.mrf.mxu0
    %178 = vmatprep.mubr.f32.mxu0 0.0
    %179 = vmatmul.mubr.f32.gmra.mxu0 %v49
    %v180 = vpop.f32.mrf.mxu0
    %v181 = vadd.f32 0.0, %v180
    %v182 = vpop.f32.mrf.mxu0
    %183 = vmatprep.mubr.f32.mxu0 0.0
    %184 = vmatmul.mubr.f32.gmra.mxu0 %v50
    %v185 = vpop.f32.mrf.mxu0
    %v186 = vadd.f32 0.0, %v185
    %v187 = vpop.f32.mrf.mxu0
    %188 = vmatprep.mubr.f32.mxu0 0.0
    %189 = vmatmul.mubr.f32.gmra.mxu0 %v51
    %v190 = vpop.f32.mrf.mxu0
    %v191 = vadd.f32 0.0, %v190
    %v192 = vpop.f32.mrf.mxu0
    %193 = vmatprep.mubr.f32.mxu0 0.0
    %194 = vmatmul.mubr.f32.gmra.mxu0 %v52
    %v195 = vpop.f32.mrf.mxu0
    %v196 = vadd.f32 0.0, %v195
    %v197 = vpop.f32.mrf.mxu0
    %198 = vmatprep.mubr.f32.mxu0 0.0
    %199 = vmatmul.mubr.f32.gmra.mxu0 %v53
    %v200 = vpop.f32.mrf.mxu0
    %v201 = vadd.f32 0.0, %v200
    %v202 = vpop.f32.mrf.mxu0
    %203 = vmatprep.mubr.f32.mxu0 0.0
    %204 = vmatmul.mubr.f32.gmra.mxu0 %v54
    %v205 = vpop.f32.mrf.mxu0
    %v206 = vadd.f32 0.0, %v205
    %v207 = vpop.f32.mrf.mxu0
    %208 = vmatprep.mubr.f32.mxu0 0.0
    %209 = vmatmul.mubr.f32.gmra.mxu0 %v55
    %v210 = vpop.f32.mrf.mxu0
    %v211 = vadd.f32 0.0, %v210
    %v212 = vpop.f32.mrf.mxu0
    %213 = vmatprep.mubr.f32.mxu0 0.0
    %214 = vmatmul.mubr.f32.gmra.mxu0 %v56
    %v215 = vpop.f32.mrf.mxu0
    %v216 = vadd.f32 0.0, %v215
    %v217 = vpop.f32.mrf.mxu0
    %218 = vmatprep.mubr.f32.mxu0 0.0
    %219 = vmatmul.mubr.f32.gmra.mxu0 %v57
    %v220 = vpop.f32.mrf.mxu0
    %v221 = vadd.f32 0.0, %v220
    %v222 = vpop.f32.mrf.mxu0
    %223 = vmatprep.mubr.f32.mxu0 0.0
    %224 = vmatmul.mubr.f32.gmra.mxu0 %v58
    %v225 = vpop.f32.mrf.mxu0
    %v226 = vadd.f32 0.0, %v225
    %v227 = vpop.f32.mrf.mxu0
    %228 = vmatprep.mubr.f32.mxu0 0.0
    %229 = vmatmul.mubr.f32.gmra.mxu0 %v59
    %v230 = vpop.f32.mrf.mxu0
    %v231 = vadd.f32 0.0, %v230
    %v232 = vpop.f32.mrf.mxu0
    %233 = vmatprep.mubr.f32.mxu0 0.0
    %234 = vmatmul.mubr.f32.gmra.mxu0 %v60
    %v235 = vpop.f32.mrf.mxu0
    %v236 = vadd.f32 0.0, %v235
    %v237 = vpop.f32.mrf.mxu0
    %238 = vmatprep.mubr.f32.mxu0 0.0
    %239 = vmatmul.mubr.f32.gmra.mxu0 %v61
    %v240 = vpop.f32.mrf.mxu0
    %v241 = vadd.f32 0.0, %v240
    %v242 = vpop.f32.mrf.mxu0
    %243 = vmatprep.mubr.f32.mxu0 0.0
    %244 = vmatmul.mubr.f32.gmra.mxu0 %v62
    %v245 = vpop.f32.mrf.mxu0
    %v246 = vadd.f32 0.0, %v245
    %v247 = vpop.f32.mrf.mxu0
    %248 = vmatprep.mubr.f32.mxu0 0.0
    %249 = vmatmul.mubr.f32.gmra.mxu0 %v63
    %v250 = vpop.f32.mrf.mxu0
    %v251 = vadd.f32 0.0, %v250
    %v252 = vpop.f32.mrf.mxu0
    %253 = vmatprep.mubr.f32.mxu0 0.0
    %254 = vmatmul.mubr.f32.gmra.mxu0 %v64
    %v255 = vpop.f32.mrf.mxu0
    %v256 = vadd.f32 0.0, %v255
    %v257 = vpop.f32.mrf.mxu0
    %258 = vmatprep.mubr.f32.mxu0 0.0
    %259 = vmatmul.mubr.f32.gmra.mxu0 %v65
    %v260 = vpop.f32.mrf.mxu0
    %v261 = vadd.f32 0.0, %v260
    %v262 = vpop.f32.mrf.mxu0
    %263 = vmatprep.mubr.f32.mxu0 0.0
    %264 = vmatmul.mubr.f32.gmra.mxu0 %v66
    %v265 = vpop.f32.mrf.mxu0
    %v266 = vadd.f32 0.0, %v265
    %v267 = vpop.f32.mrf.mxu0
    %268 = vmatprep.mubr.f32.mxu0 0.0
    %269 = vmatmul.mubr.f32.gmra.mxu0 %v67
    %v270 = vpop.f32.mrf.mxu0
    %v271 = vadd.f32 0.0, %v270
    %v272 = vpop.f32.mrf.mxu0
    %273 = vdwg.mxu0
    %v274 = vld [vmem:[%s2] sm:$0x1]
    %v275 = vmul.f32 %v43, %v43
    %v276 = vmul.f32 %v44, %v44
    %v277 = vmul.f32 %v45, %v45
    %v278 = vmul.f32 %v46, %v46
    %v279 = vmul.f32 %v47, %v47
    %v280 = vmul.f32 %v48, %v48
    %v281 = vmul.f32 %v49, %v49
    %v282 = vmul.f32 %v50, %v50
    %v283 = vmul.f32 %v51, %v51
    %v284 = vmul.f32 %v52, %v52
    %v285 = vmul.f32 %v53, %v53
    %v286 = vmul.f32 %v54, %v54
    %v287 = vmul.f32 %v55, %v55
    %v288 = vmul.f32 %v56, %v56
    %v289 = vmul.f32 %v57, %v57
    %v290 = vmul.f32 %v58, %v58
    %v291 = vmul.f32 %v59, %v59
    %v292 = vmul.f32 %v60, %v60
    %v293 = vmul.f32 %v61, %v61
    %v294 = vmul.f32 %v62, %v62
    %v295 = vmul.f32 %v63, %v63
    %v296 = vmul.f32 %v64, %v64
    %v297 = vmul.f32 %v65, %v65
    %v298 = vmul.f32 %v66, %v66
    %v299 = vmul.f32 %v67, %v67
    %300 = vadd.xlane.f32.xlu0 %v275
    %v301 = vpop.xlane.xlu0 %300
    %302 = vadd.xlane.f32.xlu0 %v276
    %v303 = vpop.xlane.xlu0 %302
    %304 = vadd.xlane.f32.xlu0 %v277
    %v305 = vpop.xlane.xlu0 %304
    %306 = vadd.xlane.f32.xlu0 %v278
    %v307 = vpop.xlane.xlu0 %306
    %308 = vadd.xlane.f32.xlu0 %v279
    %v309 = vpop.xlane.xlu0 %308
    %310 = vadd.xlane.f32.xlu0 %v280
    %v311 = vpop.xlane.xlu0 %310
    %312 = vadd.xlane.f32.xlu0 %v281
    %v313 = vpop.xlane.xlu0 %312
    %314 = vadd.xlane.f32.xlu0 %v282
    %v315 = vpop.xlane.xlu0 %314
    %316 = vadd.xlane.f32.xlu0 %v283
    %v317 = vpop.xlane.xlu0 %316
    %318 = vadd.xlane.f32.xlu0 %v284
    %v319 = vpop.xlane.xlu0 %318
    %320 = vadd.xlane.f32.xlu0 %v285
    %v321 = vpop.xlane.xlu0 %320
    %322 = vadd.xlane.f32.xlu0 %v286
    %v323 = vpop.xlane.xlu0 %322
    %324 = vadd.xlane.f32.xlu0 %v287
    %v325 = vpop.xlane.xlu0 %324
    %326 = vadd.xlane.f32.xlu0 %v288
    %v327 = vpop.xlane.xlu0 %326
    %328 = vadd.xlane.f32.xlu0 %v289
    %v329 = vpop.xlane.xlu0 %328
    %330 = vadd.xlane.f32.xlu0 %v290
    %v331 = vpop.xlane.xlu0 %330
    %332 = vadd.xlane.f32.xlu0 %v291
    %v333 = vpop.xlane.xlu0 %332
    %334 = vadd.xlane.f32.xlu0 %v292
    %v335 = vpop.xlane.xlu0 %334
    %336 = vadd.xlane.f32.xlu0 %v293
    %v337 = vpop.xlane.xlu0 %336
    %338 = vadd.xlane.f32.xlu0 %v294
    %v339 = vpop.xlane.xlu0 %338
    %340 = vadd.xlane.f32.xlu0 %v295
    %v341 = vpop.xlane.xlu0 %340
    %342 = vadd.xlane.f32.xlu0 %v296
    %v343 = vpop.xlane.xlu0 %342
    %344 = vadd.xlane.f32.xlu0 %v297
    %v345 = vpop.xlane.xlu0 %344
    %346 = vadd.xlane.f32.xlu0 %v298
    %v347 = vpop.xlane.xlu0 %346
    %348 = vadd.xlane.f32.xlu0 %v299
    %v349 = vpop.xlane.xlu0 %348
    %v350 = vmul.f32 %v151, %v151
    %v351 = vmul.f32 %v156, %v156
    %v352 = vmul.f32 %v161, %v161
    %v353 = vmul.f32 %v166, %v166
    %v354 = vmul.f32 %v171, %v171
    %v355 = vmul.f32 %v176, %v176
    %v356 = vmul.f32 %v181, %v181
    %v357 = vmul.f32 %v186, %v186
    %v358 = vmul.f32 %v191, %v191
    %v359 = vmul.f32 %v196, %v196
    %v360 = vmul.f32 %v201, %v201
    %v361 = vmul.f32 %v206, %v206
    %v362 = vmul.f32 %v211, %v211
    %v363 = vmul.f32 %v216, %v216
    %v364 = vmul.f32 %v221, %v221
    %v365 = vmul.f32 %v226, %v226
    %v366 = vmul.f32 %v231, %v231
    %v367 = vmul.f32 %v236, %v236
    %v368 = vmul.f32 %v241, %v241
    %v369 = vmul.f32 %v246, %v246
    %v370 = vmul.f32 %v251, %v251
    %v371 = vmul.f32 %v256, %v256
    %v372 = vmul.f32 %v261, %v261
    %v373 = vmul.f32 %v266, %v266
    %v374 = vmul.f32 %v271, %v271
    %375 = vadd.xlane.f32.xlu0 %v350
    %v376 = vpop.xlane.xlu0 %375
    %377 = vadd.xlane.f32.xlu0 %v351
    %v378 = vpop.xlane.xlu0 %377
    %379 = vadd.xlane.f32.xlu0 %v352
    %v380 = vpop.xlane.xlu0 %379
    %381 = vadd.xlane.f32.xlu0 %v353
    %v382 = vpop.xlane.xlu0 %381
    %383 = vadd.xlane.f32.xlu0 %v354
    %v384 = vpop.xlane.xlu0 %383
    %385 = vadd.xlane.f32.xlu0 %v355
    %v386 = vpop.xlane.xlu0 %385
    %387 = vadd.xlane.f32.xlu0 %v356
    %v388 = vpop.xlane.xlu0 %387
    %389 = vadd.xlane.f32.xlu0 %v357
    %v390 = vpop.xlane.xlu0 %389
    %391 = vadd.xlane.f32.xlu0 %v358
    %v392 = vpop.xlane.xlu0 %391
    %393 = vadd.xlane.f32.xlu0 %v359
    %v394 = vpop.xlane.xlu0 %393
    %395 = vadd.xlane.f32.xlu0 %v360
    %v396 = vpop.xlane.xlu0 %395
    %397 = vadd.xlane.f32.xlu0 %v361
    %v398 = vpop.xlane.xlu0 %397
    %399 = vadd.xlane.f32.xlu0 %v362
    %v400 = vpop.xlane.xlu0 %399
    %401 = vadd.xlane.f32.xlu0 %v363
    %v402 = vpop.xlane.xlu0 %401
    %403 = vadd.xlane.f32.xlu0 %v364
    %v404 = vpop.xlane.xlu0 %403
    %405 = vadd.xlane.f32.xlu0 %v365
    %v406 = vpop.xlane.xlu0 %405
    %407 = vadd.xlane.f32.xlu0 %v366
    %v408 = vpop.xlane.xlu0 %407
    %409 = vadd.xlane.f32.xlu0 %v367
    %v410 = vpop.xlane.xlu0 %409
    %411 = vadd.xlane.f32.xlu0 %v368
    %v412 = vpop.xlane.xlu0 %411
    %413 = vadd.xlane.f32.xlu0 %v369
    %v414 = vpop.xlane.xlu0 %413
    %415 = vadd.xlane.f32.xlu0 %v370
    %v416 = vpop.xlane.xlu0 %415
    %417 = vadd.xlane.f32.xlu0 %v371
    %v418 = vpop.xlane.xlu0 %417
    %419 = vadd.xlane.f32.xlu0 %v372
    %v420 = vpop.xlane.xlu0 %419
    %421 = vadd.xlane.f32.xlu0 %v373
    %v422 = vpop.xlane.xlu0 %421
    %423 = vadd.xlane.f32.xlu0 %v374
    %v424 = vpop.xlane.xlu0 %423
    %v426 = vlaneseq
    %v427 = vshrl.u32 %v426, 7
    %v428 = vsub.s32 0, %v427
    %v429 = vrot.slane %v274, %v428
    %v431 = vmul.f32 %v151, %v429
    %v432 = vmul.f32 %v156, %v429
    %v433 = vmul.f32 %v161, %v429
    %v434 = vmul.f32 %v166, %v429
    %v435 = vmul.f32 %v171, %v429
    %v436 = vmul.f32 %v176, %v429
    %v437 = vmul.f32 %v181, %v429
    %v438 = vmul.f32 %v186, %v429
    %v439 = vmul.f32 %v191, %v429
    %v440 = vmul.f32 %v196, %v429
    %v441 = vmul.f32 %v201, %v429
    %v442 = vmul.f32 %v206, %v429
    %v443 = vmul.f32 %v211, %v429
    %v444 = vmul.f32 %v216, %v429
    %v445 = vmul.f32 %v221, %v429
    %v446 = vmul.f32 %v226, %v429
    %v447 = vmul.f32 %v231, %v429
    %v448 = vmul.f32 %v236, %v429
    %v449 = vmul.f32 %v241, %v429
    %v450 = vmul.f32 %v246, %v429
    %v451 = vmul.f32 %v251, %v429
    %v452 = vmul.f32 %v256, %v429
    %v453 = vmul.f32 %v261, %v429
    %v454 = vmul.f32 %v266, %v429
    %v455 = vmul.f32 %v271, %v429
    %456 = vadd.xlane.f32.xlu0 %v431
    %v457 = vpop.xlane.xlu0 %456
    %458 = vadd.xlane.f32.xlu0 %v432
    %v459 = vpop.xlane.xlu0 %458
    %460 = vadd.xlane.f32.xlu0 %v433
    %v461 = vpop.xlane.xlu0 %460
    %462 = vadd.xlane.f32.xlu0 %v434
    %v463 = vpop.xlane.xlu0 %462
    %464 = vadd.xlane.f32.xlu0 %v435
    %v465 = vpop.xlane.xlu0 %464
    %466 = vadd.xlane.f32.xlu0 %v436
    %v467 = vpop.xlane.xlu0 %466
    %468 = vadd.xlane.f32.xlu0 %v437
    %v469 = vpop.xlane.xlu0 %468
    %470 = vadd.xlane.f32.xlu0 %v438
    %v471 = vpop.xlane.xlu0 %470
    %472 = vadd.xlane.f32.xlu0 %v439
    %v473 = vpop.xlane.xlu0 %472
    %474 = vadd.xlane.f32.xlu0 %v440
    %v475 = vpop.xlane.xlu0 %474
    %476 = vadd.xlane.f32.xlu0 %v441
    %v477 = vpop.xlane.xlu0 %476
    %478 = vadd.xlane.f32.xlu0 %v442
    %v479 = vpop.xlane.xlu0 %478
    %480 = vadd.xlane.f32.xlu0 %v443
    %v481 = vpop.xlane.xlu0 %480
    %482 = vadd.xlane.f32.xlu0 %v444
    %v483 = vpop.xlane.xlu0 %482
    %484 = vadd.xlane.f32.xlu0 %v445
    %v485 = vpop.xlane.xlu0 %484
    %486 = vadd.xlane.f32.xlu0 %v446
    %v487 = vpop.xlane.xlu0 %486
    %488 = vadd.xlane.f32.xlu0 %v447
    %v489 = vpop.xlane.xlu0 %488
    %490 = vadd.xlane.f32.xlu0 %v448
    %v491 = vpop.xlane.xlu0 %490
    %492 = vadd.xlane.f32.xlu0 %v449
    %v493 = vpop.xlane.xlu0 %492
    %494 = vadd.xlane.f32.xlu0 %v450
    %v495 = vpop.xlane.xlu0 %494
    %496 = vadd.xlane.f32.xlu0 %v451
    %v497 = vpop.xlane.xlu0 %496
    %498 = vadd.xlane.f32.xlu0 %v452
    %v499 = vpop.xlane.xlu0 %498
    %500 = vadd.xlane.f32.xlu0 %v453
    %v501 = vpop.xlane.xlu0 %500
    %502 = vadd.xlane.f32.xlu0 %v454
    %v503 = vpop.xlane.xlu0 %502
    %504 = vadd.xlane.f32.xlu0 %v455
    %v505 = vpop.xlane.xlu0 %504
    %v506 = vmax.f32 %v301, 1e-30
    %v507 = vmax.f32 %v303, 1e-30
    %v508 = vmax.f32 %v305, 1e-30
    %v509 = vmax.f32 %v307, 1e-30
    %v510 = vmax.f32 %v309, 1e-30
    %v511 = vmax.f32 %v311, 1e-30
    %v512 = vmax.f32 %v313, 1e-30
    %v513 = vmax.f32 %v315, 1e-30
    %v514 = vmax.f32 %v317, 1e-30
    %v515 = vmax.f32 %v319, 1e-30
    %v516 = vmax.f32 %v321, 1e-30
    %v517 = vmax.f32 %v323, 1e-30
    %v518 = vmax.f32 %v325, 1e-30
    %v519 = vmax.f32 %v327, 1e-30
    %v520 = vmax.f32 %v329, 1e-30
    %v521 = vmax.f32 %v331, 1e-30
    %v522 = vmax.f32 %v333, 1e-30
    %v523 = vmax.f32 %v335, 1e-30
    %v524 = vmax.f32 %v337, 1e-30
    %v525 = vmax.f32 %v339, 1e-30
    %v526 = vmax.f32 %v341, 1e-30
    %v527 = vmax.f32 %v343, 1e-30
    %v528 = vmax.f32 %v345, 1e-30
    %v529 = vmax.f32 %v347, 1e-30
    %v530 = vmax.f32 %v349, 1e-30
    %v531 = vrsqrt.pop %v506
    %v532 = vrsqrt.pop %v507
    %v533 = vrsqrt.pop %v508
    %v534 = vrsqrt.pop %v509
    %v535 = vrsqrt.pop %v510
    %v536 = vrsqrt.pop %v511
    %v537 = vrsqrt.pop %v512
    %v538 = vrsqrt.pop %v513
    %v539 = vrsqrt.pop %v514
    %v540 = vrsqrt.pop %v515
    %v541 = vrsqrt.pop %v516
    %v542 = vrsqrt.pop %v517
    %v543 = vrsqrt.pop %v518
    %v544 = vrsqrt.pop %v519
    %v545 = vrsqrt.pop %v520
    %v546 = vrsqrt.pop %v521
    %v547 = vrsqrt.pop %v522
    %v548 = vrsqrt.pop %v523
    %v549 = vrsqrt.pop %v524
    %v550 = vrsqrt.pop %v525
    %v551 = vrsqrt.pop %v526
    %v552 = vrsqrt.pop %v527
    %v553 = vrsqrt.pop %v528
    %v554 = vrsqrt.pop %v529
    %v555 = vrsqrt.pop %v530
    %v556 = vmul.f32 %v506, %v531
    %v557 = vmul.f32 %v507, %v532
    %v558 = vmul.f32 %v508, %v533
    %v559 = vmul.f32 %v509, %v534
    %v560 = vmul.f32 %v510, %v535
    %v561 = vmul.f32 %v511, %v536
    %v562 = vmul.f32 %v512, %v537
    %v563 = vmul.f32 %v513, %v538
    %v564 = vmul.f32 %v514, %v539
    %v565 = vmul.f32 %v515, %v540
    %v566 = vmul.f32 %v516, %v541
    %v567 = vmul.f32 %v517, %v542
    %v568 = vmul.f32 %v518, %v543
    %v569 = vmul.f32 %v519, %v544
    %v570 = vmul.f32 %v520, %v545
    %v571 = vmul.f32 %v521, %v546
    %v572 = vmul.f32 %v522, %v547
    %v573 = vmul.f32 %v523, %v548
    %v574 = vmul.f32 %v524, %v549
    %v575 = vmul.f32 %v525, %v550
    %v576 = vmul.f32 %v526, %v551
    %v577 = vmul.f32 %v527, %v552
    %v578 = vmul.f32 %v528, %v553
    %v579 = vmul.f32 %v529, %v554
    %v580 = vmul.f32 %v530, %v555
    %v581 = vmax.f32 %v376, 1e-30
    %v582 = vmax.f32 %v378, 1e-30
    %v583 = vmax.f32 %v380, 1e-30
    %v584 = vmax.f32 %v382, 1e-30
    %v585 = vmax.f32 %v384, 1e-30
    %v586 = vmax.f32 %v386, 1e-30
    %v587 = vmax.f32 %v388, 1e-30
    %v588 = vmax.f32 %v390, 1e-30
    %v589 = vmax.f32 %v392, 1e-30
    %v590 = vmax.f32 %v394, 1e-30
    %v591 = vmax.f32 %v396, 1e-30
    %v592 = vmax.f32 %v398, 1e-30
    %v593 = vmax.f32 %v400, 1e-30
    %v594 = vmax.f32 %v402, 1e-30
    %v595 = vmax.f32 %v404, 1e-30
    %v596 = vmax.f32 %v406, 1e-30
    %v597 = vmax.f32 %v408, 1e-30
    %v598 = vmax.f32 %v410, 1e-30
    %v599 = vmax.f32 %v412, 1e-30
    %v600 = vmax.f32 %v414, 1e-30
    %v601 = vmax.f32 %v416, 1e-30
    %v602 = vmax.f32 %v418, 1e-30
    %v603 = vmax.f32 %v420, 1e-30
    %v604 = vmax.f32 %v422, 1e-30
    %v605 = vmax.f32 %v424, 1e-30
    %v606 = vrsqrt.pop %v581
    %v607 = vrsqrt.pop %v582
    %v608 = vrsqrt.pop %v583
    %v609 = vrsqrt.pop %v584
    %v610 = vrsqrt.pop %v585
    %v611 = vrsqrt.pop %v586
    %v612 = vrsqrt.pop %v587
    %v613 = vrsqrt.pop %v588
    %v614 = vrsqrt.pop %v589
    %v615 = vrsqrt.pop %v590
    %v616 = vrsqrt.pop %v591
    %v617 = vrsqrt.pop %v592
    %v618 = vrsqrt.pop %v593
    %v619 = vrsqrt.pop %v594
    %v620 = vrsqrt.pop %v595
    %v621 = vrsqrt.pop %v596
    %v622 = vrsqrt.pop %v597
    %v623 = vrsqrt.pop %v598
    %v624 = vrsqrt.pop %v599
    %v625 = vrsqrt.pop %v600
    %v626 = vrsqrt.pop %v601
    %v627 = vrsqrt.pop %v602
    %v628 = vrsqrt.pop %v603
    %v629 = vrsqrt.pop %v604
    %v630 = vrsqrt.pop %v605
    %v631 = vmul.f32 %v581, %v606
    %v632 = vmul.f32 %v582, %v607
    %v633 = vmul.f32 %v583, %v608
    %v634 = vmul.f32 %v584, %v609
    %v635 = vmul.f32 %v585, %v610
    %v636 = vmul.f32 %v586, %v611
    %v637 = vmul.f32 %v587, %v612
    %v638 = vmul.f32 %v588, %v613
    %v639 = vmul.f32 %v589, %v614
    %v640 = vmul.f32 %v590, %v615
    %v641 = vmul.f32 %v591, %v616
    %v642 = vmul.f32 %v592, %v617
    %v643 = vmul.f32 %v593, %v618
    %v644 = vmul.f32 %v594, %v619
    %v645 = vmul.f32 %v595, %v620
    %v646 = vmul.f32 %v596, %v621
    %v647 = vmul.f32 %v597, %v622
    %v648 = vmul.f32 %v598, %v623
    %v649 = vmul.f32 %v599, %v624
    %v650 = vmul.f32 %v600, %v625
    %v651 = vmul.f32 %v601, %v626
    %v652 = vmul.f32 %v602, %v627
    %v653 = vmul.f32 %v603, %v628
    %v654 = vmul.f32 %v604, %v629
    %v655 = vmul.f32 %v605, %v630
    %v656 = vmul.f32 %v631, %v531
    %v657 = vmul.f32 %v632, %v532
    %v658 = vmul.f32 %v633, %v533
    %v659 = vmul.f32 %v634, %v534
    %v660 = vmul.f32 %v635, %v535
    %v661 = vmul.f32 %v636, %v536
    %v662 = vmul.f32 %v637, %v537
    %v663 = vmul.f32 %v638, %v538
    %v664 = vmul.f32 %v639, %v539
    %v665 = vmul.f32 %v640, %v540
    %v666 = vmul.f32 %v641, %v541
    %v667 = vmul.f32 %v642, %v542
    %v668 = vmul.f32 %v643, %v543
    %v669 = vmul.f32 %v644, %v544
    %v670 = vmul.f32 %v645, %v545
    %v671 = vmul.f32 %v646, %v546
    %v672 = vmul.f32 %v647, %v547
    %v673 = vmul.f32 %v648, %v548
    %v674 = vmul.f32 %v649, %v549
    %v675 = vmul.f32 %v650, %v550
    %v676 = vmul.f32 %v651, %v551
    %v677 = vmul.f32 %v652, %v552
    %v678 = vmul.f32 %v653, %v553
    %v679 = vmul.f32 %v654, %v554
    %v680 = vmul.f32 %v655, %v555
    %v681 = vmax.f32 %v556, -1.0
    %v682 = vmax.f32 %v557, -1.0
    %v683 = vmax.f32 %v558, -1.0
    %v684 = vmax.f32 %v559, -1.0
    %v685 = vmax.f32 %v560, -1.0
    %v686 = vmax.f32 %v561, -1.0
    %v687 = vmax.f32 %v562, -1.0
    %v688 = vmax.f32 %v563, -1.0
    %v689 = vmax.f32 %v564, -1.0
    %v690 = vmax.f32 %v565, -1.0
    %v691 = vmax.f32 %v566, -1.0
    %v692 = vmax.f32 %v567, -1.0
    %v693 = vmax.f32 %v568, -1.0
    %v694 = vmax.f32 %v569, -1.0
    %v695 = vmax.f32 %v570, -1.0
    %v696 = vmax.f32 %v571, -1.0
    %v697 = vmax.f32 %v572, -1.0
    %v698 = vmax.f32 %v573, -1.0
    %v699 = vmax.f32 %v574, -1.0
    %v700 = vmax.f32 %v575, -1.0
    %v701 = vmax.f32 %v576, -1.0
    %v702 = vmax.f32 %v577, -1.0
    %v703 = vmax.f32 %v578, -1.0
    %v704 = vmax.f32 %v579, -1.0
    %v705 = vmax.f32 %v580, -1.0
    %v706 = vmin.f32 %v681, 1.0
    %v707 = vmin.f32 %v682, 1.0
    %v708 = vmin.f32 %v683, 1.0
    %v709 = vmin.f32 %v684, 1.0
    %v710 = vmin.f32 %v685, 1.0
    %v711 = vmin.f32 %v686, 1.0
    %v712 = vmin.f32 %v687, 1.0
    %v713 = vmin.f32 %v688, 1.0
    %v714 = vmin.f32 %v689, 1.0
    %v715 = vmin.f32 %v690, 1.0
    %v716 = vmin.f32 %v691, 1.0
    %v717 = vmin.f32 %v692, 1.0
    %v718 = vmin.f32 %v693, 1.0
    %v719 = vmin.f32 %v694, 1.0
    %v720 = vmin.f32 %v695, 1.0
    %v721 = vmin.f32 %v696, 1.0
    %v722 = vmin.f32 %v697, 1.0
    %v723 = vmin.f32 %v698, 1.0
    %v724 = vmin.f32 %v699, 1.0
    %v725 = vmin.f32 %v700, 1.0
    %v726 = vmin.f32 %v701, 1.0
    %v727 = vmin.f32 %v702, 1.0
    %v728 = vmin.f32 %v703, 1.0
    %v729 = vmin.f32 %v704, 1.0
    %v730 = vmin.f32 %v705, 1.0
    %v731 = vadd.f32 %v706, 1.0
    %v732 = vlog2.pop %v731
    %v733 = vmul.f32 %v732, 0.6931472
    %v734 = vmul.f32 -0.5, %v706
    %v735 = vadd.f32 %v734, 1.0
    %v736 = vmul.f32 %v735, %v706
    %v737 = vand.u32 2147483647, %v706
    %vm738 = vcmp.lt.f32.partialorder %v737, 0.0004427343
    %v739 = vsel %vm738, %v736, %v733
    %v740 = vadd.f32 %v707, 1.0
    %v741 = vlog2.pop %v740
    %v742 = vmul.f32 %v741, 0.6931472
    %v743 = vmul.f32 -0.5, %v707
    %v744 = vadd.f32 %v743, 1.0
    %v745 = vmul.f32 %v744, %v707
    %v746 = vand.u32 2147483647, %v707
    %vm747 = vcmp.lt.f32.partialorder %v746, 0.0004427343
    %v748 = vsel %vm747, %v745, %v742
    %v749 = vadd.f32 %v708, 1.0
    %v750 = vlog2.pop %v749
    %v751 = vmul.f32 %v750, 0.6931472
    %v752 = vmul.f32 -0.5, %v708
    %v753 = vadd.f32 %v752, 1.0
    %v754 = vmul.f32 %v753, %v708
    %v755 = vand.u32 2147483647, %v708
    %vm756 = vcmp.lt.f32.partialorder %v755, 0.0004427343
    %v757 = vsel %vm756, %v754, %v751
    %v758 = vadd.f32 %v709, 1.0
    %v759 = vlog2.pop %v758
    %v760 = vmul.f32 %v759, 0.6931472
    %v761 = vmul.f32 -0.5, %v709
    %v762 = vadd.f32 %v761, 1.0
    %v763 = vmul.f32 %v762, %v709
    %v764 = vand.u32 2147483647, %v709
    %vm765 = vcmp.lt.f32.partialorder %v764, 0.0004427343
    %v766 = vsel %vm765, %v763, %v760
    %v767 = vadd.f32 %v710, 1.0
    %v768 = vlog2.pop %v767
    %v769 = vmul.f32 %v768, 0.6931472
    %v770 = vmul.f32 -0.5, %v710
    %v771 = vadd.f32 %v770, 1.0
    %v772 = vmul.f32 %v771, %v710
    %v773 = vand.u32 2147483647, %v710
    %vm774 = vcmp.lt.f32.partialorder %v773, 0.0004427343
    %v775 = vsel %vm774, %v772, %v769
    %v776 = vadd.f32 %v711, 1.0
    %v777 = vlog2.pop %v776
    %v778 = vmul.f32 %v777, 0.6931472
    %v779 = vmul.f32 -0.5, %v711
    %v780 = vadd.f32 %v779, 1.0
    %v781 = vmul.f32 %v780, %v711
    %v782 = vand.u32 2147483647, %v711
    %vm783 = vcmp.lt.f32.partialorder %v782, 0.0004427343
    %v784 = vsel %vm783, %v781, %v778
    %v785 = vadd.f32 %v712, 1.0
    %v786 = vlog2.pop %v785
    %v787 = vmul.f32 %v786, 0.6931472
    %v788 = vmul.f32 -0.5, %v712
    %v789 = vadd.f32 %v788, 1.0
    %v790 = vmul.f32 %v789, %v712
    %v791 = vand.u32 2147483647, %v712
    %vm792 = vcmp.lt.f32.partialorder %v791, 0.0004427343
    %v793 = vsel %vm792, %v790, %v787
    %v794 = vadd.f32 %v713, 1.0
    %v795 = vlog2.pop %v794
    %v796 = vmul.f32 %v795, 0.6931472
    %v797 = vmul.f32 -0.5, %v713
    %v798 = vadd.f32 %v797, 1.0
    %v799 = vmul.f32 %v798, %v713
    %v800 = vand.u32 2147483647, %v713
    %vm801 = vcmp.lt.f32.partialorder %v800, 0.0004427343
    %v802 = vsel %vm801, %v799, %v796
    %v803 = vadd.f32 %v714, 1.0
    %v804 = vlog2.pop %v803
    %v805 = vmul.f32 %v804, 0.6931472
    %v806 = vmul.f32 -0.5, %v714
    %v807 = vadd.f32 %v806, 1.0
    %v808 = vmul.f32 %v807, %v714
    %v809 = vand.u32 2147483647, %v714
    %vm810 = vcmp.lt.f32.partialorder %v809, 0.0004427343
    %v811 = vsel %vm810, %v808, %v805
    %v812 = vadd.f32 %v715, 1.0
    %v813 = vlog2.pop %v812
    %v814 = vmul.f32 %v813, 0.6931472
    %v815 = vmul.f32 -0.5, %v715
    %v816 = vadd.f32 %v815, 1.0
    %v817 = vmul.f32 %v816, %v715
    %v818 = vand.u32 2147483647, %v715
    %vm819 = vcmp.lt.f32.partialorder %v818, 0.0004427343
    %v820 = vsel %vm819, %v817, %v814
    %v821 = vadd.f32 %v716, 1.0
    %v822 = vlog2.pop %v821
    %v823 = vmul.f32 %v822, 0.6931472
    %v824 = vmul.f32 -0.5, %v716
    %v825 = vadd.f32 %v824, 1.0
    %v826 = vmul.f32 %v825, %v716
    %v827 = vand.u32 2147483647, %v716
    %vm828 = vcmp.lt.f32.partialorder %v827, 0.0004427343
    %v829 = vsel %vm828, %v826, %v823
    %v830 = vadd.f32 %v717, 1.0
    %v831 = vlog2.pop %v830
    %v832 = vmul.f32 %v831, 0.6931472
    %v833 = vmul.f32 -0.5, %v717
    %v834 = vadd.f32 %v833, 1.0
    %v835 = vmul.f32 %v834, %v717
    %v836 = vand.u32 2147483647, %v717
    %vm837 = vcmp.lt.f32.partialorder %v836, 0.0004427343
    %v838 = vsel %vm837, %v835, %v832
    %v839 = vadd.f32 %v718, 1.0
    %v840 = vlog2.pop %v839
    %v841 = vmul.f32 %v840, 0.6931472
    %v842 = vmul.f32 -0.5, %v718
    %v843 = vadd.f32 %v842, 1.0
    %v844 = vmul.f32 %v843, %v718
    %v845 = vand.u32 2147483647, %v718
    %vm846 = vcmp.lt.f32.partialorder %v845, 0.0004427343
    %v847 = vsel %vm846, %v844, %v841
    %v848 = vadd.f32 %v719, 1.0
    %v849 = vlog2.pop %v848
    %v850 = vmul.f32 %v849, 0.6931472
    %v851 = vmul.f32 -0.5, %v719
    %v852 = vadd.f32 %v851, 1.0
    %v853 = vmul.f32 %v852, %v719
    %v854 = vand.u32 2147483647, %v719
    %vm855 = vcmp.lt.f32.partialorder %v854, 0.0004427343
    %v856 = vsel %vm855, %v853, %v850
    %v857 = vadd.f32 %v720, 1.0
    %v858 = vlog2.pop %v857
    %v859 = vmul.f32 %v858, 0.6931472
    %v860 = vmul.f32 -0.5, %v720
    %v861 = vadd.f32 %v860, 1.0
    %v862 = vmul.f32 %v861, %v720
    %v863 = vand.u32 2147483647, %v720
    %vm864 = vcmp.lt.f32.partialorder %v863, 0.0004427343
    %v865 = vsel %vm864, %v862, %v859
    %v866 = vadd.f32 %v721, 1.0
    %v867 = vlog2.pop %v866
    %v868 = vmul.f32 %v867, 0.6931472
    %v869 = vmul.f32 -0.5, %v721
    %v870 = vadd.f32 %v869, 1.0
    %v871 = vmul.f32 %v870, %v721
    %v872 = vand.u32 2147483647, %v721
    %vm873 = vcmp.lt.f32.partialorder %v872, 0.0004427343
    %v874 = vsel %vm873, %v871, %v868
    %v875 = vadd.f32 %v722, 1.0
    %v876 = vlog2.pop %v875
    %v877 = vmul.f32 %v876, 0.6931472
    %v878 = vmul.f32 -0.5, %v722
    %v879 = vadd.f32 %v878, 1.0
    %v880 = vmul.f32 %v879, %v722
    %v881 = vand.u32 2147483647, %v722
    %vm882 = vcmp.lt.f32.partialorder %v881, 0.0004427343
    %v883 = vsel %vm882, %v880, %v877
    %v884 = vadd.f32 %v723, 1.0
    %v885 = vlog2.pop %v884
    %v886 = vmul.f32 %v885, 0.6931472
    %v887 = vmul.f32 -0.5, %v723
    %v888 = vadd.f32 %v887, 1.0
    %v889 = vmul.f32 %v888, %v723
    %v890 = vand.u32 2147483647, %v723
    %vm891 = vcmp.lt.f32.partialorder %v890, 0.0004427343
    %v892 = vsel %vm891, %v889, %v886
    %v893 = vadd.f32 %v724, 1.0
    %v894 = vlog2.pop %v893
    %v895 = vmul.f32 %v894, 0.6931472
    %v896 = vmul.f32 -0.5, %v724
    %v897 = vadd.f32 %v896, 1.0
    %v898 = vmul.f32 %v897, %v724
    %v899 = vand.u32 2147483647, %v724
    %vm900 = vcmp.lt.f32.partialorder %v899, 0.0004427343
    %v901 = vsel %vm900, %v898, %v895
    %v902 = vadd.f32 %v725, 1.0
    %v903 = vlog2.pop %v902
    %v904 = vmul.f32 %v903, 0.6931472
    %v905 = vmul.f32 -0.5, %v725
    %v906 = vadd.f32 %v905, 1.0
    %v907 = vmul.f32 %v906, %v725
    %v908 = vand.u32 2147483647, %v725
    %vm909 = vcmp.lt.f32.partialorder %v908, 0.0004427343
    %v910 = vsel %vm909, %v907, %v904
    %v911 = vadd.f32 %v726, 1.0
    %v912 = vlog2.pop %v911
    %v913 = vmul.f32 %v912, 0.6931472
    %v914 = vmul.f32 -0.5, %v726
    %v915 = vadd.f32 %v914, 1.0
    %v916 = vmul.f32 %v915, %v726
    %v917 = vand.u32 2147483647, %v726
    %vm918 = vcmp.lt.f32.partialorder %v917, 0.0004427343
    %v919 = vsel %vm918, %v916, %v913
    %v920 = vadd.f32 %v727, 1.0
    %v921 = vlog2.pop %v920
    %v922 = vmul.f32 %v921, 0.6931472
    %v923 = vmul.f32 -0.5, %v727
    %v924 = vadd.f32 %v923, 1.0
    %v925 = vmul.f32 %v924, %v727
    %v926 = vand.u32 2147483647, %v727
    %vm927 = vcmp.lt.f32.partialorder %v926, 0.0004427343
    %v928 = vsel %vm927, %v925, %v922
    %v929 = vadd.f32 %v728, 1.0
    %v930 = vlog2.pop %v929
    %v931 = vmul.f32 %v930, 0.6931472
    %v932 = vmul.f32 -0.5, %v728
    %v933 = vadd.f32 %v932, 1.0
    %v934 = vmul.f32 %v933, %v728
    %v935 = vand.u32 2147483647, %v728
    %vm936 = vcmp.lt.f32.partialorder %v935, 0.0004427343
    %v937 = vsel %vm936, %v934, %v931
    %v938 = vadd.f32 %v729, 1.0
    %v939 = vlog2.pop %v938
    %v940 = vmul.f32 %v939, 0.6931472
    %v941 = vmul.f32 -0.5, %v729
    %v942 = vadd.f32 %v941, 1.0
    %v943 = vmul.f32 %v942, %v729
    %v944 = vand.u32 2147483647, %v729
    %vm945 = vcmp.lt.f32.partialorder %v944, 0.0004427343
    %v946 = vsel %vm945, %v943, %v940
    %v947 = vadd.f32 %v730, 1.0
    %v948 = vlog2.pop %v947
    %v949 = vmul.f32 %v948, 0.6931472
    %v950 = vmul.f32 -0.5, %v730
    %v951 = vadd.f32 %v950, 1.0
    %v952 = vmul.f32 %v951, %v730
    %v953 = vand.u32 2147483647, %v730
    %vm954 = vcmp.lt.f32.partialorder %v953, 0.0004427343
    %v955 = vsel %vm954, %v952, %v949
    %v956 = vsub.f32 0.0, %v706
    %v957 = vsub.f32 0.0, %v707
    %v958 = vsub.f32 0.0, %v708
    %v959 = vsub.f32 0.0, %v709
    %v960 = vsub.f32 0.0, %v710
    %v961 = vsub.f32 0.0, %v711
    %v962 = vsub.f32 0.0, %v712
    %v963 = vsub.f32 0.0, %v713
    %v964 = vsub.f32 0.0, %v714
    %v965 = vsub.f32 0.0, %v715
    %v966 = vsub.f32 0.0, %v716
    %v967 = vsub.f32 0.0, %v717
    %v968 = vsub.f32 0.0, %v718
    %v969 = vsub.f32 0.0, %v719
    %v970 = vsub.f32 0.0, %v720
    %v971 = vsub.f32 0.0, %v721
    %v972 = vsub.f32 0.0, %v722
    %v973 = vsub.f32 0.0, %v723
    %v974 = vsub.f32 0.0, %v724
    %v975 = vsub.f32 0.0, %v725
    %v976 = vsub.f32 0.0, %v726
    %v977 = vsub.f32 0.0, %v727
    %v978 = vsub.f32 0.0, %v728
    %v979 = vsub.f32 0.0, %v729
    %v980 = vsub.f32 0.0, %v730
    %v981 = vadd.f32 %v956, 1.0
    %v982 = vlog2.pop %v981
    %v983 = vmul.f32 %v982, 0.6931472
    %v984 = vmul.f32 -0.5, %v956
    %v985 = vadd.f32 %v984, 1.0
    %v986 = vmul.f32 %v985, %v956
    %v987 = vand.u32 2147483647, %v956
    %vm988 = vcmp.lt.f32.partialorder %v987, 0.0004427343
    %v989 = vsel %vm988, %v986, %v983
    %v990 = vadd.f32 %v957, 1.0
    %v991 = vlog2.pop %v990
    %v992 = vmul.f32 %v991, 0.6931472
    %v993 = vmul.f32 -0.5, %v957
    %v994 = vadd.f32 %v993, 1.0
    %v995 = vmul.f32 %v994, %v957
    %v996 = vand.u32 2147483647, %v957
    %vm997 = vcmp.lt.f32.partialorder %v996, 0.0004427343
    %v998 = vsel %vm997, %v995, %v992
    %v999 = vadd.f32 %v958, 1.0
    %v1000 = vlog2.pop %v999
    %v1001 = vmul.f32 %v1000, 0.6931472
    %v1002 = vmul.f32 -0.5, %v958
    %v1003 = vadd.f32 %v1002, 1.0
    %v1004 = vmul.f32 %v1003, %v958
    %v1005 = vand.u32 2147483647, %v958
    %vm1006 = vcmp.lt.f32.partialorder %v1005, 0.0004427343
    %v1007 = vsel %vm1006, %v1004, %v1001
    %v1008 = vadd.f32 %v959, 1.0
    %v1009 = vlog2.pop %v1008
    %v1010 = vmul.f32 %v1009, 0.6931472
    %v1011 = vmul.f32 -0.5, %v959
    %v1012 = vadd.f32 %v1011, 1.0
    %v1013 = vmul.f32 %v1012, %v959
    %v1014 = vand.u32 2147483647, %v959
    %vm1015 = vcmp.lt.f32.partialorder %v1014, 0.0004427343
    %v1016 = vsel %vm1015, %v1013, %v1010
    %v1017 = vadd.f32 %v960, 1.0
    %v1018 = vlog2.pop %v1017
    %v1019 = vmul.f32 %v1018, 0.6931472
    %v1020 = vmul.f32 -0.5, %v960
    %v1021 = vadd.f32 %v1020, 1.0
    %v1022 = vmul.f32 %v1021, %v960
    %v1023 = vand.u32 2147483647, %v960
    %vm1024 = vcmp.lt.f32.partialorder %v1023, 0.0004427343
    %v1025 = vsel %vm1024, %v1022, %v1019
    %v1026 = vadd.f32 %v961, 1.0
    %v1027 = vlog2.pop %v1026
    %v1028 = vmul.f32 %v1027, 0.6931472
    %v1029 = vmul.f32 -0.5, %v961
    %v1030 = vadd.f32 %v1029, 1.0
    %v1031 = vmul.f32 %v1030, %v961
    %v1032 = vand.u32 2147483647, %v961
    %vm1033 = vcmp.lt.f32.partialorder %v1032, 0.0004427343
    %v1034 = vsel %vm1033, %v1031, %v1028
    %v1035 = vadd.f32 %v962, 1.0
    %v1036 = vlog2.pop %v1035
    %v1037 = vmul.f32 %v1036, 0.6931472
    %v1038 = vmul.f32 -0.5, %v962
    %v1039 = vadd.f32 %v1038, 1.0
    %v1040 = vmul.f32 %v1039, %v962
    %v1041 = vand.u32 2147483647, %v962
    %vm1042 = vcmp.lt.f32.partialorder %v1041, 0.0004427343
    %v1043 = vsel %vm1042, %v1040, %v1037
    %v1044 = vadd.f32 %v963, 1.0
    %v1045 = vlog2.pop %v1044
    %v1046 = vmul.f32 %v1045, 0.6931472
    %v1047 = vmul.f32 -0.5, %v963
    %v1048 = vadd.f32 %v1047, 1.0
    %v1049 = vmul.f32 %v1048, %v963
    %v1050 = vand.u32 2147483647, %v963
    %vm1051 = vcmp.lt.f32.partialorder %v1050, 0.0004427343
    %v1052 = vsel %vm1051, %v1049, %v1046
    %v1053 = vadd.f32 %v964, 1.0
    %v1054 = vlog2.pop %v1053
    %v1055 = vmul.f32 %v1054, 0.6931472
    %v1056 = vmul.f32 -0.5, %v964
    %v1057 = vadd.f32 %v1056, 1.0
    %v1058 = vmul.f32 %v1057, %v964
    %v1059 = vand.u32 2147483647, %v964
    %vm1060 = vcmp.lt.f32.partialorder %v1059, 0.0004427343
    %v1061 = vsel %vm1060, %v1058, %v1055
    %v1062 = vadd.f32 %v965, 1.0
    %v1063 = vlog2.pop %v1062
    %v1064 = vmul.f32 %v1063, 0.6931472
    %v1065 = vmul.f32 -0.5, %v965
    %v1066 = vadd.f32 %v1065, 1.0
    %v1067 = vmul.f32 %v1066, %v965
    %v1068 = vand.u32 2147483647, %v965
    %vm1069 = vcmp.lt.f32.partialorder %v1068, 0.0004427343
    %v1070 = vsel %vm1069, %v1067, %v1064
    %v1071 = vadd.f32 %v966, 1.0
    %v1072 = vlog2.pop %v1071
    %v1073 = vmul.f32 %v1072, 0.6931472
    %v1074 = vmul.f32 -0.5, %v966
    %v1075 = vadd.f32 %v1074, 1.0
    %v1076 = vmul.f32 %v1075, %v966
    %v1077 = vand.u32 2147483647, %v966
    %vm1078 = vcmp.lt.f32.partialorder %v1077, 0.0004427343
    %v1079 = vsel %vm1078, %v1076, %v1073
    %v1080 = vadd.f32 %v967, 1.0
    %v1081 = vlog2.pop %v1080
    %v1082 = vmul.f32 %v1081, 0.6931472
    %v1083 = vmul.f32 -0.5, %v967
    %v1084 = vadd.f32 %v1083, 1.0
    %v1085 = vmul.f32 %v1084, %v967
    %v1086 = vand.u32 2147483647, %v967
    %vm1087 = vcmp.lt.f32.partialorder %v1086, 0.0004427343
    %v1088 = vsel %vm1087, %v1085, %v1082
    %v1089 = vadd.f32 %v968, 1.0
    %v1090 = vlog2.pop %v1089
    %v1091 = vmul.f32 %v1090, 0.6931472
    %v1092 = vmul.f32 -0.5, %v968
    %v1093 = vadd.f32 %v1092, 1.0
    %v1094 = vmul.f32 %v1093, %v968
    %v1095 = vand.u32 2147483647, %v968
    %vm1096 = vcmp.lt.f32.partialorder %v1095, 0.0004427343
    %v1097 = vsel %vm1096, %v1094, %v1091
    %v1098 = vadd.f32 %v969, 1.0
    %v1099 = vlog2.pop %v1098
    %v1100 = vmul.f32 %v1099, 0.6931472
    %v1101 = vmul.f32 -0.5, %v969
    %v1102 = vadd.f32 %v1101, 1.0
    %v1103 = vmul.f32 %v1102, %v969
    %v1104 = vand.u32 2147483647, %v969
    %vm1105 = vcmp.lt.f32.partialorder %v1104, 0.0004427343
    %v1106 = vsel %vm1105, %v1103, %v1100
    %v1107 = vadd.f32 %v970, 1.0
    %v1108 = vlog2.pop %v1107
    %v1109 = vmul.f32 %v1108, 0.6931472
    %v1110 = vmul.f32 -0.5, %v970
    %v1111 = vadd.f32 %v1110, 1.0
    %v1112 = vmul.f32 %v1111, %v970
    %v1113 = vand.u32 2147483647, %v970
    %vm1114 = vcmp.lt.f32.partialorder %v1113, 0.0004427343
    %v1115 = vsel %vm1114, %v1112, %v1109
    %v1116 = vadd.f32 %v971, 1.0
    %v1117 = vlog2.pop %v1116
    %v1118 = vmul.f32 %v1117, 0.6931472
    %v1119 = vmul.f32 -0.5, %v971
    %v1120 = vadd.f32 %v1119, 1.0
    %v1121 = vmul.f32 %v1120, %v971
    %v1122 = vand.u32 2147483647, %v971
    %vm1123 = vcmp.lt.f32.partialorder %v1122, 0.0004427343
    %v1124 = vsel %vm1123, %v1121, %v1118
    %v1125 = vadd.f32 %v972, 1.0
    %v1126 = vlog2.pop %v1125
    %v1127 = vmul.f32 %v1126, 0.6931472
    %v1128 = vmul.f32 -0.5, %v972
    %v1129 = vadd.f32 %v1128, 1.0
    %v1130 = vmul.f32 %v1129, %v972
    %v1131 = vand.u32 2147483647, %v972
    %vm1132 = vcmp.lt.f32.partialorder %v1131, 0.0004427343
    %v1133 = vsel %vm1132, %v1130, %v1127
    %v1134 = vadd.f32 %v973, 1.0
    %v1135 = vlog2.pop %v1134
    %v1136 = vmul.f32 %v1135, 0.6931472
    %v1137 = vmul.f32 -0.5, %v973
    %v1138 = vadd.f32 %v1137, 1.0
    %v1139 = vmul.f32 %v1138, %v973
    %v1140 = vand.u32 2147483647, %v973
    %vm1141 = vcmp.lt.f32.partialorder %v1140, 0.0004427343
    %v1142 = vsel %vm1141, %v1139, %v1136
    %v1143 = vadd.f32 %v974, 1.0
    %v1144 = vlog2.pop %v1143
    %v1145 = vmul.f32 %v1144, 0.6931472
    %v1146 = vmul.f32 -0.5, %v974
    %v1147 = vadd.f32 %v1146, 1.0
    %v1148 = vmul.f32 %v1147, %v974
    %v1149 = vand.u32 2147483647, %v974
    %vm1150 = vcmp.lt.f32.partialorder %v1149, 0.0004427343
    %v1151 = vsel %vm1150, %v1148, %v1145
    %v1152 = vadd.f32 %v975, 1.0
    %v1153 = vlog2.pop %v1152
    %v1154 = vmul.f32 %v1153, 0.6931472
    %v1155 = vmul.f32 -0.5, %v975
    %v1156 = vadd.f32 %v1155, 1.0
    %v1157 = vmul.f32 %v1156, %v975
    %v1158 = vand.u32 2147483647, %v975
    %vm1159 = vcmp.lt.f32.partialorder %v1158, 0.0004427343
    %v1160 = vsel %vm1159, %v1157, %v1154
    %v1161 = vadd.f32 %v976, 1.0
    %v1162 = vlog2.pop %v1161
    %v1163 = vmul.f32 %v1162, 0.6931472
    %v1164 = vmul.f32 -0.5, %v976
    %v1165 = vadd.f32 %v1164, 1.0
    %v1166 = vmul.f32 %v1165, %v976
    %v1167 = vand.u32 2147483647, %v976
    %vm1168 = vcmp.lt.f32.partialorder %v1167, 0.0004427343
    %v1169 = vsel %vm1168, %v1166, %v1163
    %v1170 = vadd.f32 %v977, 1.0
    %v1171 = vlog2.pop %v1170
    %v1172 = vmul.f32 %v1171, 0.6931472
    %v1173 = vmul.f32 -0.5, %v977
    %v1174 = vadd.f32 %v1173, 1.0
    %v1175 = vmul.f32 %v1174, %v977
    %v1176 = vand.u32 2147483647, %v977
    %vm1177 = vcmp.lt.f32.partialorder %v1176, 0.0004427343
    %v1178 = vsel %vm1177, %v1175, %v1172
    %v1179 = vadd.f32 %v978, 1.0
    %v1180 = vlog2.pop %v1179
    %v1181 = vmul.f32 %v1180, 0.6931472
    %v1182 = vmul.f32 -0.5, %v978
    %v1183 = vadd.f32 %v1182, 1.0
    %v1184 = vmul.f32 %v1183, %v978
    %v1185 = vand.u32 2147483647, %v978
    %vm1186 = vcmp.lt.f32.partialorder %v1185, 0.0004427343
    %v1187 = vsel %vm1186, %v1184, %v1181
    %v1188 = vadd.f32 %v979, 1.0
    %v1189 = vlog2.pop %v1188
    %v1190 = vmul.f32 %v1189, 0.6931472
    %v1191 = vmul.f32 -0.5, %v979
    %v1192 = vadd.f32 %v1191, 1.0
    %v1193 = vmul.f32 %v1192, %v979
    %v1194 = vand.u32 2147483647, %v979
    %vm1195 = vcmp.lt.f32.partialorder %v1194, 0.0004427343
    %v1196 = vsel %vm1195, %v1193, %v1190
    %v1197 = vadd.f32 %v980, 1.0
    %v1198 = vlog2.pop %v1197
    %v1199 = vmul.f32 %v1198, 0.6931472
    %v1200 = vmul.f32 -0.5, %v980
    %v1201 = vadd.f32 %v1200, 1.0
    %v1202 = vmul.f32 %v1201, %v980
    %v1203 = vand.u32 2147483647, %v980
    %vm1204 = vcmp.lt.f32.partialorder %v1203, 0.0004427343
    %v1205 = vsel %vm1204, %v1202, %v1199
    %v1206 = vsub.f32 %v739, %v989
    %v1207 = vsub.f32 %v748, %v998
    %v1208 = vsub.f32 %v757, %v1007
    %v1209 = vsub.f32 %v766, %v1016
    %v1210 = vsub.f32 %v775, %v1025
    %v1211 = vsub.f32 %v784, %v1034
    %v1212 = vsub.f32 %v793, %v1043
    %v1213 = vsub.f32 %v802, %v1052
    %v1214 = vsub.f32 %v811, %v1061
    %v1215 = vsub.f32 %v820, %v1070
    %v1216 = vsub.f32 %v829, %v1079
    %v1217 = vsub.f32 %v838, %v1088
    %v1218 = vsub.f32 %v847, %v1097
    %v1219 = vsub.f32 %v856, %v1106
    %v1220 = vsub.f32 %v865, %v1115
    %v1221 = vsub.f32 %v874, %v1124
    %v1222 = vsub.f32 %v883, %v1133
    %v1223 = vsub.f32 %v892, %v1142
    %v1224 = vsub.f32 %v901, %v1151
    %v1225 = vsub.f32 %v910, %v1160
    %v1226 = vsub.f32 %v919, %v1169
    %v1227 = vsub.f32 %v928, %v1178
    %v1228 = vsub.f32 %v937, %v1187
    %v1229 = vsub.f32 %v946, %v1196
    %v1230 = vsub.f32 %v955, %v1205
    %v1231 = vmul.f32 %v1206, 0.5
    %v1232 = vmul.f32 %v1207, 0.5
    %v1233 = vmul.f32 %v1208, 0.5
    %v1234 = vmul.f32 %v1209, 0.5
    %v1235 = vmul.f32 %v1210, 0.5
    %v1236 = vmul.f32 %v1211, 0.5
    %v1237 = vmul.f32 %v1212, 0.5
    %v1238 = vmul.f32 %v1213, 0.5
    %v1239 = vmul.f32 %v1214, 0.5
    %v1240 = vmul.f32 %v1215, 0.5
    %v1241 = vmul.f32 %v1216, 0.5
    %v1242 = vmul.f32 %v1217, 0.5
    %v1243 = vmul.f32 %v1218, 0.5
    %v1244 = vmul.f32 %v1219, 0.5
    %v1245 = vmul.f32 %v1220, 0.5
    %v1246 = vmul.f32 %v1221, 0.5
    %v1247 = vmul.f32 %v1222, 0.5
    %v1248 = vmul.f32 %v1223, 0.5
    %v1249 = vmul.f32 %v1224, 0.5
    %v1250 = vmul.f32 %v1225, 0.5
    %v1251 = vmul.f32 %v1226, 0.5
    %v1252 = vmul.f32 %v1227, 0.5
    %v1253 = vmul.f32 %v1228, 0.5
    %v1254 = vmul.f32 %v1229, 0.5
    %v1255 = vmul.f32 %v1230, 0.5
    %v1256 = vmul.f32 %v656, %v1231
    %v1257 = vmul.f32 %v657, %v1232
    %v1258 = vmul.f32 %v658, %v1233
    %v1259 = vmul.f32 %v659, %v1234
    %v1260 = vmul.f32 %v660, %v1235
    %v1261 = vmul.f32 %v661, %v1236
    %v1262 = vmul.f32 %v662, %v1237
    %v1263 = vmul.f32 %v663, %v1238
    %v1264 = vmul.f32 %v664, %v1239
    %v1265 = vmul.f32 %v665, %v1240
    %v1266 = vmul.f32 %v666, %v1241
    %v1267 = vmul.f32 %v667, %v1242
    %v1268 = vmul.f32 %v668, %v1243
    %v1269 = vmul.f32 %v669, %v1244
    %v1270 = vmul.f32 %v670, %v1245
    %v1271 = vmul.f32 %v671, %v1246
    %v1272 = vmul.f32 %v672, %v1247
    %v1273 = vmul.f32 %v673, %v1248
    %v1274 = vmul.f32 %v674, %v1249
    %v1275 = vmul.f32 %v675, %v1250
    %v1276 = vmul.f32 %v676, %v1251
    %v1277 = vmul.f32 %v677, %v1252
    %v1278 = vmul.f32 %v678, %v1253
    %v1279 = vmul.f32 %v679, %v1254
    %v1280 = vmul.f32 %v680, %v1255
    %v1281 = vmax.f32 %v1256, -15.0
    %v1282 = vmax.f32 %v1257, -15.0
    %v1283 = vmax.f32 %v1258, -15.0
    %v1284 = vmax.f32 %v1259, -15.0
    %v1285 = vmax.f32 %v1260, -15.0
    %v1286 = vmax.f32 %v1261, -15.0
    %v1287 = vmax.f32 %v1262, -15.0
    %v1288 = vmax.f32 %v1263, -15.0
    %v1289 = vmax.f32 %v1264, -15.0
    %v1290 = vmax.f32 %v1265, -15.0
    %v1291 = vmax.f32 %v1266, -15.0
    %v1292 = vmax.f32 %v1267, -15.0
    %v1293 = vmax.f32 %v1268, -15.0
    %v1294 = vmax.f32 %v1269, -15.0
    %v1295 = vmax.f32 %v1270, -15.0
    %v1296 = vmax.f32 %v1271, -15.0
    %v1297 = vmax.f32 %v1272, -15.0
    %v1298 = vmax.f32 %v1273, -15.0
    %v1299 = vmax.f32 %v1274, -15.0
    %v1300 = vmax.f32 %v1275, -15.0
    %v1301 = vmax.f32 %v1276, -15.0
    %v1302 = vmax.f32 %v1277, -15.0
    %v1303 = vmax.f32 %v1278, -15.0
    %v1304 = vmax.f32 %v1279, -15.0
    %v1305 = vmax.f32 %v1280, -15.0
    %v1306 = vmin.f32 %v1281, 15.0
    %v1307 = vmin.f32 %v1282, 15.0
    %v1308 = vmin.f32 %v1283, 15.0
    %v1309 = vmin.f32 %v1284, 15.0
    %v1310 = vmin.f32 %v1285, 15.0
    %v1311 = vmin.f32 %v1286, 15.0
    %v1312 = vmin.f32 %v1287, 15.0
    %v1313 = vmin.f32 %v1288, 15.0
    %v1314 = vmin.f32 %v1289, 15.0
    %v1315 = vmin.f32 %v1290, 15.0
    %v1316 = vmin.f32 %v1291, 15.0
    %v1317 = vmin.f32 %v1292, 15.0
    %v1318 = vmin.f32 %v1293, 15.0
    %v1319 = vmin.f32 %v1294, 15.0
    %v1320 = vmin.f32 %v1295, 15.0
    %v1321 = vmin.f32 %v1296, 15.0
    %v1322 = vmin.f32 %v1297, 15.0
    %v1323 = vmin.f32 %v1298, 15.0
    %v1324 = vmin.f32 %v1299, 15.0
    %v1325 = vmin.f32 %v1300, 15.0
    %v1326 = vmin.f32 %v1301, 15.0
    %v1327 = vmin.f32 %v1302, 15.0
    %v1328 = vmin.f32 %v1303, 15.0
    %v1329 = vmin.f32 %v1304, 15.0
    %v1330 = vmin.f32 %v1305, 15.0
    %v1331 = vtanh.pop %v1306
    %v1332 = vtanh.pop %v1307
    %v1333 = vtanh.pop %v1308
    %v1334 = vtanh.pop %v1309
    %v1335 = vtanh.pop %v1310
    %v1336 = vtanh.pop %v1311
    %v1337 = vtanh.pop %v1312
    %v1338 = vtanh.pop %v1313
    %v1339 = vtanh.pop %v1314
    %v1340 = vtanh.pop %v1315
    %v1341 = vtanh.pop %v1316
    %v1342 = vtanh.pop %v1317
    %v1343 = vtanh.pop %v1318
    %v1344 = vtanh.pop %v1319
    %v1345 = vtanh.pop %v1320
    %v1346 = vtanh.pop %v1321
    %v1347 = vtanh.pop %v1322
    %v1348 = vtanh.pop %v1323
    %v1349 = vtanh.pop %v1324
    %v1350 = vtanh.pop %v1325
    %v1351 = vtanh.pop %v1326
    %v1352 = vtanh.pop %v1327
    %v1353 = vtanh.pop %v1328
    %v1354 = vtanh.pop %v1329
    %v1355 = vtanh.pop %v1330
    %v1356 = vmul.f32 %v1331, %v606
    %v1357 = vmul.f32 %v1332, %v607
    %v1358 = vmul.f32 %v1333, %v608
    %v1359 = vmul.f32 %v1334, %v609
    %v1360 = vmul.f32 %v1335, %v610
    %v1361 = vmul.f32 %v1336, %v611
    %v1362 = vmul.f32 %v1337, %v612
    %v1363 = vmul.f32 %v1338, %v613
    %v1364 = vmul.f32 %v1339, %v614
    %v1365 = vmul.f32 %v1340, %v615
    %v1366 = vmul.f32 %v1341, %v616
    %v1367 = vmul.f32 %v1342, %v617
    %v1368 = vmul.f32 %v1343, %v618
    %v1369 = vmul.f32 %v1344, %v619
    %v1370 = vmul.f32 %v1345, %v620
    %v1371 = vmul.f32 %v1346, %v621
    %v1372 = vmul.f32 %v1347, %v622
    %v1373 = vmul.f32 %v1348, %v623
    %v1374 = vmul.f32 %v1349, %v624
    %v1375 = vmul.f32 %v1350, %v625
    %v1376 = vmul.f32 %v1351, %v626
    %v1377 = vmul.f32 %v1352, %v627
    %v1378 = vmul.f32 %v1353, %v628
    %v1379 = vmul.f32 %v1354, %v629
    %v1380 = vmul.f32 %v1355, %v630
    %vm1381 = vcmp.eq.f32.partialorder %v376, 0.0
    %vm1382 = vcmp.eq.f32.partialorder %v378, 0.0
    %vm1383 = vcmp.eq.f32.partialorder %v380, 0.0
    %vm1384 = vcmp.eq.f32.partialorder %v382, 0.0
    %vm1385 = vcmp.eq.f32.partialorder %v384, 0.0
    %vm1386 = vcmp.eq.f32.partialorder %v386, 0.0
    %vm1387 = vcmp.eq.f32.partialorder %v388, 0.0
    %vm1388 = vcmp.eq.f32.partialorder %v390, 0.0
    %vm1389 = vcmp.eq.f32.partialorder %v392, 0.0
    %vm1390 = vcmp.eq.f32.partialorder %v394, 0.0
    %vm1391 = vcmp.eq.f32.partialorder %v396, 0.0
    %vm1392 = vcmp.eq.f32.partialorder %v398, 0.0
    %vm1393 = vcmp.eq.f32.partialorder %v400, 0.0
    %vm1394 = vcmp.eq.f32.partialorder %v402, 0.0
    %vm1395 = vcmp.eq.f32.partialorder %v404, 0.0
    %vm1396 = vcmp.eq.f32.partialorder %v406, 0.0
    %vm1397 = vcmp.eq.f32.partialorder %v408, 0.0
    %vm1398 = vcmp.eq.f32.partialorder %v410, 0.0
    %vm1399 = vcmp.eq.f32.partialorder %v412, 0.0
    %vm1400 = vcmp.eq.f32.partialorder %v414, 0.0
    %vm1401 = vcmp.eq.f32.partialorder %v416, 0.0
    %vm1402 = vcmp.eq.f32.partialorder %v418, 0.0
    %vm1403 = vcmp.eq.f32.partialorder %v420, 0.0
    %vm1404 = vcmp.eq.f32.partialorder %v422, 0.0
    %vm1405 = vcmp.eq.f32.partialorder %v424, 0.0
    %v1406 = vsel %vm1381, 0.0, %v1356
    %v1407 = vsel %vm1382, 0.0, %v1357
    %v1408 = vsel %vm1383, 0.0, %v1358
    %v1409 = vsel %vm1384, 0.0, %v1359
    %v1410 = vsel %vm1385, 0.0, %v1360
    %v1411 = vsel %vm1386, 0.0, %v1361
    %v1412 = vsel %vm1387, 0.0, %v1362
    %v1413 = vsel %vm1388, 0.0, %v1363
    %v1414 = vsel %vm1389, 0.0, %v1364
    %v1415 = vsel %vm1390, 0.0, %v1365
    %v1416 = vsel %vm1391, 0.0, %v1366
    %v1417 = vsel %vm1392, 0.0, %v1367
    %v1418 = vsel %vm1393, 0.0, %v1368
    %v1419 = vsel %vm1394, 0.0, %v1369
    %v1420 = vsel %vm1395, 0.0, %v1370
    %v1421 = vsel %vm1396, 0.0, %v1371
    %v1422 = vsel %vm1397, 0.0, %v1372
    %v1423 = vsel %vm1398, 0.0, %v1373
    %v1424 = vsel %vm1399, 0.0, %v1374
    %v1425 = vsel %vm1400, 0.0, %v1375
    %v1426 = vsel %vm1401, 0.0, %v1376
    %v1427 = vsel %vm1402, 0.0, %v1377
    %v1428 = vsel %vm1403, 0.0, %v1378
    %v1429 = vsel %vm1404, 0.0, %v1379
    %v1430 = vsel %vm1405, 0.0, %v1380
    %v1431 = vmul.f32 %v1406, %v1406
    %v1432 = vmul.f32 %v1407, %v1407
    %v1433 = vmul.f32 %v1408, %v1408
    %v1434 = vmul.f32 %v1409, %v1409
    %v1435 = vmul.f32 %v1410, %v1410
    %v1436 = vmul.f32 %v1411, %v1411
    %v1437 = vmul.f32 %v1412, %v1412
    %v1438 = vmul.f32 %v1413, %v1413
    %v1439 = vmul.f32 %v1414, %v1414
    %v1440 = vmul.f32 %v1415, %v1415
    %v1441 = vmul.f32 %v1416, %v1416
    %v1442 = vmul.f32 %v1417, %v1417
    %v1443 = vmul.f32 %v1418, %v1418
    %v1444 = vmul.f32 %v1419, %v1419
    %v1445 = vmul.f32 %v1420, %v1420
    %v1446 = vmul.f32 %v1421, %v1421
    %v1447 = vmul.f32 %v1422, %v1422
    %v1448 = vmul.f32 %v1423, %v1423
    %v1449 = vmul.f32 %v1424, %v1424
    %v1450 = vmul.f32 %v1425, %v1425
    %v1451 = vmul.f32 %v1426, %v1426
    %v1452 = vmul.f32 %v1427, %v1427
    %v1453 = vmul.f32 %v1428, %v1428
    %v1454 = vmul.f32 %v1429, %v1429
    %v1455 = vmul.f32 %v1430, %v1430
    %v1456 = vmul.f32 %v376, %v1431
    %v1457 = vmul.f32 %v378, %v1432
    %v1458 = vmul.f32 %v380, %v1433
    %v1459 = vmul.f32 %v382, %v1434
    %v1460 = vmul.f32 %v384, %v1435
    %v1461 = vmul.f32 %v386, %v1436
    %v1462 = vmul.f32 %v388, %v1437
    %v1463 = vmul.f32 %v390, %v1438
    %v1464 = vmul.f32 %v392, %v1439
    %v1465 = vmul.f32 %v394, %v1440
    %v1466 = vmul.f32 %v396, %v1441
    %v1467 = vmul.f32 %v398, %v1442
    %v1468 = vmul.f32 %v400, %v1443
    %v1469 = vmul.f32 %v402, %v1444
    %v1470 = vmul.f32 %v404, %v1445
    %v1471 = vmul.f32 %v406, %v1446
    %v1472 = vmul.f32 %v408, %v1447
    %v1473 = vmul.f32 %v410, %v1448
    %v1474 = vmul.f32 %v412, %v1449
    %v1475 = vmul.f32 %v414, %v1450
    %v1476 = vmul.f32 %v416, %v1451
    %v1477 = vmul.f32 %v418, %v1452
    %v1478 = vmul.f32 %v420, %v1453
    %v1479 = vmul.f32 %v422, %v1454
    %v1480 = vmul.f32 %v424, %v1455
    %v1481 = vmax.f32 %v1456, 1e-30
    %v1482 = vmax.f32 %v1457, 1e-30
    %v1483 = vmax.f32 %v1458, 1e-30
    %v1484 = vmax.f32 %v1459, 1e-30
    %v1485 = vmax.f32 %v1460, 1e-30
    %v1486 = vmax.f32 %v1461, 1e-30
    %v1487 = vmax.f32 %v1462, 1e-30
    %v1488 = vmax.f32 %v1463, 1e-30
    %v1489 = vmax.f32 %v1464, 1e-30
    %v1490 = vmax.f32 %v1465, 1e-30
    %v1491 = vmax.f32 %v1466, 1e-30
    %v1492 = vmax.f32 %v1467, 1e-30
    %v1493 = vmax.f32 %v1468, 1e-30
    %v1494 = vmax.f32 %v1469, 1e-30
    %v1495 = vmax.f32 %v1470, 1e-30
    %v1496 = vmax.f32 %v1471, 1e-30
    %v1497 = vmax.f32 %v1472, 1e-30
    %v1498 = vmax.f32 %v1473, 1e-30
    %v1499 = vmax.f32 %v1474, 1e-30
    %v1500 = vmax.f32 %v1475, 1e-30
    %v1501 = vmax.f32 %v1476, 1e-30
    %v1502 = vmax.f32 %v1477, 1e-30
    %v1503 = vmax.f32 %v1478, 1e-30
    %v1504 = vmax.f32 %v1479, 1e-30
    %v1505 = vmax.f32 %v1480, 1e-30
    %v1506 = vrsqrt.pop %v1481
    %v1507 = vrsqrt.pop %v1482
    %v1508 = vrsqrt.pop %v1483
    %v1509 = vrsqrt.pop %v1484
    %v1510 = vrsqrt.pop %v1485
    %v1511 = vrsqrt.pop %v1486
    %v1512 = vrsqrt.pop %v1487
    %v1513 = vrsqrt.pop %v1488
    %v1514 = vrsqrt.pop %v1489
    %v1515 = vrsqrt.pop %v1490
    %v1516 = vrsqrt.pop %v1491
    %v1517 = vrsqrt.pop %v1492
    %v1518 = vrsqrt.pop %v1493
    %v1519 = vrsqrt.pop %v1494
    %v1520 = vrsqrt.pop %v1495
    %v1521 = vrsqrt.pop %v1496
    %v1522 = vrsqrt.pop %v1497
    %v1523 = vrsqrt.pop %v1498
    %v1524 = vrsqrt.pop %v1499
    %v1525 = vrsqrt.pop %v1500
    %v1526 = vrsqrt.pop %v1501
    %v1527 = vrsqrt.pop %v1502
    %v1528 = vrsqrt.pop %v1503
    %v1529 = vrsqrt.pop %v1504
    %v1530 = vrsqrt.pop %v1505
    %v1531 = vmul.f32 %v1481, %v1506
    %v1532 = vmul.f32 %v1482, %v1507
    %v1533 = vmul.f32 %v1483, %v1508
    %v1534 = vmul.f32 %v1484, %v1509
    %v1535 = vmul.f32 %v1485, %v1510
    %v1536 = vmul.f32 %v1486, %v1511
    %v1537 = vmul.f32 %v1487, %v1512
    %v1538 = vmul.f32 %v1488, %v1513
    %v1539 = vmul.f32 %v1489, %v1514
    %v1540 = vmul.f32 %v1490, %v1515
    %v1541 = vmul.f32 %v1491, %v1516
    %v1542 = vmul.f32 %v1492, %v1517
    %v1543 = vmul.f32 %v1493, %v1518
    %v1544 = vmul.f32 %v1494, %v1519
    %v1545 = vmul.f32 %v1495, %v1520
    %v1546 = vmul.f32 %v1496, %v1521
    %v1547 = vmul.f32 %v1497, %v1522
    %v1548 = vmul.f32 %v1498, %v1523
    %v1549 = vmul.f32 %v1499, %v1524
    %v1550 = vmul.f32 %v1500, %v1525
    %v1551 = vmul.f32 %v1501, %v1526
    %v1552 = vmul.f32 %v1502, %v1527
    %v1553 = vmul.f32 %v1503, %v1528
    %v1554 = vmul.f32 %v1504, %v1529
    %v1555 = vmul.f32 %v1505, %v1530
    %vm1556 = vcmp.gt.f32.partialorder %v1531, 0.996
    %vm1557 = vcmp.gt.f32.partialorder %v1532, 0.996
    %vm1558 = vcmp.gt.f32.partialorder %v1533, 0.996
    %vm1559 = vcmp.gt.f32.partialorder %v1534, 0.996
    %vm1560 = vcmp.gt.f32.partialorder %v1535, 0.996
    %vm1561 = vcmp.gt.f32.partialorder %v1536, 0.996
    %vm1562 = vcmp.gt.f32.partialorder %v1537, 0.996
    %vm1563 = vcmp.gt.f32.partialorder %v1538, 0.996
    %vm1564 = vcmp.gt.f32.partialorder %v1539, 0.996
    %vm1565 = vcmp.gt.f32.partialorder %v1540, 0.996
    %vm1566 = vcmp.gt.f32.partialorder %v1541, 0.996
    %vm1567 = vcmp.gt.f32.partialorder %v1542, 0.996
    %vm1568 = vcmp.gt.f32.partialorder %v1543, 0.996
    %vm1569 = vcmp.gt.f32.partialorder %v1544, 0.996
    %vm1570 = vcmp.gt.f32.partialorder %v1545, 0.996
    %vm1571 = vcmp.gt.f32.partialorder %v1546, 0.996
    %vm1572 = vcmp.gt.f32.partialorder %v1547, 0.996
    %vm1573 = vcmp.gt.f32.partialorder %v1548, 0.996
    %vm1574 = vcmp.gt.f32.partialorder %v1549, 0.996
    %vm1575 = vcmp.gt.f32.partialorder %v1550, 0.996
    %vm1576 = vcmp.gt.f32.partialorder %v1551, 0.996
    %vm1577 = vcmp.gt.f32.partialorder %v1552, 0.996
    %vm1578 = vcmp.gt.f32.partialorder %v1553, 0.996
    %vm1579 = vcmp.gt.f32.partialorder %v1554, 0.996
    %vm1580 = vcmp.gt.f32.partialorder %v1555, 0.996
    %v1581 = vmul.f32 %v1506, 0.996
    %v1582 = vmul.f32 %v1507, 0.996
    %v1583 = vmul.f32 %v1508, 0.996
    %v1584 = vmul.f32 %v1509, 0.996
    %v1585 = vmul.f32 %v1510, 0.996
    %v1586 = vmul.f32 %v1511, 0.996
    %v1587 = vmul.f32 %v1512, 0.996
    %v1588 = vmul.f32 %v1513, 0.996
    %v1589 = vmul.f32 %v1514, 0.996
    %v1590 = vmul.f32 %v1515, 0.996
    %v1591 = vmul.f32 %v1516, 0.996
    %v1592 = vmul.f32 %v1517, 0.996
    %v1593 = vmul.f32 %v1518, 0.996
    %v1594 = vmul.f32 %v1519, 0.996
    %v1595 = vmul.f32 %v1520, 0.996
    %v1596 = vmul.f32 %v1521, 0.996
    %v1597 = vmul.f32 %v1522, 0.996
    %v1598 = vmul.f32 %v1523, 0.996
    %v1599 = vmul.f32 %v1524, 0.996
    %v1600 = vmul.f32 %v1525, 0.996
    %v1601 = vmul.f32 %v1526, 0.996
    %v1602 = vmul.f32 %v1527, 0.996
    %v1603 = vmul.f32 %v1528, 0.996
    %v1604 = vmul.f32 %v1529, 0.996
    %v1605 = vmul.f32 %v1530, 0.996
    %v1606 = vsel %vm1556, %v1581, 1.0
    %v1607 = vsel %vm1557, %v1582, 1.0
    %v1608 = vsel %vm1558, %v1583, 1.0
    %v1609 = vsel %vm1559, %v1584, 1.0
    %v1610 = vsel %vm1560, %v1585, 1.0
    %v1611 = vsel %vm1561, %v1586, 1.0
    %v1612 = vsel %vm1562, %v1587, 1.0
    %v1613 = vsel %vm1563, %v1588, 1.0
    %v1614 = vsel %vm1564, %v1589, 1.0
    %v1615 = vsel %vm1565, %v1590, 1.0
    %v1616 = vsel %vm1566, %v1591, 1.0
    %v1617 = vsel %vm1567, %v1592, 1.0
    %v1618 = vsel %vm1568, %v1593, 1.0
    %v1619 = vsel %vm1569, %v1594, 1.0
    %v1620 = vsel %vm1570, %v1595, 1.0
    %v1621 = vsel %vm1571, %v1596, 1.0
    %v1622 = vsel %vm1572, %v1597, 1.0
    %v1623 = vsel %vm1573, %v1598, 1.0
    %v1624 = vsel %vm1574, %v1599, 1.0
    %v1625 = vsel %vm1575, %v1600, 1.0
    %v1626 = vsel %vm1576, %v1601, 1.0
    %v1627 = vsel %vm1577, %v1602, 1.0
    %v1628 = vsel %vm1578, %v1603, 1.0
    %v1629 = vsel %vm1579, %v1604, 1.0
    %v1630 = vsel %vm1580, %v1605, 1.0
    %v1631 = vmul.f32 %v1406, %v1606
    %v1632 = vmul.f32 %v1407, %v1607
    %v1633 = vmul.f32 %v1408, %v1608
    %v1634 = vmul.f32 %v1409, %v1609
    %v1635 = vmul.f32 %v1410, %v1610
    %v1636 = vmul.f32 %v1411, %v1611
    %v1637 = vmul.f32 %v1412, %v1612
    %v1638 = vmul.f32 %v1413, %v1613
    %v1639 = vmul.f32 %v1414, %v1614
    %v1640 = vmul.f32 %v1415, %v1615
    %v1641 = vmul.f32 %v1416, %v1616
    %v1642 = vmul.f32 %v1417, %v1617
    %v1643 = vmul.f32 %v1418, %v1618
    %v1644 = vmul.f32 %v1419, %v1619
    %v1645 = vmul.f32 %v1420, %v1620
    %v1646 = vmul.f32 %v1421, %v1621
    %v1647 = vmul.f32 %v1422, %v1622
    %v1648 = vmul.f32 %v1423, %v1623
    %v1649 = vmul.f32 %v1424, %v1624
    %v1650 = vmul.f32 %v1425, %v1625
    %v1651 = vmul.f32 %v1426, %v1626
    %v1652 = vmul.f32 %v1427, %v1627
    %v1653 = vmul.f32 %v1428, %v1628
    %v1654 = vmul.f32 %v1429, %v1629
    %v1655 = vmul.f32 %v1430, %v1630
    %v1656 = vmul.f32 %v1606, %v1606
    %v1657 = vmul.f32 %v1607, %v1607
    %v1658 = vmul.f32 %v1608, %v1608
    %v1659 = vmul.f32 %v1609, %v1609
    %v1660 = vmul.f32 %v1610, %v1610
    %v1661 = vmul.f32 %v1611, %v1611
    %v1662 = vmul.f32 %v1612, %v1612
    %v1663 = vmul.f32 %v1613, %v1613
    %v1664 = vmul.f32 %v1614, %v1614
    %v1665 = vmul.f32 %v1615, %v1615
    %v1666 = vmul.f32 %v1616, %v1616
    %v1667 = vmul.f32 %v1617, %v1617
    %v1668 = vmul.f32 %v1618, %v1618
    %v1669 = vmul.f32 %v1619, %v1619
    %v1670 = vmul.f32 %v1620, %v1620
    %v1671 = vmul.f32 %v1621, %v1621
    %v1672 = vmul.f32 %v1622, %v1622
    %v1673 = vmul.f32 %v1623, %v1623
    %v1674 = vmul.f32 %v1624, %v1624
    %v1675 = vmul.f32 %v1625, %v1625
    %v1676 = vmul.f32 %v1626, %v1626
    %v1677 = vmul.f32 %v1627, %v1627
    %v1678 = vmul.f32 %v1628, %v1628
    %v1679 = vmul.f32 %v1629, %v1629
    %v1680 = vmul.f32 %v1630, %v1630
    %v1681 = vmul.f32 %v1456, %v1656
    %v1682 = vmul.f32 %v1457, %v1657
    %v1683 = vmul.f32 %v1458, %v1658
    %v1684 = vmul.f32 %v1459, %v1659
    %v1685 = vmul.f32 %v1460, %v1660
    %v1686 = vmul.f32 %v1461, %v1661
    %v1687 = vmul.f32 %v1462, %v1662
    %v1688 = vmul.f32 %v1463, %v1663
    %v1689 = vmul.f32 %v1464, %v1664
    %v1690 = vmul.f32 %v1465, %v1665
    %v1691 = vmul.f32 %v1466, %v1666
    %v1692 = vmul.f32 %v1467, %v1667
    %v1693 = vmul.f32 %v1468, %v1668
    %v1694 = vmul.f32 %v1469, %v1669
    %v1695 = vmul.f32 %v1470, %v1670
    %v1696 = vmul.f32 %v1471, %v1671
    %v1697 = vmul.f32 %v1472, %v1672
    %v1698 = vmul.f32 %v1473, %v1673
    %v1699 = vmul.f32 %v1474, %v1674
    %v1700 = vmul.f32 %v1475, %v1675
    %v1701 = vmul.f32 %v1476, %v1676
    %v1702 = vmul.f32 %v1477, %v1677
    %v1703 = vmul.f32 %v1478, %v1678
    %v1704 = vmul.f32 %v1479, %v1679
    %v1705 = vmul.f32 %v1480, %v1680
    %v1706 = vmul.f32 %v1631, %v457
    %v1707 = vmul.f32 %v1632, %v459
    %v1708 = vmul.f32 %v1633, %v461
    %v1709 = vmul.f32 %v1634, %v463
    %v1710 = vmul.f32 %v1635, %v465
    %v1711 = vmul.f32 %v1636, %v467
    %v1712 = vmul.f32 %v1637, %v469
    %v1713 = vmul.f32 %v1638, %v471
    %v1714 = vmul.f32 %v1639, %v473
    %v1715 = vmul.f32 %v1640, %v475
    %v1716 = vmul.f32 %v1641, %v477
    %v1717 = vmul.f32 %v1642, %v479
    %v1718 = vmul.f32 %v1643, %v481
    %v1719 = vmul.f32 %v1644, %v483
    %v1720 = vmul.f32 %v1645, %v485
    %v1721 = vmul.f32 %v1646, %v487
    %v1722 = vmul.f32 %v1647, %v489
    %v1723 = vmul.f32 %v1648, %v491
    %v1724 = vmul.f32 %v1649, %v493
    %v1725 = vmul.f32 %v1650, %v495
    %v1726 = vmul.f32 %v1651, %v497
    %v1727 = vmul.f32 %v1652, %v499
    %v1728 = vmul.f32 %v1653, %v501
    %v1729 = vmul.f32 %v1654, %v503
    %v1730 = vmul.f32 %v1655, %v505
    %v1731 = vmul.f32 %v1706, 2.0
    %v1732 = vmul.f32 %v1707, 2.0
    %v1733 = vmul.f32 %v1708, 2.0
    %v1734 = vmul.f32 %v1709, 2.0
    %v1735 = vmul.f32 %v1710, 2.0
    %v1736 = vmul.f32 %v1711, 2.0
    %v1737 = vmul.f32 %v1712, 2.0
    %v1738 = vmul.f32 %v1713, 2.0
    %v1739 = vmul.f32 %v1714, 2.0
    %v1740 = vmul.f32 %v1715, 2.0
    %v1741 = vmul.f32 %v1716, 2.0
    %v1742 = vmul.f32 %v1717, 2.0
    %v1743 = vmul.f32 %v1718, 2.0
    %v1744 = vmul.f32 %v1719, 2.0
    %v1745 = vmul.f32 %v1720, 2.0
    %v1746 = vmul.f32 %v1721, 2.0
    %v1747 = vmul.f32 %v1722, 2.0
    %v1748 = vmul.f32 %v1723, 2.0
    %v1749 = vmul.f32 %v1724, 2.0
    %v1750 = vmul.f32 %v1725, 2.0
    %v1751 = vmul.f32 %v1726, 2.0
    %v1752 = vmul.f32 %v1727, 2.0
    %v1753 = vmul.f32 %v1728, 2.0
    %v1754 = vmul.f32 %v1729, 2.0
    %v1755 = vmul.f32 %v1730, 2.0
    %v1756 = vadd.f32 %v1731, 1.0
    %v1757 = vadd.f32 %v1732, 1.0
    %v1758 = vadd.f32 %v1733, 1.0
    %v1759 = vadd.f32 %v1734, 1.0
    %v1760 = vadd.f32 %v1735, 1.0
    %v1761 = vadd.f32 %v1736, 1.0
    %v1762 = vadd.f32 %v1737, 1.0
    %v1763 = vadd.f32 %v1738, 1.0
    %v1764 = vadd.f32 %v1739, 1.0
    %v1765 = vadd.f32 %v1740, 1.0
    %v1766 = vadd.f32 %v1741, 1.0
    %v1767 = vadd.f32 %v1742, 1.0
    %v1768 = vadd.f32 %v1743, 1.0
    %v1769 = vadd.f32 %v1744, 1.0
    %v1770 = vadd.f32 %v1745, 1.0
    %v1771 = vadd.f32 %v1746, 1.0
    %v1772 = vadd.f32 %v1747, 1.0
    %v1773 = vadd.f32 %v1748, 1.0
    %v1774 = vadd.f32 %v1749, 1.0
    %v1775 = vadd.f32 %v1750, 1.0
    %v1776 = vadd.f32 %v1751, 1.0
    %v1777 = vadd.f32 %v1752, 1.0
    %v1778 = vadd.f32 %v1753, 1.0
    %v1779 = vadd.f32 %v1754, 1.0
    %v1780 = vadd.f32 %v1755, 1.0
    %v1781 = vadd.f32 %v1756, 0.00752747
    %v1782 = vadd.f32 %v1757, 0.00752747
    %v1783 = vadd.f32 %v1758, 0.00752747
    %v1784 = vadd.f32 %v1759, 0.00752747
    %v1785 = vadd.f32 %v1760, 0.00752747
    %v1786 = vadd.f32 %v1761, 0.00752747
    %v1787 = vadd.f32 %v1762, 0.00752747
    %v1788 = vadd.f32 %v1763, 0.00752747
    %v1789 = vadd.f32 %v1764, 0.00752747
    %v1790 = vadd.f32 %v1765, 0.00752747
    %v1791 = vadd.f32 %v1766, 0.00752747
    %v1792 = vadd.f32 %v1767, 0.00752747
    %v1793 = vadd.f32 %v1768, 0.00752747
    %v1794 = vadd.f32 %v1769, 0.00752747
    %v1795 = vadd.f32 %v1770, 0.00752747
    %v1796 = vadd.f32 %v1771, 0.00752747
    %v1797 = vadd.f32 %v1772, 0.00752747
    %v1798 = vadd.f32 %v1773, 0.00752747
    %v1799 = vadd.f32 %v1774, 0.00752747
    %v1800 = vadd.f32 %v1775, 0.00752747
    %v1801 = vadd.f32 %v1776, 0.00752747
    %v1802 = vadd.f32 %v1777, 0.00752747
    %v1803 = vadd.f32 %v1778, 0.00752747
    %v1804 = vadd.f32 %v1779, 0.00752747
    %v1805 = vadd.f32 %v1780, 0.00752747
    %v1806 = vsub.f32 1.0, %v1681
    %v1807 = vsub.f32 1.0, %v1682
    %v1808 = vsub.f32 1.0, %v1683
    %v1809 = vsub.f32 1.0, %v1684
    %v1810 = vsub.f32 1.0, %v1685
    %v1811 = vsub.f32 1.0, %v1686
    %v1812 = vsub.f32 1.0, %v1687
    %v1813 = vsub.f32 1.0, %v1688
    %v1814 = vsub.f32 1.0, %v1689
    %v1815 = vsub.f32 1.0, %v1690
    %v1816 = vsub.f32 1.0, %v1691
    %v1817 = vsub.f32 1.0, %v1692
    %v1818 = vsub.f32 1.0, %v1693
    %v1819 = vsub.f32 1.0, %v1694
    %v1820 = vsub.f32 1.0, %v1695
    %v1821 = vsub.f32 1.0, %v1696
    %v1822 = vsub.f32 1.0, %v1697
    %v1823 = vsub.f32 1.0, %v1698
    %v1824 = vsub.f32 1.0, %v1699
    %v1825 = vsub.f32 1.0, %v1700
    %v1826 = vsub.f32 1.0, %v1701
    %v1827 = vsub.f32 1.0, %v1702
    %v1828 = vsub.f32 1.0, %v1703
    %v1829 = vsub.f32 1.0, %v1704
    %v1830 = vsub.f32 1.0, %v1705
    %v1831 = vmul.f32 %v1681, 0.00752747
    %v1832 = vmul.f32 %v1682, 0.00752747
    %v1833 = vmul.f32 %v1683, 0.00752747
    %v1834 = vmul.f32 %v1684, 0.00752747
    %v1835 = vmul.f32 %v1685, 0.00752747
    %v1836 = vmul.f32 %v1686, 0.00752747
    %v1837 = vmul.f32 %v1687, 0.00752747
    %v1838 = vmul.f32 %v1688, 0.00752747
    %v1839 = vmul.f32 %v1689, 0.00752747
    %v1840 = vmul.f32 %v1690, 0.00752747
    %v1841 = vmul.f32 %v1691, 0.00752747
    %v1842 = vmul.f32 %v1692, 0.00752747
    %v1843 = vmul.f32 %v1693, 0.00752747
    %v1844 = vmul.f32 %v1694, 0.00752747
    %v1845 = vmul.f32 %v1695, 0.00752747
    %v1846 = vmul.f32 %v1696, 0.00752747
    %v1847 = vmul.f32 %v1697, 0.00752747
    %v1848 = vmul.f32 %v1698, 0.00752747
    %v1849 = vmul.f32 %v1699, 0.00752747
    %v1850 = vmul.f32 %v1700, 0.00752747
    %v1851 = vmul.f32 %v1701, 0.00752747
    %v1852 = vmul.f32 %v1702, 0.00752747
    %v1853 = vmul.f32 %v1703, 0.00752747
    %v1854 = vmul.f32 %v1704, 0.00752747
    %v1855 = vmul.f32 %v1705, 0.00752747
    %v1856 = vadd.f32 %v1756, %v1831
    %v1857 = vadd.f32 %v1757, %v1832
    %v1858 = vadd.f32 %v1758, %v1833
    %v1859 = vadd.f32 %v1759, %v1834
    %v1860 = vadd.f32 %v1760, %v1835
    %v1861 = vadd.f32 %v1761, %v1836
    %v1862 = vadd.f32 %v1762, %v1837
    %v1863 = vadd.f32 %v1763, %v1838
    %v1864 = vadd.f32 %v1764, %v1839
    %v1865 = vadd.f32 %v1765, %v1840
    %v1866 = vadd.f32 %v1766, %v1841
    %v1867 = vadd.f32 %v1767, %v1842
    %v1868 = vadd.f32 %v1768, %v1843
    %v1869 = vadd.f32 %v1769, %v1844
    %v1870 = vadd.f32 %v1770, %v1845
    %v1871 = vadd.f32 %v1771, %v1846
    %v1872 = vadd.f32 %v1772, %v1847
    %v1873 = vadd.f32 %v1773, %v1848
    %v1874 = vadd.f32 %v1774, %v1849
    %v1875 = vadd.f32 %v1775, %v1850
    %v1876 = vadd.f32 %v1776, %v1851
    %v1877 = vadd.f32 %v1777, %v1852
    %v1878 = vadd.f32 %v1778, %v1853
    %v1879 = vadd.f32 %v1779, %v1854
    %v1880 = vadd.f32 %v1780, %v1855
    %v1881 = vmax.f32 %v1856, 1e-15
    %v1882 = vmax.f32 %v1857, 1e-15
    %v1883 = vmax.f32 %v1858, 1e-15
    %v1884 = vmax.f32 %v1859, 1e-15
    %v1885 = vmax.f32 %v1860, 1e-15
    %v1886 = vmax.f32 %v1861, 1e-15
    %v1887 = vmax.f32 %v1862, 1e-15
    %v1888 = vmax.f32 %v1863, 1e-15
    %v1889 = vmax.f32 %v1864, 1e-15
    %v1890 = vmax.f32 %v1865, 1e-15
    %v1891 = vmax.f32 %v1866, 1e-15
    %v1892 = vmax.f32 %v1867, 1e-15
    %v1893 = vmax.f32 %v1868, 1e-15
    %v1894 = vmax.f32 %v1869, 1e-15
    %v1895 = vmax.f32 %v1870, 1e-15
    %v1896 = vmax.f32 %v1871, 1e-15
    %v1897 = vmax.f32 %v1872, 1e-15
    %v1898 = vmax.f32 %v1873, 1e-15
    %v1899 = vmax.f32 %v1874, 1e-15
    %v1900 = vmax.f32 %v1875, 1e-15
    %v1901 = vmax.f32 %v1876, 1e-15
    %v1902 = vmax.f32 %v1877, 1e-15
    %v1903 = vmax.f32 %v1878, 1e-15
    %v1904 = vmax.f32 %v1879, 1e-15
    %v1905 = vmax.f32 %v1880, 1e-15
    %v1906 = vrcp.pop %v1881
    %v1907 = vmul.f32 1.0, %v1906
    %v1908 = vrcp.pop %v1882
    %v1909 = vmul.f32 1.0, %v1908
    %v1910 = vrcp.pop %v1883
    %v1911 = vmul.f32 1.0, %v1910
    %v1912 = vrcp.pop %v1884
    %v1913 = vmul.f32 1.0, %v1912
    %v1914 = vrcp.pop %v1885
    %v1915 = vmul.f32 1.0, %v1914
    %v1916 = vrcp.pop %v1886
    %v1917 = vmul.f32 1.0, %v1916
    %v1918 = vrcp.pop %v1887
    %v1919 = vmul.f32 1.0, %v1918
    %v1920 = vrcp.pop %v1888
    %v1921 = vmul.f32 1.0, %v1920
    %v1922 = vrcp.pop %v1889
    %v1923 = vmul.f32 1.0, %v1922
    %v1924 = vrcp.pop %v1890
    %v1925 = vmul.f32 1.0, %v1924
    %v1926 = vrcp.pop %v1891
    %v1927 = vmul.f32 1.0, %v1926
    %v1928 = vrcp.pop %v1892
    %v1929 = vmul.f32 1.0, %v1928
    %v1930 = vrcp.pop %v1893
    %v1931 = vmul.f32 1.0, %v1930
    %v1932 = vrcp.pop %v1894
    %v1933 = vmul.f32 1.0, %v1932
    %v1934 = vrcp.pop %v1895
    %v1935 = vmul.f32 1.0, %v1934
    %v1936 = vrcp.pop %v1896
    %v1937 = vmul.f32 1.0, %v1936
    %v1938 = vrcp.pop %v1897
    %v1939 = vmul.f32 1.0, %v1938
    %v1940 = vrcp.pop %v1898
    %v1941 = vmul.f32 1.0, %v1940
    %v1942 = vrcp.pop %v1899
    %v1943 = vmul.f32 1.0, %v1942
    %v1944 = vrcp.pop %v1900
    %v1945 = vmul.f32 1.0, %v1944
    %v1946 = vrcp.pop %v1901
    %v1947 = vmul.f32 1.0, %v1946
    %v1948 = vrcp.pop %v1902
    %v1949 = vmul.f32 1.0, %v1948
    %v1950 = vrcp.pop %v1903
    %v1951 = vmul.f32 1.0, %v1950
    %v1952 = vrcp.pop %v1904
    %v1953 = vmul.f32 1.0, %v1952
    %v1954 = vrcp.pop %v1905
    %v1955 = vmul.f32 1.0, %v1954
    %v1956 = vmul.f32 %v1781, %v1781
    %v1957 = vmul.f32 %v1782, %v1782
    %v1958 = vmul.f32 %v1783, %v1783
    %v1959 = vmul.f32 %v1784, %v1784
    %v1960 = vmul.f32 %v1785, %v1785
    %v1961 = vmul.f32 %v1786, %v1786
    %v1962 = vmul.f32 %v1787, %v1787
    %v1963 = vmul.f32 %v1788, %v1788
    %v1964 = vmul.f32 %v1789, %v1789
    %v1965 = vmul.f32 %v1790, %v1790
    %v1966 = vmul.f32 %v1791, %v1791
    %v1967 = vmul.f32 %v1792, %v1792
    %v1968 = vmul.f32 %v1793, %v1793
    %v1969 = vmul.f32 %v1794, %v1794
    %v1970 = vmul.f32 %v1795, %v1795
    %v1971 = vmul.f32 %v1796, %v1796
    %v1972 = vmul.f32 %v1797, %v1797
    %v1973 = vmul.f32 %v1798, %v1798
    %v1974 = vmul.f32 %v1799, %v1799
    %v1975 = vmul.f32 %v1800, %v1800
    %v1976 = vmul.f32 %v1801, %v1801
    %v1977 = vmul.f32 %v1802, %v1802
    %v1978 = vmul.f32 %v1803, %v1803
    %v1979 = vmul.f32 %v1804, %v1804
    %v1980 = vmul.f32 %v1805, %v1805
    %v1981 = vmul.f32 %v1956, %v1681
    %v1982 = vmul.f32 %v1957, %v1682
    %v1983 = vmul.f32 %v1958, %v1683
    %v1984 = vmul.f32 %v1959, %v1684
    %v1985 = vmul.f32 %v1960, %v1685
    %v1986 = vmul.f32 %v1961, %v1686
    %v1987 = vmul.f32 %v1962, %v1687
    %v1988 = vmul.f32 %v1963, %v1688
    %v1989 = vmul.f32 %v1964, %v1689
    %v1990 = vmul.f32 %v1965, %v1690
    %v1991 = vmul.f32 %v1966, %v1691
    %v1992 = vmul.f32 %v1967, %v1692
    %v1993 = vmul.f32 %v1968, %v1693
    %v1994 = vmul.f32 %v1969, %v1694
    %v1995 = vmul.f32 %v1970, %v1695
    %v1996 = vmul.f32 %v1971, %v1696
    %v1997 = vmul.f32 %v1972, %v1697
    %v1998 = vmul.f32 %v1973, %v1698
    %v1999 = vmul.f32 %v1974, %v1699
    %v2000 = vmul.f32 %v1975, %v1700
    %v2001 = vmul.f32 %v1976, %v1701
    %v2002 = vmul.f32 %v1977, %v1702
    %v2003 = vmul.f32 %v1978, %v1703
    %v2004 = vmul.f32 %v1979, %v1704
    %v2005 = vmul.f32 %v1980, %v1705
    %v2006 = vmul.f32 %v1781, %v1806
    %v2007 = vmul.f32 %v1782, %v1807
    %v2008 = vmul.f32 %v1783, %v1808
    %v2009 = vmul.f32 %v1784, %v1809
    %v2010 = vmul.f32 %v1785, %v1810
    %v2011 = vmul.f32 %v1786, %v1811
    %v2012 = vmul.f32 %v1787, %v1812
    %v2013 = vmul.f32 %v1788, %v1813
    %v2014 = vmul.f32 %v1789, %v1814
    %v2015 = vmul.f32 %v1790, %v1815
    %v2016 = vmul.f32 %v1791, %v1816
    %v2017 = vmul.f32 %v1792, %v1817
    %v2018 = vmul.f32 %v1793, %v1818
    %v2019 = vmul.f32 %v1794, %v1819
    %v2020 = vmul.f32 %v1795, %v1820
    %v2021 = vmul.f32 %v1796, %v1821
    %v2022 = vmul.f32 %v1797, %v1822
    %v2023 = vmul.f32 %v1798, %v1823
    %v2024 = vmul.f32 %v1799, %v1824
    %v2025 = vmul.f32 %v1800, %v1825
    %v2026 = vmul.f32 %v1801, %v1826
    %v2027 = vmul.f32 %v1802, %v1827
    %v2028 = vmul.f32 %v1803, %v1828
    %v2029 = vmul.f32 %v1804, %v1829
    %v2030 = vmul.f32 %v1805, %v1830
    %v2031 = vmul.f32 %v2006, 2.0
    %v2032 = vmul.f32 %v2007, 2.0
    %v2033 = vmul.f32 %v2008, 2.0
    %v2034 = vmul.f32 %v2009, 2.0
    %v2035 = vmul.f32 %v2010, 2.0
    %v2036 = vmul.f32 %v2011, 2.0
    %v2037 = vmul.f32 %v2012, 2.0
    %v2038 = vmul.f32 %v2013, 2.0
    %v2039 = vmul.f32 %v2014, 2.0
    %v2040 = vmul.f32 %v2015, 2.0
    %v2041 = vmul.f32 %v2016, 2.0
    %v2042 = vmul.f32 %v2017, 2.0
    %v2043 = vmul.f32 %v2018, 2.0
    %v2044 = vmul.f32 %v2019, 2.0
    %v2045 = vmul.f32 %v2020, 2.0
    %v2046 = vmul.f32 %v2021, 2.0
    %v2047 = vmul.f32 %v2022, 2.0
    %v2048 = vmul.f32 %v2023, 2.0
    %v2049 = vmul.f32 %v2024, 2.0
    %v2050 = vmul.f32 %v2025, 2.0
    %v2051 = vmul.f32 %v2026, 2.0
    %v2052 = vmul.f32 %v2027, 2.0
    %v2053 = vmul.f32 %v2028, 2.0
    %v2054 = vmul.f32 %v2029, 2.0
    %v2055 = vmul.f32 %v2030, 2.0
    %v2056 = vmul.f32 %v2031, %v1706
    %v2057 = vmul.f32 %v2032, %v1707
    %v2058 = vmul.f32 %v2033, %v1708
    %v2059 = vmul.f32 %v2034, %v1709
    %v2060 = vmul.f32 %v2035, %v1710
    %v2061 = vmul.f32 %v2036, %v1711
    %v2062 = vmul.f32 %v2037, %v1712
    %v2063 = vmul.f32 %v2038, %v1713
    %v2064 = vmul.f32 %v2039, %v1714
    %v2065 = vmul.f32 %v2040, %v1715
    %v2066 = vmul.f32 %v2041, %v1716
    %v2067 = vmul.f32 %v2042, %v1717
    %v2068 = vmul.f32 %v2043, %v1718
    %v2069 = vmul.f32 %v2044, %v1719
    %v2070 = vmul.f32 %v2045, %v1720
    %v2071 = vmul.f32 %v2046, %v1721
    %v2072 = vmul.f32 %v2047, %v1722
    %v2073 = vmul.f32 %v2048, %v1723
    %v2074 = vmul.f32 %v2049, %v1724
    %v2075 = vmul.f32 %v2050, %v1725
    %v2076 = vmul.f32 %v2051, %v1726
    %v2077 = vmul.f32 %v2052, %v1727
    %v2078 = vmul.f32 %v2053, %v1728
    %v2079 = vmul.f32 %v2054, %v1729
    %v2080 = vmul.f32 %v2055, %v1730
    %v2081 = vadd.f32 %v1981, %v2056
    %v2082 = vadd.f32 %v1982, %v2057
    %v2083 = vadd.f32 %v1983, %v2058
    %v2084 = vadd.f32 %v1984, %v2059
    %v2085 = vadd.f32 %v1985, %v2060
    %v2086 = vadd.f32 %v1986, %v2061
    %v2087 = vadd.f32 %v1987, %v2062
    %v2088 = vadd.f32 %v1988, %v2063
    %v2089 = vadd.f32 %v1989, %v2064
    %v2090 = vadd.f32 %v1990, %v2065
    %v2091 = vadd.f32 %v1991, %v2066
    %v2092 = vadd.f32 %v1992, %v2067
    %v2093 = vadd.f32 %v1993, %v2068
    %v2094 = vadd.f32 %v1994, %v2069
    %v2095 = vadd.f32 %v1995, %v2070
    %v2096 = vadd.f32 %v1996, %v2071
    %v2097 = vadd.f32 %v1997, %v2072
    %v2098 = vadd.f32 %v1998, %v2073
    %v2099 = vadd.f32 %v1999, %v2074
    %v2100 = vadd.f32 %v2000, %v2075
    %v2101 = vadd.f32 %v2001, %v2076
    %v2102 = vadd.f32 %v2002, %v2077
    %v2103 = vadd.f32 %v2003, %v2078
    %v2104 = vadd.f32 %v2004, %v2079
    %v2105 = vadd.f32 %v2005, %v2080
    %v2106 = vmul.f32 %v1806, %v1806
    %v2107 = vmul.f32 %v1807, %v1807
    %v2108 = vmul.f32 %v1808, %v1808
    %v2109 = vmul.f32 %v1809, %v1809
    %v2110 = vmul.f32 %v1810, %v1810
    %v2111 = vmul.f32 %v1811, %v1811
    %v2112 = vmul.f32 %v1812, %v1812
    %v2113 = vmul.f32 %v1813, %v1813
    %v2114 = vmul.f32 %v1814, %v1814
    %v2115 = vmul.f32 %v1815, %v1815
    %v2116 = vmul.f32 %v1816, %v1816
    %v2117 = vmul.f32 %v1817, %v1817
    %v2118 = vmul.f32 %v1818, %v1818
    %v2119 = vmul.f32 %v1819, %v1819
    %v2120 = vmul.f32 %v1820, %v1820
    %v2121 = vmul.f32 %v1821, %v1821
    %v2122 = vmul.f32 %v1822, %v1822
    %v2123 = vmul.f32 %v1823, %v1823
    %v2124 = vmul.f32 %v1824, %v1824
    %v2125 = vmul.f32 %v1825, %v1825
    %v2126 = vmul.f32 %v1826, %v1826
    %v2127 = vmul.f32 %v1827, %v1827
    %v2128 = vmul.f32 %v1828, %v1828
    %v2129 = vmul.f32 %v1829, %v1829
    %v2130 = vmul.f32 %v1830, %v1830
    %v2131 = vmul.f32 %v2106, 0.00752747
    %v2132 = vmul.f32 %v2107, 0.00752747
    %v2133 = vmul.f32 %v2108, 0.00752747
    %v2134 = vmul.f32 %v2109, 0.00752747
    %v2135 = vmul.f32 %v2110, 0.00752747
    %v2136 = vmul.f32 %v2111, 0.00752747
    %v2137 = vmul.f32 %v2112, 0.00752747
    %v2138 = vmul.f32 %v2113, 0.00752747
    %v2139 = vmul.f32 %v2114, 0.00752747
    %v2140 = vmul.f32 %v2115, 0.00752747
    %v2141 = vmul.f32 %v2116, 0.00752747
    %v2142 = vmul.f32 %v2117, 0.00752747
    %v2143 = vmul.f32 %v2118, 0.00752747
    %v2144 = vmul.f32 %v2119, 0.00752747
    %v2145 = vmul.f32 %v2120, 0.00752747
    %v2146 = vmul.f32 %v2121, 0.00752747
    %v2147 = vmul.f32 %v2122, 0.00752747
    %v2148 = vmul.f32 %v2123, 0.00752747
    %v2149 = vmul.f32 %v2124, 0.00752747
    %v2150 = vmul.f32 %v2125, 0.00752747
    %v2151 = vmul.f32 %v2126, 0.00752747
    %v2152 = vmul.f32 %v2127, 0.00752747
    %v2153 = vmul.f32 %v2128, 0.00752747
    %v2154 = vmul.f32 %v2129, 0.00752747
    %v2155 = vmul.f32 %v2130, 0.00752747
    %v2156 = vadd.f32 %v2081, %v2131
    %v2157 = vadd.f32 %v2082, %v2132
    %v2158 = vadd.f32 %v2083, %v2133
    %v2159 = vadd.f32 %v2084, %v2134
    %v2160 = vadd.f32 %v2085, %v2135
    %v2161 = vadd.f32 %v2086, %v2136
    %v2162 = vadd.f32 %v2087, %v2137
    %v2163 = vadd.f32 %v2088, %v2138
    %v2164 = vadd.f32 %v2089, %v2139
    %v2165 = vadd.f32 %v2090, %v2140
    %v2166 = vadd.f32 %v2091, %v2141
    %v2167 = vadd.f32 %v2092, %v2142
    %v2168 = vadd.f32 %v2093, %v2143
    %v2169 = vadd.f32 %v2094, %v2144
    %v2170 = vadd.f32 %v2095, %v2145
    %v2171 = vadd.f32 %v2096, %v2146
    %v2172 = vadd.f32 %v2097, %v2147
    %v2173 = vadd.f32 %v2098, %v2148
    %v2174 = vadd.f32 %v2099, %v2149
    %v2175 = vadd.f32 %v2100, %v2150
    %v2176 = vadd.f32 %v2101, %v2151
    %v2177 = vadd.f32 %v2102, %v2152
    %v2178 = vadd.f32 %v2103, %v2153
    %v2179 = vadd.f32 %v2104, %v2154
    %v2180 = vadd.f32 %v2105, %v2155
    %v2181 = vmul.f32 %v1907, %v1907
    %v2182 = vmul.f32 %v1909, %v1909
    %v2183 = vmul.f32 %v1911, %v1911
    %v2184 = vmul.f32 %v1913, %v1913
    %v2185 = vmul.f32 %v1915, %v1915
    %v2186 = vmul.f32 %v1917, %v1917
    %v2187 = vmul.f32 %v1919, %v1919
    %v2188 = vmul.f32 %v1921, %v1921
    %v2189 = vmul.f32 %v1923, %v1923
    %v2190 = vmul.f32 %v1925, %v1925
    %v2191 = vmul.f32 %v1927, %v1927
    %v2192 = vmul.f32 %v1929, %v1929
    %v2193 = vmul.f32 %v1931, %v1931
    %v2194 = vmul.f32 %v1933, %v1933
    %v2195 = vmul.f32 %v1935, %v1935
    %v2196 = vmul.f32 %v1937, %v1937
    %v2197 = vmul.f32 %v1939, %v1939
    %v2198 = vmul.f32 %v1941, %v1941
    %v2199 = vmul.f32 %v1943, %v1943
    %v2200 = vmul.f32 %v1945, %v1945
    %v2201 = vmul.f32 %v1947, %v1947
    %v2202 = vmul.f32 %v1949, %v1949
    %v2203 = vmul.f32 %v1951, %v1951
    %v2204 = vmul.f32 %v1953, %v1953
    %v2205 = vmul.f32 %v1955, %v1955
    %v2206 = vmul.f32 %v2156, %v2181
    %v2207 = vmul.f32 %v2157, %v2182
    %v2208 = vmul.f32 %v2158, %v2183
    %v2209 = vmul.f32 %v2159, %v2184
    %v2210 = vmul.f32 %v2160, %v2185
    %v2211 = vmul.f32 %v2161, %v2186
    %v2212 = vmul.f32 %v2162, %v2187
    %v2213 = vmul.f32 %v2163, %v2188
    %v2214 = vmul.f32 %v2164, %v2189
    %v2215 = vmul.f32 %v2165, %v2190
    %v2216 = vmul.f32 %v2166, %v2191
    %v2217 = vmul.f32 %v2167, %v2192
    %v2218 = vmul.f32 %v2168, %v2193
    %v2219 = vmul.f32 %v2169, %v2194
    %v2220 = vmul.f32 %v2170, %v2195
    %v2221 = vmul.f32 %v2171, %v2196
    %v2222 = vmul.f32 %v2172, %v2197
    %v2223 = vmul.f32 %v2173, %v2198
    %v2224 = vmul.f32 %v2174, %v2199
    %v2225 = vmul.f32 %v2175, %v2200
    %v2226 = vmul.f32 %v2176, %v2201
    %v2227 = vmul.f32 %v2177, %v2202
    %v2228 = vmul.f32 %v2178, %v2203
    %v2229 = vmul.f32 %v2179, %v2204
    %v2230 = vmul.f32 %v2180, %v2205
    %v2231 = vmax.f32 %v2206, 1e-30
    %v2232 = vmax.f32 %v2207, 1e-30
    %v2233 = vmax.f32 %v2208, 1e-30
    %v2234 = vmax.f32 %v2209, 1e-30
    %v2235 = vmax.f32 %v2210, 1e-30
    %v2236 = vmax.f32 %v2211, 1e-30
    %v2237 = vmax.f32 %v2212, 1e-30
    %v2238 = vmax.f32 %v2213, 1e-30
    %v2239 = vmax.f32 %v2214, 1e-30
    %v2240 = vmax.f32 %v2215, 1e-30
    %v2241 = vmax.f32 %v2216, 1e-30
    %v2242 = vmax.f32 %v2217, 1e-30
    %v2243 = vmax.f32 %v2218, 1e-30
    %v2244 = vmax.f32 %v2219, 1e-30
    %v2245 = vmax.f32 %v2220, 1e-30
    %v2246 = vmax.f32 %v2221, 1e-30
    %v2247 = vmax.f32 %v2222, 1e-30
    %v2248 = vmax.f32 %v2223, 1e-30
    %v2249 = vmax.f32 %v2224, 1e-30
    %v2250 = vmax.f32 %v2225, 1e-30
    %v2251 = vmax.f32 %v2226, 1e-30
    %v2252 = vmax.f32 %v2227, 1e-30
    %v2253 = vmax.f32 %v2228, 1e-30
    %v2254 = vmax.f32 %v2229, 1e-30
    %v2255 = vmax.f32 %v2230, 1e-30
    %v2256 = vrsqrt.pop %v2231
    %v2257 = vrsqrt.pop %v2232
    %v2258 = vrsqrt.pop %v2233
    %v2259 = vrsqrt.pop %v2234
    %v2260 = vrsqrt.pop %v2235
    %v2261 = vrsqrt.pop %v2236
    %v2262 = vrsqrt.pop %v2237
    %v2263 = vrsqrt.pop %v2238
    %v2264 = vrsqrt.pop %v2239
    %v2265 = vrsqrt.pop %v2240
    %v2266 = vrsqrt.pop %v2241
    %v2267 = vrsqrt.pop %v2242
    %v2268 = vrsqrt.pop %v2243
    %v2269 = vrsqrt.pop %v2244
    %v2270 = vrsqrt.pop %v2245
    %v2271 = vrsqrt.pop %v2246
    %v2272 = vrsqrt.pop %v2247
    %v2273 = vrsqrt.pop %v2248
    %v2274 = vrsqrt.pop %v2249
    %v2275 = vrsqrt.pop %v2250
    %v2276 = vrsqrt.pop %v2251
    %v2277 = vrsqrt.pop %v2252
    %v2278 = vrsqrt.pop %v2253
    %v2279 = vrsqrt.pop %v2254
    %v2280 = vrsqrt.pop %v2255
    %v2281 = vmul.f32 %v2231, %v2256
    %v2282 = vmul.f32 %v2232, %v2257
    %v2283 = vmul.f32 %v2233, %v2258
    %v2284 = vmul.f32 %v2234, %v2259
    %v2285 = vmul.f32 %v2235, %v2260
    %v2286 = vmul.f32 %v2236, %v2261
    %v2287 = vmul.f32 %v2237, %v2262
    %v2288 = vmul.f32 %v2238, %v2263
    %v2289 = vmul.f32 %v2239, %v2264
    %v2290 = vmul.f32 %v2240, %v2265
    %v2291 = vmul.f32 %v2241, %v2266
    %v2292 = vmul.f32 %v2242, %v2267
    %v2293 = vmul.f32 %v2243, %v2268
    %v2294 = vmul.f32 %v2244, %v2269
    %v2295 = vmul.f32 %v2245, %v2270
    %v2296 = vmul.f32 %v2246, %v2271
    %v2297 = vmul.f32 %v2247, %v2272
    %v2298 = vmul.f32 %v2248, %v2273
    %v2299 = vmul.f32 %v2249, %v2274
    %v2300 = vmul.f32 %v2250, %v2275
    %v2301 = vmul.f32 %v2251, %v2276
    %v2302 = vmul.f32 %v2252, %v2277
    %v2303 = vmul.f32 %v2253, %v2278
    %v2304 = vmul.f32 %v2254, %v2279
    %v2305 = vmul.f32 %v2255, %v2280
    %vm2306 = vcmp.gt.f32.partialorder %v2281, 0.996
    %vm2307 = vcmp.gt.f32.partialorder %v2282, 0.996
    %vm2308 = vcmp.gt.f32.partialorder %v2283, 0.996
    %vm2309 = vcmp.gt.f32.partialorder %v2284, 0.996
    %vm2310 = vcmp.gt.f32.partialorder %v2285, 0.996
    %vm2311 = vcmp.gt.f32.partialorder %v2286, 0.996
    %vm2312 = vcmp.gt.f32.partialorder %v2287, 0.996
    %vm2313 = vcmp.gt.f32.partialorder %v2288, 0.996
    %vm2314 = vcmp.gt.f32.partialorder %v2289, 0.996
    %vm2315 = vcmp.gt.f32.partialorder %v2290, 0.996
    %vm2316 = vcmp.gt.f32.partialorder %v2291, 0.996
    %vm2317 = vcmp.gt.f32.partialorder %v2292, 0.996
    %vm2318 = vcmp.gt.f32.partialorder %v2293, 0.996
    %vm2319 = vcmp.gt.f32.partialorder %v2294, 0.996
    %vm2320 = vcmp.gt.f32.partialorder %v2295, 0.996
    %vm2321 = vcmp.gt.f32.partialorder %v2296, 0.996
    %vm2322 = vcmp.gt.f32.partialorder %v2297, 0.996
    %vm2323 = vcmp.gt.f32.partialorder %v2298, 0.996
    %vm2324 = vcmp.gt.f32.partialorder %v2299, 0.996
    %vm2325 = vcmp.gt.f32.partialorder %v2300, 0.996
    %vm2326 = vcmp.gt.f32.partialorder %v2301, 0.996
    %vm2327 = vcmp.gt.f32.partialorder %v2302, 0.996
    %vm2328 = vcmp.gt.f32.partialorder %v2303, 0.996
    %vm2329 = vcmp.gt.f32.partialorder %v2304, 0.996
    %vm2330 = vcmp.gt.f32.partialorder %v2305, 0.996
    %v2331 = vmul.f32 %v2256, 0.996
    %v2332 = vmul.f32 %v2257, 0.996
    %v2333 = vmul.f32 %v2258, 0.996
    %v2334 = vmul.f32 %v2259, 0.996
    %v2335 = vmul.f32 %v2260, 0.996
    %v2336 = vmul.f32 %v2261, 0.996
    %v2337 = vmul.f32 %v2262, 0.996
    %v2338 = vmul.f32 %v2263, 0.996
    %v2339 = vmul.f32 %v2264, 0.996
    %v2340 = vmul.f32 %v2265, 0.996
    %v2341 = vmul.f32 %v2266, 0.996
    %v2342 = vmul.f32 %v2267, 0.996
    %v2343 = vmul.f32 %v2268, 0.996
    %v2344 = vmul.f32 %v2269, 0.996
    %v2345 = vmul.f32 %v2270, 0.996
    %v2346 = vmul.f32 %v2271, 0.996
    %v2347 = vmul.f32 %v2272, 0.996
    %v2348 = vmul.f32 %v2273, 0.996
    %v2349 = vmul.f32 %v2274, 0.996
    %v2350 = vmul.f32 %v2275, 0.996
    %v2351 = vmul.f32 %v2276, 0.996
    %v2352 = vmul.f32 %v2277, 0.996
    %v2353 = vmul.f32 %v2278, 0.996
    %v2354 = vmul.f32 %v2279, 0.996
    %v2355 = vmul.f32 %v2280, 0.996
    %v2356 = vsel %vm2306, %v2331, 1.0
    %v2357 = vsel %vm2307, %v2332, 1.0
    %v2358 = vsel %vm2308, %v2333, 1.0
    %v2359 = vsel %vm2309, %v2334, 1.0
    %v2360 = vsel %vm2310, %v2335, 1.0
    %v2361 = vsel %vm2311, %v2336, 1.0
    %v2362 = vsel %vm2312, %v2337, 1.0
    %v2363 = vsel %vm2313, %v2338, 1.0
    %v2364 = vsel %vm2314, %v2339, 1.0
    %v2365 = vsel %vm2315, %v2340, 1.0
    %v2366 = vsel %vm2316, %v2341, 1.0
    %v2367 = vsel %vm2317, %v2342, 1.0
    %v2368 = vsel %vm2318, %v2343, 1.0
    %v2369 = vsel %vm2319, %v2344, 1.0
    %v2370 = vsel %vm2320, %v2345, 1.0
    %v2371 = vsel %vm2321, %v2346, 1.0
    %v2372 = vsel %vm2322, %v2347, 1.0
    %v2373 = vsel %vm2323, %v2348, 1.0
    %v2374 = vsel %vm2324, %v2349, 1.0
    %v2375 = vsel %vm2325, %v2350, 1.0
    %v2376 = vsel %vm2326, %v2351, 1.0
    %v2377 = vsel %vm2327, %v2352, 1.0
    %v2378 = vsel %vm2328, %v2353, 1.0
    %v2379 = vsel %vm2329, %v2354, 1.0
    %v2380 = vsel %vm2330, %v2355, 1.0
    %v2381 = vmul.f32 %v1631, %v1781
    %v2382 = vmul.f32 %v1632, %v1782
    %v2383 = vmul.f32 %v1633, %v1783
    %v2384 = vmul.f32 %v1634, %v1784
    %v2385 = vmul.f32 %v1635, %v1785
    %v2386 = vmul.f32 %v1636, %v1786
    %v2387 = vmul.f32 %v1637, %v1787
    %v2388 = vmul.f32 %v1638, %v1788
    %v2389 = vmul.f32 %v1639, %v1789
    %v2390 = vmul.f32 %v1640, %v1790
    %v2391 = vmul.f32 %v1641, %v1791
    %v2392 = vmul.f32 %v1642, %v1792
    %v2393 = vmul.f32 %v1643, %v1793
    %v2394 = vmul.f32 %v1644, %v1794
    %v2395 = vmul.f32 %v1645, %v1795
    %v2396 = vmul.f32 %v1646, %v1796
    %v2397 = vmul.f32 %v1647, %v1797
    %v2398 = vmul.f32 %v1648, %v1798
    %v2399 = vmul.f32 %v1649, %v1799
    %v2400 = vmul.f32 %v1650, %v1800
    %v2401 = vmul.f32 %v1651, %v1801
    %v2402 = vmul.f32 %v1652, %v1802
    %v2403 = vmul.f32 %v1653, %v1803
    %v2404 = vmul.f32 %v1654, %v1804
    %v2405 = vmul.f32 %v1655, %v1805
    %v2406 = vmul.f32 %v1907, %v2356
    %v2407 = vmul.f32 %v1909, %v2357
    %v2408 = vmul.f32 %v1911, %v2358
    %v2409 = vmul.f32 %v1913, %v2359
    %v2410 = vmul.f32 %v1915, %v2360
    %v2411 = vmul.f32 %v1917, %v2361
    %v2412 = vmul.f32 %v1919, %v2362
    %v2413 = vmul.f32 %v1921, %v2363
    %v2414 = vmul.f32 %v1923, %v2364
    %v2415 = vmul.f32 %v1925, %v2365
    %v2416 = vmul.f32 %v1927, %v2366
    %v2417 = vmul.f32 %v1929, %v2367
    %v2418 = vmul.f32 %v1931, %v2368
    %v2419 = vmul.f32 %v1933, %v2369
    %v2420 = vmul.f32 %v1935, %v2370
    %v2421 = vmul.f32 %v1937, %v2371
    %v2422 = vmul.f32 %v1939, %v2372
    %v2423 = vmul.f32 %v1941, %v2373
    %v2424 = vmul.f32 %v1943, %v2374
    %v2425 = vmul.f32 %v1945, %v2375
    %v2426 = vmul.f32 %v1947, %v2376
    %v2427 = vmul.f32 %v1949, %v2377
    %v2428 = vmul.f32 %v1951, %v2378
    %v2429 = vmul.f32 %v1953, %v2379
    %v2430 = vmul.f32 %v1955, %v2380
    %v2431 = vmul.f32 %v2381, %v2406
    %v2432 = vmul.f32 %v2382, %v2407
    %v2433 = vmul.f32 %v2383, %v2408
    %v2434 = vmul.f32 %v2384, %v2409
    %v2435 = vmul.f32 %v2385, %v2410
    %v2436 = vmul.f32 %v2386, %v2411
    %v2437 = vmul.f32 %v2387, %v2412
    %v2438 = vmul.f32 %v2388, %v2413
    %v2439 = vmul.f32 %v2389, %v2414
    %v2440 = vmul.f32 %v2390, %v2415
    %v2441 = vmul.f32 %v2391, %v2416
    %v2442 = vmul.f32 %v2392, %v2417
    %v2443 = vmul.f32 %v2393, %v2418
    %v2444 = vmul.f32 %v2394, %v2419
    %v2445 = vmul.f32 %v2395, %v2420
    %v2446 = vmul.f32 %v2396, %v2421
    %v2447 = vmul.f32 %v2397, %v2422
    %v2448 = vmul.f32 %v2398, %v2423
    %v2449 = vmul.f32 %v2399, %v2424
    %v2450 = vmul.f32 %v2400, %v2425
    %v2451 = vmul.f32 %v2401, %v2426
    %v2452 = vmul.f32 %v2402, %v2427
    %v2453 = vmul.f32 %v2403, %v2428
    %v2454 = vmul.f32 %v2404, %v2429
    %v2455 = vmul.f32 %v2405, %v2430
    %v2456 = vmul.f32 %v1806, %v2406
    %v2457 = vmul.f32 %v1807, %v2407
    %v2458 = vmul.f32 %v1808, %v2408
    %v2459 = vmul.f32 %v1809, %v2409
    %v2460 = vmul.f32 %v1810, %v2410
    %v2461 = vmul.f32 %v1811, %v2411
    %v2462 = vmul.f32 %v1812, %v2412
    %v2463 = vmul.f32 %v1813, %v2413
    %v2464 = vmul.f32 %v1814, %v2414
    %v2465 = vmul.f32 %v1815, %v2415
    %v2466 = vmul.f32 %v1816, %v2416
    %v2467 = vmul.f32 %v1817, %v2417
    %v2468 = vmul.f32 %v1818, %v2418
    %v2469 = vmul.f32 %v1819, %v2419
    %v2470 = vmul.f32 %v1820, %v2420
    %v2471 = vmul.f32 %v1821, %v2421
    %v2472 = vmul.f32 %v1822, %v2422
    %v2473 = vmul.f32 %v1823, %v2423
    %v2474 = vmul.f32 %v1824, %v2424
    %v2475 = vmul.f32 %v1825, %v2425
    %v2476 = vmul.f32 %v1826, %v2426
    %v2477 = vmul.f32 %v1827, %v2427
    %v2478 = vmul.f32 %v1828, %v2428
    %v2479 = vmul.f32 %v1829, %v2429
    %v2480 = vmul.f32 %v1830, %v2430
    %v2481 = vmul.f32 %v151, %v2431
    %v2482 = vmul.f32 %v156, %v2432
    %v2483 = vmul.f32 %v161, %v2433
    %v2484 = vmul.f32 %v166, %v2434
    %v2485 = vmul.f32 %v171, %v2435
    %v2486 = vmul.f32 %v176, %v2436
    %v2487 = vmul.f32 %v181, %v2437
    %v2488 = vmul.f32 %v186, %v2438
    %v2489 = vmul.f32 %v191, %v2439
    %v2490 = vmul.f32 %v196, %v2440
    %v2491 = vmul.f32 %v201, %v2441
    %v2492 = vmul.f32 %v206, %v2442
    %v2493 = vmul.f32 %v211, %v2443
    %v2494 = vmul.f32 %v216, %v2444
    %v2495 = vmul.f32 %v221, %v2445
    %v2496 = vmul.f32 %v226, %v2446
    %v2497 = vmul.f32 %v231, %v2447
    %v2498 = vmul.f32 %v236, %v2448
    %v2499 = vmul.f32 %v241, %v2449
    %v2500 = vmul.f32 %v246, %v2450
    %v2501 = vmul.f32 %v251, %v2451
    %v2502 = vmul.f32 %v256, %v2452
    %v2503 = vmul.f32 %v261, %v2453
    %v2504 = vmul.f32 %v266, %v2454
    %v2505 = vmul.f32 %v271, %v2455
    %v2506 = vmul.f32 %v429, %v2456
    %v2507 = vmul.f32 %v429, %v2457
    %v2508 = vmul.f32 %v429, %v2458
    %v2509 = vmul.f32 %v429, %v2459
    %v2510 = vmul.f32 %v429, %v2460
    %v2511 = vmul.f32 %v429, %v2461
    %v2512 = vmul.f32 %v429, %v2462
    %v2513 = vmul.f32 %v429, %v2463
    %v2514 = vmul.f32 %v429, %v2464
    %v2515 = vmul.f32 %v429, %v2465
    %v2516 = vmul.f32 %v429, %v2466
    %v2517 = vmul.f32 %v429, %v2467
    %v2518 = vmul.f32 %v429, %v2468
    %v2519 = vmul.f32 %v429, %v2469
    %v2520 = vmul.f32 %v429, %v2470
    %v2521 = vmul.f32 %v429, %v2471
    %v2522 = vmul.f32 %v429, %v2472
    %v2523 = vmul.f32 %v429, %v2473
    %v2524 = vmul.f32 %v429, %v2474
    %v2525 = vmul.f32 %v429, %v2475
    %v2526 = vmul.f32 %v429, %v2476
    %v2527 = vmul.f32 %v429, %v2477
    %v2528 = vmul.f32 %v429, %v2478
    %v2529 = vmul.f32 %v429, %v2479
    %v2530 = vmul.f32 %v429, %v2480
    %v2531 = vadd.f32 %v2481, %v2506
    %v2532 = vadd.f32 %v2482, %v2507
    %v2533 = vadd.f32 %v2483, %v2508
    %v2534 = vadd.f32 %v2484, %v2509
    %v2535 = vadd.f32 %v2485, %v2510
    %v2536 = vadd.f32 %v2486, %v2511
    %v2537 = vadd.f32 %v2487, %v2512
    %v2538 = vadd.f32 %v2488, %v2513
    %v2539 = vadd.f32 %v2489, %v2514
    %v2540 = vadd.f32 %v2490, %v2515
    %v2541 = vadd.f32 %v2491, %v2516
    %v2542 = vadd.f32 %v2492, %v2517
    %v2543 = vadd.f32 %v2493, %v2518
    %v2544 = vadd.f32 %v2494, %v2519
    %v2545 = vadd.f32 %v2495, %v2520
    %v2546 = vadd.f32 %v2496, %v2521
    %v2547 = vadd.f32 %v2497, %v2522
    %v2548 = vadd.f32 %v2498, %v2523
    %v2549 = vadd.f32 %v2499, %v2524
    %v2550 = vadd.f32 %v2500, %v2525
    %v2551 = vadd.f32 %v2501, %v2526
    %v2552 = vadd.f32 %v2502, %v2527
    %v2553 = vadd.f32 %v2503, %v2528
    %v2554 = vadd.f32 %v2504, %v2529
    %v2555 = vadd.f32 %v2505, %v2530
    %2556 = vst [vmem:[#allocation7] sm:$0xff] %v2531
    %2557 = vst [vmem:[#allocation7 + $0x8] sm:$0xff] %v2532
    %2558 = vst [vmem:[#allocation7 + $0x10] sm:$0xff] %v2533
    %2559 = vst [vmem:[#allocation7 + $0x18] sm:$0xff] %v2534
    %2560 = vst [vmem:[#allocation7 + $0x20] sm:$0xff] %v2535
    %2561 = vst [vmem:[#allocation7 + $0x28] sm:$0xff] %v2536
    %2562 = vst [vmem:[#allocation7 + $0x30] sm:$0xff] %v2537
    %2563 = vst [vmem:[#allocation7 + $0x38] sm:$0xff] %v2538
    %2564 = vst [vmem:[#allocation7 + $0x40] sm:$0xff] %v2539
    %2565 = vst [vmem:[#allocation7 + $0x48] sm:$0xff] %v2540
    %2566 = vst [vmem:[#allocation7 + $0x50] sm:$0xff] %v2541
    %2567 = vst [vmem:[#allocation7 + $0x58] sm:$0xff] %v2542
    %2568 = vst [vmem:[#allocation7 + $0x60] sm:$0xff] %v2543
    %2569 = vst [vmem:[#allocation7 + $0x68] sm:$0xff] %v2544
    %2570 = vst [vmem:[#allocation7 + $0x70] sm:$0xff] %v2545
    %2571 = vst [vmem:[#allocation7 + $0x78] sm:$0xff] %v2546
    %2572 = vst [vmem:[#allocation7 + $0x80] sm:$0xff] %v2547
    %2573 = vst [vmem:[#allocation7 + $0x88] sm:$0xff] %v2548
    %2574 = vst [vmem:[#allocation7 + $0x90] sm:$0xff] %v2549
    %2575 = vst [vmem:[#allocation7 + $0x98] sm:$0xff] %v2550
    %2576 = vst [vmem:[#allocation7 + $0xa0] sm:$0xff] %v2551
    %2577 = vst [vmem:[#allocation7 + $0xa8] sm:$0xff] %v2552
    %2578 = vst [vmem:[#allocation7 + $0xb0] sm:$0xff] %v2553
    %2579 = vst [vmem:[#allocation7 + $0xb8] sm:$0xff] %v2554
    %2580 = vst [vmem:[#allocation7 + $0xc0] sm:$0xff] %v2555
    // Predicated region
    $region22: #{tpu_custom_call.1} parent=1 // pred_check
      _
    $region23: #{tpu_custom_call.1} parent=1 // pred_check_branch
      %2582 = sbr.rel (0) target = $region25
    $region24: #{tpu_custom_call.1} parent=1 // pred_region
      %s2584 = ssub.s32 3200, 3200
      %2585 = vsyncadd [#allocation4], %s2584
      %s2586 = sshll.u32 [#allocation7], 4
      %s2587 = int_to_ptr.vmem [resolvable:$true] %s2586
      %2592 = dma.vmem_to_hbm [thread:$0]  %s2587, 3200, %s3, [#allocation4], 128, 128, 8
    $region25: #{tpu_custom_call.1} parent=1 // pred_fallthru
      _
    // Predicated region
    $region26: #{tpu_custom_call.1} parent=1 // pred_check
      _
    $region27: #{tpu_custom_call.1} parent=1 // pred_check_branch
      %2594 = sbr.rel (0) target = $region29
    $region28: #{tpu_custom_call.1} parent=1 // pred_region
      %2595 = dma.done [#allocation4], 3200
    $region29: #{tpu_custom_call.1} parent=1 // pred_fallthru
      _
    %2596 = vsyncpa [#allocation3], 1
    %2597 = vsyncpa [#allocation6], 1
    %2598 = vsyncpa [#allocation4], 1

</llo_original>
